<compile_context>
chip_gen: v6e
topology: v6e:2x2x1
jax: 0.10.0
libtpu: 0.0.40
codegen_flags: <defaults>
</compile_context>

<pallas_src>
import math
import functools

import jax
import jax.numpy as jnp
import numpy as np
from jax.experimental import pallas as pl
from jax.experimental.pallas import tpu as pltpu


# ----------------------------- Pallas kernel ------------------------------ #
def _decoder_block_kernel(
    x_ref,                                    # (NB*T, D) f32 tokens
    wq_ref, wk_ref,                           # (D,H) bf16   (wk pre-scaled by 1/sqrt(d_k))
    wfc_ref,                                  # (Hn,dk,D) bf16 per-head output proj
    w1_ref, w2_ref,                           # (D,4D) bf16, (4D,D) bf16
    vh_ref,                                   # (2,H) f32: [bq, bk*scale]
    vd_ref,                                   # (6,D) f32: [bfc, ln1_g, ln1_b, b2, ln2_g, ln2_b]
    b1_ref,                                   # (1,4D) f32
    o_ref,                                    # (NB*T, D)
    *, n_heads, d_k, seq_len, dec_size,
):
    f32, bf16 = jnp.float32, jnp.bfloat16
    tokens, D = x_ref.shape
    T = seq_len
    NB = tokens // T

    x = x_ref[...]                            # (tokens, D) f32
    xb = x.astype(bf16)

    bq = vh_ref[0:1, :]
    bk = vh_ref[1:2, :]                       # already carries the 1/sqrt(d_k) factor
    bfc = vd_ref[0:1, :]
    ln1_g, ln1_b = vd_ref[1:2, :], vd_ref[2:3, :]
    b2 = vd_ref[3:4, :]
    ln2_g, ln2_b = vd_ref[4:5, :], vd_ref[5:6, :]

    # --- Q/K projections (bf16 MXU inputs, f32 accumulation). Scale folded into Wk/bk.
    q2 = jnp.dot(xb, wq_ref[...], preferred_element_type=f32) + bq   # (tokens, H)
    k2 = jnp.dot(xb, wk_ref[...], preferred_element_type=f32) + bk   # (tokens, H), pre-scaled

    def to_heads(t2d):
        # (tokens, H) -> (n_heads*NB, T, d_k), head-major batch axis.
        # One 2-D transpose + one batched last-two-dim swap (XLU); the reshapes are
        # sublane-tile-aligned (d_k % 8 == 0, T % 8 == 0) and therefore free.
        t = t2d.T                                   # (H, tokens)
        t = t.reshape(n_heads, d_k, tokens)         # (Hn, dk, NB*T)
        t = jnp.swapaxes(t, 1, 2)                   # (Hn, NB*T, dk)
        return t.reshape(n_heads * NB, T, d_k)      # (Hn*NB, T, dk)

    qh = to_heads(q2).astype(bf16)
    kh = to_heads(k2).astype(bf16)
    vh = qh                                   # reproduces reference: v = self.query(x)

    # --- all (head, batch) attention scores with ONE batched matmul.
    # NOTE: contraction depth d_k may be far below the MXU's native 128/256 depth;
    # acceptable for small d_k, revisit if production d_k stays tiny.
    s = jnp.einsum('btd,bsd->bts', qh, kh, preferred_element_type=f32)   # (Hn*NB, T, T)

    # Extended causal mask built in-kernel from iota; finite fill (diagonal is always
    # kept, so no fully-masked rows -> no NaN risk and no uniform-row surprise).
    row = jax.lax.broadcasted_iota(jnp.int32, (T, T), 0)
    col = jax.lax.broadcasted_iota(jnp.int32, (T, T), 1)
    keep = jnp.logical_or(col < (T - dec_size), col <= row)
    s = jnp.where(keep[None, :, :], s, jnp.float32(-1e30))

    # --- single batched softmax (f32 math; EUP reciprocal is ~free).
    s = s - jnp.max(s, axis=-1, keepdims=True)
    p = jnp.exp(s)
    p = p * pl.reciprocal(jnp.sum(p, axis=-1, keepdims=True), approx=True)

    a = jnp.einsum('bts,bsd->btd', p.astype(bf16), vh, preferred_element_type=f32)  # (Hn*NB, T, dk)

    # --- output projection: per-head 2-D MXU dots accumulated into ONE f32 (tokens, D)
    # buffer (no (n_heads, tokens, D) intermediate, no separate VPU head-sum).
    a = a.reshape(n_heads, NB * T, d_k).astype(bf16)                     # (Hn, tokens, dk)
    attn = jnp.dot(a[0], wfc_ref[0], preferred_element_type=f32)
    for h in range(1, n_heads):
        attn = attn + jnp.dot(a[h], wfc_ref[h], preferred_element_type=f32)
    attn = attn + bfc                                                    # (tokens, D)

    def layernorm(h, g, b, eps=1e-5):
        mu = jnp.mean(h, axis=-1, keepdims=True)
        var = jnp.mean((h - mu) ** 2, axis=-1, keepdims=True)
        return (h - mu) * jax.lax.rsqrt(var + eps) * g + b

    h1 = layernorm(x + attn, ln1_g, ln1_b)

    # --- FFN: Linear -> exact GELU(erf) -> Linear (dropout = identity, eval mode)
    ff = jnp.dot(h1.astype(bf16), w1_ref[...], preferred_element_type=f32) + b1_ref[...]
    ff = 0.5 * ff * (1.0 + jax.lax.erf(ff * jnp.float32(1.0 / math.sqrt(2.0))))
    ff = jnp.dot(ff.astype(bf16), w2_ref[...], preferred_element_type=f32) + b2

    # --- residual + LayerNorm 2; final Dropout = identity
    h2 = layernorm(h1 + ff, ln2_g, ln2_b)
    o_ref[...] = h2.astype(o_ref.dtype)


# ------------------------------- wrapper ----------------------------------- #
def _pick_vmem_limit():
    """Generation-dependent scoped-VMEM limit (v7x: 64 MiB physical; v5e/v6e: 128 MiB)."""
    try:
        kind = jax.devices()[0].device_kind.lower()
    except Exception:
        kind = ""
    if "v7" in kind or "7x" in kind:
        return 48 * 1024 * 1024           # leave headroom under v7x's 64 MiB
    if "v5" in kind or "v6" in kind:
        return 100 * 1024 * 1024          # 128 MiB physical
    return None                           # unknown generation: keep compiler default


def decoder_block(x, params, *, n_heads, d_k, dec_size, batch_block=None):
    N, T, D = x.shape
    H = n_heads * d_k
    F = 4 * D

    vmem_limit = _pick_vmem_limit()
    budget = vmem_limit if vmem_limit is not None else 32 * 1024 * 1024

    if batch_block is None:
        # >= 2 (ideally >= 4) grid steps: enables pipelining and v7x 2-TC sharding,
        # while keeping the f32 score tensor (Hn*NB, T, T) well under the VMEM budget.
        NB = max(1, N // 4)
        while NB > 1 and (N % NB != 0 or n_heads * NB * T * T * 4 > budget // 4):
            NB -= 1
    else:
        NB = batch_block
    assert N % NB == 0, "batch_block must divide N"
    num_blocks = N // NB
    tokens = NB * T
    assert (tokens % 8 == 0) or (num_blocks == 1), "token block must be sublane aligned"

    bf16 = jnp.bfloat16
    scale = 1.0 / math.sqrt(d_k)
    # weights go to the MXU as bf16 (f32 accumulation in-kernel); vectors stay f32.
    wq = params["wq"].astype(bf16)
    wk = (params["wk"] * scale).astype(bf16)                    # fold 1/sqrt(d_k) into K
    wfc = params["wfc"].reshape(n_heads, d_k, D).astype(bf16)   # per-head output blocks
    w1 = params["w1"].astype(bf16)
    w2 = params["w2"].astype(bf16)
    # packed small vectors: cuts kernel inputs (and per-step DMA descriptors) 16 -> 9
    vec_h = jnp.concatenate([params["bq"], params["bk"] * scale], axis=0)        # (2, H)
    vec_d = jnp.concatenate(
        [params["bfc"], params["ln1_g"], params["ln1_b"],
         params["b2"], params["ln2_g"], params["ln2_b"]], axis=0)                # (6, D)
    b1 = params["b1"]                                                            # (1, 4D)

    kernel = functools.partial(
        _decoder_block_kernel,
        n_heads=n_heads, d_k=d_k, seq_len=T, dec_size=dec_size)

    cp_kwargs = dict(dimension_semantics=("parallel",))   # batch blocks are independent
    if vmem_limit is not None:
        cp_kwargs["vmem_limit_bytes"] = vmem_limit

    args = (
        x.reshape(N * T, D),
        wq, wk, wfc, w1, w2,
        vec_h, vec_d, b1,
    )

    def _run(single_buffer_weights):
        def wspec(shape):
            zeros = (0,) * len(shape)
            if single_buffer_weights:
                # grid-invariant index_map -> single buffer (halves weight VMEM)
                return pl.BlockSpec(shape, lambda *_: zeros,
                                    pipeline_mode=pl.Buffered(1))
            return pl.BlockSpec(shape, lambda *_: zeros)

        in_specs = [
            pl.BlockSpec((tokens, D), lambda i: (i, 0)),        # x tokens (pipelined)
            wspec((D, H)), wspec((D, H)),                       # Wq, Wk
            wspec((n_heads, d_k, D)),                           # Wfc (per-head)
            wspec((D, F)), wspec((F, D)),                       # W1, W2
            wspec((2, H)), wspec((6, D)), wspec((1, F)),        # packed biases / LN
        ]
        return pl.pallas_call(
            kernel,
            out_shape=jax.ShapeDtypeStruct((N * T, D), x.dtype),
            grid_spec=pltpu.PrefetchScalarGridSpec(
                num_scalar_prefetch=0,
                grid=(num_blocks,),
                in_specs=in_specs,
                out_specs=pl.BlockSpec((tokens, D), lambda i: (i, 0)),
            ),
            compiler_params=pltpu.CompilerParams(**cp_kwargs),
        )(*args)

    try:
        out = _run(True)
    except Exception:
        # pl.Buffered(1) not accepted by this jax build -> plain double-buffered specs
        out = _run(False)
    return out.reshape(N, T, D)


# --------------------------- mask / params setup --------------------------- #
def build_extended_causal_mask(T, dec_size):
    # mirrors the reference (torch) construction; used only by the JAX reference.
    m = np.ones((T, T), dtype=np.float32)
    tri = np.tril(np.ones((dec_size, dec_size), dtype=np.float32))
    m[:, T - dec_size:] = np.concatenate(
        [np.zeros((T - dec_size, dec_size), dtype=np.float32), tri], axis=0
    )
    m[-dec_size:, -dec_size:] = tri
    return jnp.asarray(m)


def init_params(key, d_model, n_heads, d_k):
    H = n_heads * d_k
    F = 4 * d_model
    ks = jax.random.split(key, 12)

    def w(k, shape, scale=0.05):
        return scale * jax.random.normal(k, shape, dtype=jnp.float32)

    return {
        "wq": w(ks[0], (d_model, H)), "bq": w(ks[1], (1, H)),
        "wk": w(ks[2], (d_model, H)), "bk": w(ks[3], (1, H)),
        "wfc": w(ks[4], (H, d_model)), "bfc": w(ks[5], (1, d_model)),
        "ln1_g": 1.0 + w(ks[6], (1, d_model)), "ln1_b": w(ks[7], (1, d_model)),
        "w1": w(ks[8], (d_model, F)), "b1": w(ks[9], (1, F)),
        "w2": w(ks[10], (F, d_model)), "b2": w(ks[11], (1, d_model)),
        "ln2_g": 1.0 + w(jax.random.fold_in(key, 100), (1, d_model)),
        "ln2_b": w(jax.random.fold_in(key, 101), (1, d_model)),
    }


# ------------------------- pure-JAX reference check ------------------------ #
def reference_decoder_block(x, p, *, n_heads, d_k, dec_size):
    N, T, D = x.shape
    mask = build_extended_causal_mask(T, dec_size)

    def ln(h, g, b, eps=1e-5):
        mu = jnp.mean(h, axis=-1, keepdims=True)
        var = jnp.mean((h - mu) ** 2, axis=-1, keepdims=True)
        return (h - mu) / jnp.sqrt(var + eps) * g + b

    q = x @ p["wq"] + p["bq"]
    k = x @ p["wk"] + p["bk"]
    v = q  # reference bug reproduced (v = self.query(x))
    qh = q.reshape(N, T, n_heads, d_k).transpose(0, 2, 1, 3)
    kh = k.reshape(N, T, n_heads, d_k).transpose(0, 2, 1, 3)
    vh = v.reshape(N, T, n_heads, d_k).transpose(0, 2, 1, 3)
    s = jnp.einsum("nhqd,nhkd->nhqk", qh, kh) / math.sqrt(d_k)
    s = jnp.where(mask[None, None] == 0.0, -jnp.inf, s)
    w = jax.nn.softmax(s, axis=-1)
    a = jnp.einsum("nhqk,nhkd->nhqd", w, vh).transpose(0, 2, 1, 3).reshape(N, T, -1)
    attn = a @ p["wfc"] + p["bfc"]
    h1 = ln(x + attn, p["ln1_g"], p["ln1_b"])
    ff = h1 @ p["w1"] + p["b1"]
    ff = 0.5 * ff * (1.0 + jax.lax.erf(ff / math.sqrt(2.0)))
    ff = ff @ p["w2"] + p["b2"]
    return ln(h1 + ff, p["ln2_g"], p["ln2_b"])


# ----------------------------------- main ---------------------------------- #
if __name__ == "__main__":
    N, T, D = 2, 8, 32
    n_heads, d_k = 4, 8
    dec_size = 4

    key = jax.random.PRNGKey(0)
    kx, kp = jax.random.split(key)
    x = jax.random.normal(kx, (N, T, D), dtype=jnp.float32)
    params = init_params(kp, D, n_heads, d_k)

    out = decoder_block(x, params, n_heads=n_heads, d_k=d_k, dec_size=dec_size)
    out = jax.block_until_ready(out)

    ref = reference_decoder_block(x, params, n_heads=n_heads, d_k=d_k, dec_size=dec_size)
    # bf16 MXU inputs (f32 accumulation) + approx reciprocal vs. f32 reference.
    np.testing.assert_allclose(np.asarray(out), np.asarray(ref), rtol=1e-2, atol=1e-2)

    print("KERNEL_OK")
</pallas_src>

<mosaic_0001>
module attributes {stable_mosaic.version = 11 : i64} {
  func.func @_decoder_block_kernel(%arg0: i32, %arg1: memref<8x32xf32, #tpu.memory_space<vmem>>, %arg2: memref<32x32xbf16, #tpu.memory_space<vmem>>, %arg3: memref<32x32xbf16, #tpu.memory_space<vmem>>, %arg4: memref<4x8x32xbf16, #tpu.memory_space<vmem>>, %arg5: memref<32x128xbf16, #tpu.memory_space<vmem>>, %arg6: memref<128x32xbf16, #tpu.memory_space<vmem>>, %arg7: memref<2x32xf32, #tpu.memory_space<vmem>>, %arg8: memref<6x32xf32, #tpu.memory_space<vmem>>, %arg9: memref<1x128xf32, #tpu.memory_space<vmem>>, %arg10: memref<8x32xf32, #tpu.memory_space<vmem>>) attributes {dimension_semantics = [#tpu.dimension_semantics<parallel>], iteration_bounds = array<i64: 2>, scalar_prefetch = 0 : i64, scratch_operands = 0 : i64, tpu.core_type = #tpu.core_type<tc>, window_params = [{transform_indices = @transform_0, window_bounds = array<i64: 8, 32>}, {pipeline_mode = #tpu.pipeline_mode<synchronous>, transform_indices = @transform_1, window_bounds = array<i64: 32, 32>}, {pipeline_mode = #tpu.pipeline_mode<synchronous>, transform_indices = @transform_2, window_bounds = array<i64: 32, 32>}, {pipeline_mode = #tpu.pipeline_mode<synchronous>, transform_indices = @transform_3, window_bounds = array<i64: 4, 8, 32>}, {pipeline_mode = #tpu.pipeline_mode<synchronous>, transform_indices = @transform_4, window_bounds = array<i64: 32, 128>}, {pipeline_mode = #tpu.pipeline_mode<synchronous>, transform_indices = @transform_5, window_bounds = array<i64: 128, 32>}, {pipeline_mode = #tpu.pipeline_mode<synchronous>, transform_indices = @transform_6, window_bounds = array<i64: 2, 32>}, {pipeline_mode = #tpu.pipeline_mode<synchronous>, transform_indices = @transform_7, window_bounds = array<i64: 6, 32>}, {pipeline_mode = #tpu.pipeline_mode<synchronous>, transform_indices = @transform_8, window_bounds = array<i64: 1, 128>}, {transform_indices = @transform_9, window_bounds = array<i64: 8, 32>}]} {
    %c0 = arith.constant 0 : index
    %c0_0 = arith.constant 0 : index
    %0 = vector.load %arg1[%c0, %c0_0] : memref<8x32xf32, #tpu.memory_space<vmem>>, vector<8x32xf32>
    %1 = arith.truncf %0 : vector<8x32xf32> to vector<8x32xbf16>
    %c0_1 = arith.constant 0 : index
    %c0_2 = arith.constant 0 : index
    %2 = vector.load %arg7[%c0_1, %c0_2] : memref<2x32xf32, #tpu.memory_space<vmem>>, vector<1x32xf32>
    %c1 = arith.constant 1 : index
    %c0_3 = arith.constant 0 : index
    %3 = vector.load %arg7[%c1, %c0_3] : memref<2x32xf32, #tpu.memory_space<vmem>>, vector<1x32xf32>
    %c0_4 = arith.constant 0 : index
    %c0_5 = arith.constant 0 : index
    %4 = vector.load %arg8[%c0_4, %c0_5] : memref<6x32xf32, #tpu.memory_space<vmem>>, vector<1x32xf32>
    %c1_6 = arith.constant 1 : index
    %c0_7 = arith.constant 0 : index
    %5 = vector.load %arg8[%c1_6, %c0_7] : memref<6x32xf32, #tpu.memory_space<vmem>>, vector<1x32xf32>
    %c2 = arith.constant 2 : index
    %c0_8 = arith.constant 0 : index
    %6 = vector.load %arg8[%c2, %c0_8] : memref<6x32xf32, #tpu.memory_space<vmem>>, vector<1x32xf32>
    %c3 = arith.constant 3 : index
    %c0_9 = arith.constant 0 : index
    %7 = vector.load %arg8[%c3, %c0_9] : memref<6x32xf32, #tpu.memory_space<vmem>>, vector<1x32xf32>
    %c4 = arith.constant 4 : index
    %c0_10 = arith.constant 0 : index
    %8 = vector.load %arg8[%c4, %c0_10] : memref<6x32xf32, #tpu.memory_space<vmem>>, vector<1x32xf32>
    %c5 = arith.constant 5 : index
    %c0_11 = arith.constant 0 : index
    %9 = vector.load %arg8[%c5, %c0_11] : memref<6x32xf32, #tpu.memory_space<vmem>>, vector<1x32xf32>
    %c0_12 = arith.constant 0 : index
    %c0_13 = arith.constant 0 : index
    %10 = vector.load %arg2[%c0_12, %c0_13] : memref<32x32xbf16, #tpu.memory_space<vmem>>, vector<32x32xbf16>
    %cst = arith.constant dense<0.000000e+00> : vector<8x32xf32>
    %11 = tpu.matmul %1, %10, %cst {dimension_numbers = #tpu.dot_dimension_numbers<[1], [0], [0], [1], [0, 0, 1, 1], [], []>} : vector<8x32xbf16>, vector<32x32xbf16>, vector<8x32xf32> -> vector<8x32xf32>
    %12 = vector.broadcast %2 : vector<1x32xf32> to vector<8x32xf32>
    %13 = arith.addf %11, %12 : vector<8x32xf32>
    %c0_14 = arith.constant 0 : index
    %c0_15 = arith.constant 0 : index
    %14 = vector.load %arg3[%c0_14, %c0_15] : memref<32x32xbf16, #tpu.memory_space<vmem>>, vector<32x32xbf16>
    %cst_16 = arith.constant dense<0.000000e+00> : vector<8x32xf32>
    %15 = tpu.matmul %1, %14, %cst_16 {dimension_numbers = #tpu.dot_dimension_numbers<[1], [0], [0], [1], [0, 0, 1, 1], [], []>} : vector<8x32xbf16>, vector<32x32xbf16>, vector<8x32xf32> -> vector<8x32xf32>
    %16 = vector.broadcast %3 : vector<1x32xf32> to vector<8x32xf32>
    %17 = arith.addf %15, %16 : vector<8x32xf32>
    %18 = tpu.transpose %13, [1, 0] : vector<8x32xf32> -> vector<32x8xf32>
    %19 = vector.shape_cast %18 : vector<32x8xf32> to vector<4x8x8xf32>
    %20 = tpu.transpose %19, [0, 2, 1] : vector<4x8x8xf32> -> vector<4x8x8xf32>
    %21 = arith.truncf %20 : vector<4x8x8xf32> to vector<4x8x8xbf16>
    %22 = tpu.transpose %17, [1, 0] : vector<8x32xf32> -> vector<32x8xf32>
    %23 = vector.shape_cast %22 : vector<32x8xf32> to vector<4x8x8xf32>
    %24 = tpu.transpose %23, [0, 2, 1] : vector<4x8x8xf32> -> vector<4x8x8xf32>
    %25 = arith.truncf %24 : vector<4x8x8xf32> to vector<4x8x8xbf16>
    "tpu.trace_start"() <{level = 10 : i32, message = "btd,bsd->bts"}> : () -> ()
    %cst_17 = arith.constant dense<0.000000e+00> : vector<4x8x8xf32>
    %26 = tpu.matmul %21, %25, %cst_17 {dimension_numbers = #tpu.dot_dimension_numbers<[2], [2], [1], [1], [0, 0, 0, 1, 1, 1], [0], [0]>} : vector<4x8x8xbf16>, vector<4x8x8xbf16>, vector<4x8x8xf32> -> vector<4x8x8xf32>
    "tpu.trace_stop"() : () -> ()
    %27 = tpu.iota {dimensions = array<i32: 0>} : vector<8x8xi32>
    %28 = tpu.iota {dimensions = array<i32: 1>} : vector<8x8xi32>
    %c4_i32 = arith.constant 4 : i32
    %29 = vector.broadcast %c4_i32 : i32 to vector<8x8xi32>
    %30 = arith.cmpi slt, %28, %29 : vector<8x8xi32>
    %31 = arith.cmpi sle, %28, %27 : vector<8x8xi32>
    %32 = arith.ori %30, %31 : vector<8x8xi1>
    %33 = vector.shape_cast %32 : vector<8x8xi1> to vector<1x8x8xi1>
    %cst_18 = arith.constant -1.000000e+30 : f32
    %34 = vector.shape_cast %33 : vector<1x8x8xi1> to vector<1x8x8xi1>
    %35 = vector.broadcast %34 : vector<1x8x8xi1> to vector<4x8x8xi1>
    %36 = vector.broadcast %cst_18 : f32 to vector<4x8x8xf32>
    %37 = arith.select %35, %26, %36 : vector<4x8x8xi1>, vector<4x8x8xf32>
    %cst_19 = arith.constant dense<0xFF800000> : vector<4x8xf32>
    %38 = vector.multi_reduction <maximumf>, %37, %cst_19 [2] : vector<4x8x8xf32> to vector<4x8xf32>
    %39 = vector.shape_cast %38 : vector<4x8xf32> to vector<4x8x1xf32>
    %40 = vector.broadcast %39 : vector<4x8x1xf32> to vector<4x8x8xf32>
    %41 = arith.subf %37, %40 : vector<4x8x8xf32>
    %42 = math.exp %41 : vector<4x8x8xf32>
    %cst_20 = arith.constant dense<0.000000e+00> : vector<4x8xf32>
    %43 = vector.multi_reduction <add>, %42, %cst_20 [2] : vector<4x8x8xf32> to vector<4x8xf32>
    %44 = vector.shape_cast %43 : vector<4x8xf32> to vector<4x8x1xf32>
    %45 = tpu.reciprocal %44 {approx = true} : vector<4x8x1xf32> -> vector<4x8x1xf32>
    %46 = vector.broadcast %45 : vector<4x8x1xf32> to vector<4x8x8xf32>
    %47 = arith.mulf %42, %46 : vector<4x8x8xf32>
    %48 = arith.truncf %47 : vector<4x8x8xf32> to vector<4x8x8xbf16>
    "tpu.trace_start"() <{level = 10 : i32, message = "bts,bsd->btd"}> : () -> ()
    %cst_21 = arith.constant dense<0.000000e+00> : vector<4x8x8xf32>
    %49 = tpu.matmul %48, %21, %cst_21 {dimension_numbers = #tpu.dot_dimension_numbers<[2], [1], [1], [2], [0, 0, 0, 1, 1, 2], [0], [0]>} : vector<4x8x8xbf16>, vector<4x8x8xbf16>, vector<4x8x8xf32> -> vector<4x8x8xf32>
    "tpu.trace_stop"() : () -> ()
    %50 = arith.truncf %49 : vector<4x8x8xf32> to vector<4x8x8xbf16>
    %51 = vector.extract_strided_slice %50 {offsets = [0, 0, 0], sizes = [1, 8, 8], strides = [1, 1, 1]} : vector<4x8x8xbf16> to vector<1x8x8xbf16>
    %52 = vector.shape_cast %51 : vector<1x8x8xbf16> to vector<8x8xbf16>
    %c0_22 = arith.constant 0 : index
    %c0_23 = arith.constant 0 : index
    %c0_24 = arith.constant 0 : index
    %53 = vector.load %arg4[%c0_22, %c0_23, %c0_24] : memref<4x8x32xbf16, #tpu.memory_space<vmem>>, vector<1x8x32xbf16>
    %54 = vector.shape_cast %53 : vector<1x8x32xbf16> to vector<8x32xbf16>
    %cst_25 = arith.constant dense<0.000000e+00> : vector<8x32xf32>
    %55 = tpu.matmul %52, %54, %cst_25 {dimension_numbers = #tpu.dot_dimension_numbers<[1], [0], [0], [1], [0, 0, 1, 1], [], []>} : vector<8x8xbf16>, vector<8x32xbf16>, vector<8x32xf32> -> vector<8x32xf32>
    %56 = vector.extract_strided_slice %50 {offsets = [1, 0, 0], sizes = [1, 8, 8], strides = [1, 1, 1]} : vector<4x8x8xbf16> to vector<1x8x8xbf16>
    %57 = vector.shape_cast %56 : vector<1x8x8xbf16> to vector<8x8xbf16>
    %c1_26 = arith.constant 1 : index
    %c0_27 = arith.constant 0 : index
    %c0_28 = arith.constant 0 : index
    %58 = vector.load %arg4[%c1_26, %c0_27, %c0_28] : memref<4x8x32xbf16, #tpu.memory_space<vmem>>, vector<1x8x32xbf16>
    %59 = vector.shape_cast %58 : vector<1x8x32xbf16> to vector<8x32xbf16>
    %cst_29 = arith.constant dense<0.000000e+00> : vector<8x32xf32>
    %60 = tpu.matmul %57, %59, %cst_29 {dimension_numbers = #tpu.dot_dimension_numbers<[1], [0], [0], [1], [0, 0, 1, 1], [], []>} : vector<8x8xbf16>, vector<8x32xbf16>, vector<8x32xf32> -> vector<8x32xf32>
    %61 = arith.addf %55, %60 : vector<8x32xf32>
    %62 = vector.extract_strided_slice %50 {offsets = [2, 0, 0], sizes = [1, 8, 8], strides = [1, 1, 1]} : vector<4x8x8xbf16> to vector<1x8x8xbf16>
    %63 = vector.shape_cast %62 : vector<1x8x8xbf16> to vector<8x8xbf16>
    %c2_30 = arith.constant 2 : index
    %c0_31 = arith.constant 0 : index
    %c0_32 = arith.constant 0 : index
    %64 = vector.load %arg4[%c2_30, %c0_31, %c0_32] : memref<4x8x32xbf16, #tpu.memory_space<vmem>>, vector<1x8x32xbf16>
    %65 = vector.shape_cast %64 : vector<1x8x32xbf16> to vector<8x32xbf16>
    %cst_33 = arith.constant dense<0.000000e+00> : vector<8x32xf32>
    %66 = tpu.matmul %63, %65, %cst_33 {dimension_numbers = #tpu.dot_dimension_numbers<[1], [0], [0], [1], [0, 0, 1, 1], [], []>} : vector<8x8xbf16>, vector<8x32xbf16>, vector<8x32xf32> -> vector<8x32xf32>
    %67 = arith.addf %61, %66 : vector<8x32xf32>
    %68 = vector.extract_strided_slice %50 {offsets = [3, 0, 0], sizes = [1, 8, 8], strides = [1, 1, 1]} : vector<4x8x8xbf16> to vector<1x8x8xbf16>
    %69 = vector.shape_cast %68 : vector<1x8x8xbf16> to vector<8x8xbf16>
    %c3_34 = arith.constant 3 : index
    %c0_35 = arith.constant 0 : index
    %c0_36 = arith.constant 0 : index
    %70 = vector.load %arg4[%c3_34, %c0_35, %c0_36] : memref<4x8x32xbf16, #tpu.memory_space<vmem>>, vector<1x8x32xbf16>
    %71 = vector.shape_cast %70 : vector<1x8x32xbf16> to vector<8x32xbf16>
    %cst_37 = arith.constant dense<0.000000e+00> : vector<8x32xf32>
    %72 = tpu.matmul %69, %71, %cst_37 {dimension_numbers = #tpu.dot_dimension_numbers<[1], [0], [0], [1], [0, 0, 1, 1], [], []>} : vector<8x8xbf16>, vector<8x32xbf16>, vector<8x32xf32> -> vector<8x32xf32>
    %73 = arith.addf %67, %72 : vector<8x32xf32>
    %74 = vector.broadcast %4 : vector<1x32xf32> to vector<8x32xf32>
    %75 = arith.addf %73, %74 : vector<8x32xf32>
    %76 = arith.addf %0, %75 : vector<8x32xf32>
    %cst_38 = arith.constant dense<0.000000e+00> : vector<8xf32>
    %77 = vector.multi_reduction <add>, %76, %cst_38 [1] : vector<8x32xf32> to vector<8xf32>
    %78 = vector.shape_cast %77 : vector<8xf32> to vector<8x1xf32>
    %cst_39 = arith.constant 3.200000e+01 : f32
    %79 = vector.broadcast %cst_39 : f32 to vector<8x1xf32>
    %80 = arith.divf %78, %79 : vector<8x1xf32>
    %81 = vector.broadcast %80 : vector<8x1xf32> to vector<8x32xf32>
    %82 = arith.subf %76, %81 : vector<8x32xf32>
    %83 = arith.mulf %82, %82 : vector<8x32xf32>
    %cst_40 = arith.constant dense<0.000000e+00> : vector<8xf32>
    %84 = vector.multi_reduction <add>, %83, %cst_40 [1] : vector<8x32xf32> to vector<8xf32>
    %85 = vector.shape_cast %84 : vector<8xf32> to vector<8x1xf32>
    %cst_41 = arith.constant 3.200000e+01 : f32
    %86 = vector.broadcast %cst_41 : f32 to vector<8x1xf32>
    %87 = arith.divf %85, %86 : vector<8x1xf32>
    %88 = vector.broadcast %80 : vector<8x1xf32> to vector<8x32xf32>
    %89 = arith.subf %76, %88 : vector<8x32xf32>
    %cst_42 = arith.constant 9.99999974E-6 : f32
    %90 = vector.broadcast %cst_42 : f32 to vector<8x1xf32>
    %91 = arith.addf %87, %90 : vector<8x1xf32>
    %92 = math.rsqrt %91 : vector<8x1xf32>
    %93 = vector.broadcast %92 : vector<8x1xf32> to vector<8x32xf32>
    %94 = arith.mulf %89, %93 : vector<8x32xf32>
    %95 = vector.broadcast %5 : vector<1x32xf32> to vector<8x32xf32>
    %96 = arith.mulf %94, %95 : vector<8x32xf32>
    %97 = vector.broadcast %6 : vector<1x32xf32> to vector<8x32xf32>
    %98 = arith.addf %96, %97 : vector<8x32xf32>
    %99 = arith.truncf %98 : vector<8x32xf32> to vector<8x32xbf16>
    %c0_43 = arith.constant 0 : index
    %c0_44 = arith.constant 0 : index
    %100 = vector.load %arg5[%c0_43, %c0_44] : memref<32x128xbf16, #tpu.memory_space<vmem>>, vector<32x128xbf16>
    %cst_45 = arith.constant dense<0.000000e+00> : vector<8x128xf32>
    %101 = tpu.matmul %99, %100, %cst_45 {dimension_numbers = #tpu.dot_dimension_numbers<[1], [0], [0], [1], [0, 0, 1, 1], [], []>} : vector<8x32xbf16>, vector<32x128xbf16>, vector<8x128xf32> -> vector<8x128xf32>
    %c0_46 = arith.constant 0 : index
    %c0_47 = arith.constant 0 : index
    %102 = vector.load %arg9[%c0_46, %c0_47] : memref<1x128xf32, #tpu.memory_space<vmem>>, vector<1x128xf32>
    %103 = vector.broadcast %102 : vector<1x128xf32> to vector<8x128xf32>
    %104 = arith.addf %101, %103 : vector<8x128xf32>
    %cst_48 = arith.constant 5.000000e-01 : f32
    %105 = vector.broadcast %cst_48 : f32 to vector<8x128xf32>
    %106 = arith.mulf %105, %104 : vector<8x128xf32>
    %cst_49 = arith.constant 0.707106769 : f32
    %107 = vector.broadcast %cst_49 : f32 to vector<8x128xf32>
    %108 = arith.mulf %104, %107 : vector<8x128xf32>
    %109 = math.erf %108 : vector<8x128xf32>
    %cst_50 = arith.constant 1.000000e+00 : f32
    %110 = vector.broadcast %cst_50 : f32 to vector<8x128xf32>
    %111 = arith.addf %110, %109 : vector<8x128xf32>
    %112 = arith.mulf %106, %111 : vector<8x128xf32>
    %113 = arith.truncf %112 : vector<8x128xf32> to vector<8x128xbf16>
    %c0_51 = arith.constant 0 : index
    %c0_52 = arith.constant 0 : index
    %114 = vector.load %arg6[%c0_51, %c0_52] : memref<128x32xbf16, #tpu.memory_space<vmem>>, vector<128x32xbf16>
    %cst_53 = arith.constant dense<0.000000e+00> : vector<8x32xf32>
    %115 = tpu.matmul %113, %114, %cst_53 {dimension_numbers = #tpu.dot_dimension_numbers<[1], [0], [0], [1], [0, 0, 1, 1], [], []>} : vector<8x128xbf16>, vector<128x32xbf16>, vector<8x32xf32> -> vector<8x32xf32>
    %116 = vector.broadcast %7 : vector<1x32xf32> to vector<8x32xf32>
    %117 = arith.addf %115, %116 : vector<8x32xf32>
    %118 = arith.addf %98, %117 : vector<8x32xf32>
    %cst_54 = arith.constant dense<0.000000e+00> : vector<8xf32>
    %119 = vector.multi_reduction <add>, %118, %cst_54 [1] : vector<8x32xf32> to vector<8xf32>
    %120 = vector.shape_cast %119 : vector<8xf32> to vector<8x1xf32>
    %cst_55 = arith.constant 3.200000e+01 : f32
    %121 = vector.broadcast %cst_55 : f32 to vector<8x1xf32>
    %122 = arith.divf %120, %121 : vector<8x1xf32>
    %123 = vector.broadcast %122 : vector<8x1xf32> to vector<8x32xf32>
    %124 = arith.subf %118, %123 : vector<8x32xf32>
    %125 = arith.mulf %124, %124 : vector<8x32xf32>
    %cst_56 = arith.constant dense<0.000000e+00> : vector<8xf32>
    %126 = vector.multi_reduction <add>, %125, %cst_56 [1] : vector<8x32xf32> to vector<8xf32>
    %127 = vector.shape_cast %126 : vector<8xf32> to vector<8x1xf32>
    %cst_57 = arith.constant 3.200000e+01 : f32
    %128 = vector.broadcast %cst_57 : f32 to vector<8x1xf32>
    %129 = arith.divf %127, %128 : vector<8x1xf32>
    %130 = vector.broadcast %122 : vector<8x1xf32> to vector<8x32xf32>
    %131 = arith.subf %118, %130 : vector<8x32xf32>
    %cst_58 = arith.constant 9.99999974E-6 : f32
    %132 = vector.broadcast %cst_58 : f32 to vector<8x1xf32>
    %133 = arith.addf %129, %132 : vector<8x1xf32>
    %134 = math.rsqrt %133 : vector<8x1xf32>
    %135 = vector.broadcast %134 : vector<8x1xf32> to vector<8x32xf32>
    %136 = arith.mulf %131, %135 : vector<8x32xf32>
    %137 = vector.broadcast %8 : vector<1x32xf32> to vector<8x32xf32>
    %138 = arith.mulf %136, %137 : vector<8x32xf32>
    %139 = vector.broadcast %9 : vector<1x32xf32> to vector<8x32xf32>
    %140 = arith.addf %138, %139 : vector<8x32xf32>
    %c0_59 = arith.constant 0 : index
    %c0_60 = arith.constant 0 : index
    %141 = vector.load %arg10[%c0_59, %c0_60] : memref<8x32xf32, #tpu.memory_space<vmem>>, vector<8x32xf32>
    tpu.vector_store %arg10[%c0_59, %c0_60], %140 {strides = array<i32>} : memref<8x32xf32, #tpu.memory_space<vmem>>, vector<8x32xf32>,
    return
  }
  func.func @transform_0(%arg0: i32) -> (i32, i32) {
    %c0_i32 = arith.constant 0 : i32
    %c0_i32_0 = arith.constant 0 : i32
    return %arg0, %c0_i32 : i32, i32
  }
  func.func @transform_1(%arg0: i32) -> (i32, i32) {
    %c0_i32 = arith.constant 0 : i32
    %c0_i32_0 = arith.constant 0 : i32
    %c0_i32_1 = arith.constant 0 : i32
    return %c0_i32, %c0_i32_0 : i32, i32
  }
  func.func @transform_2(%arg0: i32) -> (i32, i32) {
    %c0_i32 = arith.constant 0 : i32
    %c0_i32_0 = arith.constant 0 : i32
    %c0_i32_1 = arith.constant 0 : i32
    return %c0_i32, %c0_i32_0 : i32, i32
  }
  func.func @transform_3(%arg0: i32) -> (i32, i32, i32) {
    %c0_i32 = arith.constant 0 : i32
    %c0_i32_0 = arith.constant 0 : i32
    %c0_i32_1 = arith.constant 0 : i32
    %c0_i32_2 = arith.constant 0 : i32
    return %c0_i32, %c0_i32_0, %c0_i32_1 : i32, i32, i32
  }
  func.func @transform_4(%arg0: i32) -> (i32, i32) {
    %c0_i32 = arith.constant 0 : i32
    %c0_i32_0 = arith.constant 0 : i32
    %c0_i32_1 = arith.constant 0 : i32
    return %c0_i32, %c0_i32_0 : i32, i32
  }
  func.func @transform_5(%arg0: i32) -> (i32, i32) {
    %c0_i32 = arith.constant 0 : i32
    %c0_i32_0 = arith.constant 0 : i32
    %c0_i32_1 = arith.constant 0 : i32
    return %c0_i32, %c0_i32_0 : i32, i32
  }
  func.func @transform_6(%arg0: i32) -> (i32, i32) {
    %c0_i32 = arith.constant 0 : i32
    %c0_i32_0 = arith.constant 0 : i32
    %c0_i32_1 = arith.constant 0 : i32
    return %c0_i32, %c0_i32_0 : i32, i32
  }
  func.func @transform_7(%arg0: i32) -> (i32, i32) {
    %c0_i32 = arith.constant 0 : i32
    %c0_i32_0 = arith.constant 0 : i32
    %c0_i32_1 = arith.constant 0 : i32
    return %c0_i32, %c0_i32_0 : i32, i32
  }
  func.func @transform_8(%arg0: i32) -> (i32, i32) {
    %c0_i32 = arith.constant 0 : i32
    %c0_i32_0 = arith.constant 0 : i32
    %c0_i32_1 = arith.constant 0 : i32
    return %c0_i32, %c0_i32_0 : i32, i32
  }
  func.func @transform_9(%arg0: i32) -> (i32, i32) {
    %c0_i32 = arith.constant 0 : i32
    %c0_i32_0 = arith.constant 0 : i32
    return %arg0, %c0_i32 : i32, i32
  }
}

module attributes {stable_mosaic.version = 11 : i64} {
  func.func @_decoder_block_kernel(%arg0: i32, %arg1: memref<8x32xf32, #tpu.memory_space<vmem>>, %arg2: memref<32x32xbf16, #tpu.memory_space<vmem>>, %arg3: memref<32x32xbf16, #tpu.memory_space<vmem>>, %arg4: memref<4x8x32xbf16, #tpu.memory_space<vmem>>, %arg5: memref<32x128xbf16, #tpu.memory_space<vmem>>, %arg6: memref<128x32xbf16, #tpu.memory_space<vmem>>, %arg7: memref<2x32xf32, #tpu.memory_space<vmem>>, %arg8: memref<6x32xf32, #tpu.memory_space<vmem>>, %arg9: memref<1x128xf32, #tpu.memory_space<vmem>>, %arg10: memref<8x32xf32, #tpu.memory_space<vmem>>) attributes {dimension_semantics = [#tpu.dimension_semantics<parallel>], iteration_bounds = array<i64: 2>, scalar_prefetch = 0 : i64, scratch_operands = 0 : i64, tpu.core_type = #tpu.core_type<tc>, window_params = [{transform_indices = @transform_0, window_bounds = array<i64: 8, 32>}, {pipeline_mode = #tpu.pipeline_mode<synchronous>, transform_indices = @transform_1, window_bounds = array<i64: 32, 32>}, {pipeline_mode = #tpu.pipeline_mode<synchronous>, transform_indices = @transform_2, window_bounds = array<i64: 32, 32>}, {pipeline_mode = #tpu.pipeline_mode<synchronous>, transform_indices = @transform_3, window_bounds = array<i64: 4, 8, 32>}, {pipeline_mode = #tpu.pipeline_mode<synchronous>, transform_indices = @transform_4, window_bounds = array<i64: 32, 128>}, {pipeline_mode = #tpu.pipeline_mode<synchronous>, transform_indices = @transform_5, window_bounds = array<i64: 128, 32>}, {pipeline_mode = #tpu.pipeline_mode<synchronous>, transform_indices = @transform_6, window_bounds = array<i64: 2, 32>}, {pipeline_mode = #tpu.pipeline_mode<synchronous>, transform_indices = @transform_7, window_bounds = array<i64: 6, 32>}, {pipeline_mode = #tpu.pipeline_mode<synchronous>, transform_indices = @transform_8, window_bounds = array<i64: 1, 128>}, {transform_indices = @transform_9, window_bounds = array<i64: 8, 32>}]} {
    %c0 = arith.constant 0 : index
    %c0_0 = arith.constant 0 : index
    %0 = vector.load %arg1[%c0, %c0_0] : memref<8x32xf32, #tpu.memory_space<vmem>>, vector<8x32xf32>
    %1 = arith.truncf %0 : vector<8x32xf32> to vector<8x32xbf16>
    %c0_1 = arith.constant 0 : index
    %c0_2 = arith.constant 0 : index
    %2 = vector.load %arg7[%c0_1, %c0_2] : memref<2x32xf32, #tpu.memory_space<vmem>>, vector<1x32xf32>
    %c1 = arith.constant 1 : index
    %c0_3 = arith.constant 0 : index
    %3 = vector.load %arg7[%c1, %c0_3] : memref<2x32xf32, #tpu.memory_space<vmem>>, vector<1x32xf32>
    %c0_4 = arith.constant 0 : index
    %c0_5 = arith.constant 0 : index
    %4 = vector.load %arg8[%c0_4, %c0_5] : memref<6x32xf32, #tpu.memory_space<vmem>>, vector<1x32xf32>
    %c1_6 = arith.constant 1 : index
    %c0_7 = arith.constant 0 : index
    %5 = vector.load %arg8[%c1_6, %c0_7] : memref<6x32xf32, #tpu.memory_space<vmem>>, vector<1x32xf32>
    %c2 = arith.constant 2 : index
    %c0_8 = arith.constant 0 : index
    %6 = vector.load %arg8[%c2, %c0_8] : memref<6x32xf32, #tpu.memory_space<vmem>>, vector<1x32xf32>
    %c3 = arith.constant 3 : index
    %c0_9 = arith.constant 0 : index
    %7 = vector.load %arg8[%c3, %c0_9] : memref<6x32xf32, #tpu.memory_space<vmem>>, vector<1x32xf32>
    %c4 = arith.constant 4 : index
    %c0_10 = arith.constant 0 : index
    %8 = vector.load %arg8[%c4, %c0_10] : memref<6x32xf32, #tpu.memory_space<vmem>>, vector<1x32xf32>
    %c5 = arith.constant 5 : index
    %c0_11 = arith.constant 0 : index
    %9 = vector.load %arg8[%c5, %c0_11] : memref<6x32xf32, #tpu.memory_space<vmem>>, vector<1x32xf32>
    %c0_12 = arith.constant 0 : index
    %c0_13 = arith.constant 0 : index
    %10 = vector.load %arg2[%c0_12, %c0_13] : memref<32x32xbf16, #tpu.memory_space<vmem>>, vector<32x32xbf16>
    %cst = arith.constant dense<0.000000e+00> : vector<8x32xf32>
    %11 = tpu.matmul %1, %10, %cst {dimension_numbers = #tpu.dot_dimension_numbers<[1], [0], [0], [1], [0, 0, 1, 1], [], []>} : vector<8x32xbf16>, vector<32x32xbf16>, vector<8x32xf32> -> vector<8x32xf32>
    %12 = vector.broadcast %2 : vector<1x32xf32> to vector<8x32xf32>
    %13 = arith.addf %11, %12 : vector<8x32xf32>
    %c0_14 = arith.constant 0 : index
    %c0_15 = arith.constant 0 : index
    %14 = vector.load %arg3[%c0_14, %c0_15] : memref<32x32xbf16, #tpu.memory_space<vmem>>, vector<32x32xbf16>
    %cst_16 = arith.constant dense<0.000000e+00> : vector<8x32xf32>
    %15 = tpu.matmul %1, %14, %cst_16 {dimension_numbers = #tpu.dot_dimension_numbers<[1], [0], [0], [1], [0, 0, 1, 1], [], []>} : vector<8x32xbf16>, vector<32x32xbf16>, vector<8x32xf32> -> vector<8x32xf32>
    %16 = vector.broadcast %3 : vector<1x32xf32> to vector<8x32xf32>
    %17 = arith.addf %15, %16 : vector<8x32xf32>
    %18 = tpu.transpose %13, [1, 0] : vector<8x32xf32> -> vector<32x8xf32>
    %19 = vector.shape_cast %18 : vector<32x8xf32> to vector<4x8x8xf32>
    %20 = tpu.transpose %19, [0, 2, 1] : vector<4x8x8xf32> -> vector<4x8x8xf32>
    %21 = arith.truncf %20 : vector<4x8x8xf32> to vector<4x8x8xbf16>
    %22 = tpu.transpose %17, [1, 0] : vector<8x32xf32> -> vector<32x8xf32>
    %23 = vector.shape_cast %22 : vector<32x8xf32> to vector<4x8x8xf32>
    %24 = tpu.transpose %23, [0, 2, 1] : vector<4x8x8xf32> -> vector<4x8x8xf32>
    %25 = arith.truncf %24 : vector<4x8x8xf32> to vector<4x8x8xbf16>
    "tpu.trace_start"() <{level = 10 : i32, message = "btd,bsd->bts"}> : () -> ()
    %cst_17 = arith.constant dense<0.000000e+00> : vector<4x8x8xf32>
    %26 = tpu.matmul %21, %25, %cst_17 {dimension_numbers = #tpu.dot_dimension_numbers<[2], [2], [1], [1], [0, 0, 0, 1, 1, 1], [0], [0]>} : vector<4x8x8xbf16>, vector<4x8x8xbf16>, vector<4x8x8xf32> -> vector<4x8x8xf32>
    "tpu.trace_stop"() : () -> ()
    %27 = tpu.iota {dimensions = array<i32: 0>} : vector<8x8xi32>
    %28 = tpu.iota {dimensions = array<i32: 1>} : vector<8x8xi32>
    %c4_i32 = arith.constant 4 : i32
    %29 = vector.broadcast %c4_i32 : i32 to vector<8x8xi32>
    %30 = arith.cmpi slt, %28, %29 : vector<8x8xi32>
    %31 = arith.cmpi sle, %28, %27 : vector<8x8xi32>
    %32 = arith.ori %30, %31 : vector<8x8xi1>
    %33 = vector.shape_cast %32 : vector<8x8xi1> to vector<1x8x8xi1>
    %cst_18 = arith.constant -1.000000e+30 : f32
    %34 = vector.shape_cast %33 : vector<1x8x8xi1> to vector<1x8x8xi1>
    %35 = vector.broadcast %34 : vector<1x8x8xi1> to vector<4x8x8xi1>
    %36 = vector.broadcast %cst_18 : f32 to vector<4x8x8xf32>
    %37 = arith.select %35, %26, %36 : vector<4x8x8xi1>, vector<4x8x8xf32>
    %cst_19 = arith.constant dense<0xFF800000> : vector<4x8xf32>
    %38 = vector.multi_reduction <maximumf>, %37, %cst_19 [2] : vector<4x8x8xf32> to vector<4x8xf32>
    %39 = vector.shape_cast %38 : vector<4x8xf32> to vector<4x8x1xf32>
    %40 = vector.broadcast %39 : vector<4x8x1xf32> to vector<4x8x8xf32>
    %41 = arith.subf %37, %40 : vector<4x8x8xf32>
    %42 = math.exp %41 : vector<4x8x8xf32>
    %cst_20 = arith.constant dense<0.000000e+00> : vector<4x8xf32>
    %43 = vector.multi_reduction <add>, %42, %cst_20 [2] : vector<4x8x8xf32> to vector<4x8xf32>
    %44 = vector.shape_cast %43 : vector<4x8xf32> to vector<4x8x1xf32>
    %45 = tpu.reciprocal %44 {approx = true} : vector<4x8x1xf32> -> vector<4x8x1xf32>
    %46 = vector.broadcast %45 : vector<4x8x1xf32> to vector<4x8x8xf32>
    %47 = arith.mulf %42, %46 : vector<4x8x8xf32>
    %48 = arith.truncf %47 : vector<4x8x8xf32> to vector<4x8x8xbf16>
    "tpu.trace_start"() <{level = 10 : i32, message = "bts,bsd->btd"}> : () -> ()
    %cst_21 = arith.constant dense<0.000000e+00> : vector<4x8x8xf32>
    %49 = tpu.matmul %48, %21, %cst_21 {dimension_numbers = #tpu.dot_dimension_numbers<[2], [1], [1], [2], [0, 0, 0, 1, 1, 2], [0], [0]>} : vector<4x8x8xbf16>, vector<4x8x8xbf16>, vector<4x8x8xf32> -> vector<4x8x8xf32>
    "tpu.trace_stop"() : () -> ()
    %50 = arith.truncf %49 : vector<4x8x8xf32> to vector<4x8x8xbf16>
    %51 = vector.extract_strided_slice %50 {offsets = [0, 0, 0], sizes = [1, 8, 8], strides = [1, 1, 1]} : vector<4x8x8xbf16> to vector<1x8x8xbf16>
    %52 = vector.shape_cast %51 : vector<1x8x8xbf16> to vector<8x8xbf16>
    %c0_22 = arith.constant 0 : index
    %c0_23 = arith.constant 0 : index
    %c0_24 = arith.constant 0 : index
    %53 = vector.load %arg4[%c0_22, %c0_23, %c0_24] : memref<4x8x32xbf16, #tpu.memory_space<vmem>>, vector<1x8x32xbf16>
    %54 = vector.shape_cast %53 : vector<1x8x32xbf16> to vector<8x32xbf16>
    %cst_25 = arith.constant dense<0.000000e+00> : vector<8x32xf32>
    %55 = tpu.matmul %52, %54, %cst_25 {dimension_numbers = #tpu.dot_dimension_numbers<[1], [0], [0], [1], [0, 0, 1, 1], [], []>} : vector<8x8xbf16>, vector<8x32xbf16>, vector<8x32xf32> -> vector<8x32xf32>
    %56 = vector.extract_strided_slice %50 {offsets = [1, 0, 0], sizes = [1, 8, 8], strides = [1, 1, 1]} : vector<4x8x8xbf16> to vector<1x8x8xbf16>
    %57 = vector.shape_cast %56 : vector<1x8x8xbf16> to vector<8x8xbf16>
    %c1_26 = arith.constant 1 : index
    %c0_27 = arith.constant 0 : index
    %c0_28 = arith.constant 0 : index
    %58 = vector.load %arg4[%c1_26, %c0_27, %c0_28] : memref<4x8x32xbf16, #tpu.memory_space<vmem>>, vector<1x8x32xbf16>
    %59 = vector.shape_cast %58 : vector<1x8x32xbf16> to vector<8x32xbf16>
    %cst_29 = arith.constant dense<0.000000e+00> : vector<8x32xf32>
    %60 = tpu.matmul %57, %59, %cst_29 {dimension_numbers = #tpu.dot_dimension_numbers<[1], [0], [0], [1], [0, 0, 1, 1], [], []>} : vector<8x8xbf16>, vector<8x32xbf16>, vector<8x32xf32> -> vector<8x32xf32>
    %61 = arith.addf %55, %60 : vector<8x32xf32>
    %62 = vector.extract_strided_slice %50 {offsets = [2, 0, 0], sizes = [1, 8, 8], strides = [1, 1, 1]} : vector<4x8x8xbf16> to vector<1x8x8xbf16>
    %63 = vector.shape_cast %62 : vector<1x8x8xbf16> to vector<8x8xbf16>
    %c2_30 = arith.constant 2 : index
    %c0_31 = arith.constant 0 : index
    %c0_32 = arith.constant 0 : index
    %64 = vector.load %arg4[%c2_30, %c0_31, %c0_32] : memref<4x8x32xbf16, #tpu.memory_space<vmem>>, vector<1x8x32xbf16>
    %65 = vector.shape_cast %64 : vector<1x8x32xbf16> to vector<8x32xbf16>
    %cst_33 = arith.constant dense<0.000000e+00> : vector<8x32xf32>
    %66 = tpu.matmul %63, %65, %cst_33 {dimension_numbers = #tpu.dot_dimension_numbers<[1], [0], [0], [1], [0, 0, 1, 1], [], []>} : vector<8x8xbf16>, vector<8x32xbf16>, vector<8x32xf32> -> vector<8x32xf32>
    %67 = arith.addf %61, %66 : vector<8x32xf32>
    %68 = vector.extract_strided_slice %50 {offsets = [3, 0, 0], sizes = [1, 8, 8], strides = [1, 1, 1]} : vector<4x8x8xbf16> to vector<1x8x8xbf16>
    %69 = vector.shape_cast %68 : vector<1x8x8xbf16> to vector<8x8xbf16>
    %c3_34 = arith.constant 3 : index
    %c0_35 = arith.constant 0 : index
    %c0_36 = arith.constant 0 : index
    %70 = vector.load %arg4[%c3_34, %c0_35, %c0_36] : memref<4x8x32xbf16, #tpu.memory_space<vmem>>, vector<1x8x32xbf16>
    %71 = vector.shape_cast %70 : vector<1x8x32xbf16> to vector<8x32xbf16>
    %cst_37 = arith.constant dense<0.000000e+00> : vector<8x32xf32>
    %72 = tpu.matmul %69, %71, %cst_37 {dimension_numbers = #tpu.dot_dimension_numbers<[1], [0], [0], [1], [0, 0, 1, 1], [], []>} : vector<8x8xbf16>, vector<8x32xbf16>, vector<8x32xf32> -> vector<8x32xf32>
    %73 = arith.addf %67, %72 : vector<8x32xf32>
    %74 = vector.broadcast %4 : vector<1x32xf32> to vector<8x32xf32>
    %75 = arith.addf %73, %74 : vector<8x32xf32>
    %76 = arith.addf %0, %75 : vector<8x32xf32>
    %cst_38 = arith.constant dense<0.000000e+00> : vector<8xf32>
    %77 = vector.multi_reduction <add>, %76, %cst_38 [1] : vector<8x32xf32> to vector<8xf32>
    %78 = vector.shape_cast %77 : vector<8xf32> to vector<8x1xf32>
    %cst_39 = arith.constant 3.200000e+01 : f32
    %79 = vector.broadcast %cst_39 : f32 to vector<8x1xf32>
    %80 = arith.divf %78, %79 : vector<8x1xf32>
    %81 = vector.broadcast %80 : vector<8x1xf32> to vector<8x32xf32>
    %82 = arith.subf %76, %81 : vector<8x32xf32>
    %83 = arith.mulf %82, %82 : vector<8x32xf32>
    %cst_40 = arith.constant dense<0.000000e+00> : vector<8xf32>
    %84 = vector.multi_reduction <add>, %83, %cst_40 [1] : vector<8x32xf32> to vector<8xf32>
    %85 = vector.shape_cast %84 : vector<8xf32> to vector<8x1xf32>
    %cst_41 = arith.constant 3.200000e+01 : f32
    %86 = vector.broadcast %cst_41 : f32 to vector<8x1xf32>
    %87 = arith.divf %85, %86 : vector<8x1xf32>
    %88 = vector.broadcast %80 : vector<8x1xf32> to vector<8x32xf32>
    %89 = arith.subf %76, %88 : vector<8x32xf32>
    %cst_42 = arith.constant 9.99999974E-6 : f32
    %90 = vector.broadcast %cst_42 : f32 to vector<8x1xf32>
    %91 = arith.addf %87, %90 : vector<8x1xf32>
    %92 = math.rsqrt %91 : vector<8x1xf32>
    %93 = vector.broadcast %92 : vector<8x1xf32> to vector<8x32xf32>
    %94 = arith.mulf %89, %93 : vector<8x32xf32>
    %95 = vector.broadcast %5 : vector<1x32xf32> to vector<8x32xf32>
    %96 = arith.mulf %94, %95 : vector<8x32xf32>
    %97 = vector.broadcast %6 : vector<1x32xf32> to vector<8x32xf32>
    %98 = arith.addf %96, %97 : vector<8x32xf32>
    %99 = arith.truncf %98 : vector<8x32xf32> to vector<8x32xbf16>
    %c0_43 = arith.constant 0 : index
    %c0_44 = arith.constant 0 : index
    %100 = vector.load %arg5[%c0_43, %c0_44] : memref<32x128xbf16, #tpu.memory_space<vmem>>, vector<32x128xbf16>
    %cst_45 = arith.constant dense<0.000000e+00> : vector<8x128xf32>
    %101 = tpu.matmul %99, %100, %cst_45 {dimension_numbers = #tpu.dot_dimension_numbers<[1], [0], [0], [1], [0, 0, 1, 1], [], []>} : vector<8x32xbf16>, vector<32x128xbf16>, vector<8x128xf32> -> vector<8x128xf32>
    %c0_46 = arith.constant 0 : index
    %c0_47 = arith.constant 0 : index
    %102 = vector.load %arg9[%c0_46, %c0_47] : memref<1x128xf32, #tpu.memory_space<vmem>>, vector<1x128xf32>
    %103 = vector.broadcast %102 : vector<1x128xf32> to vector<8x128xf32>
    %104 = arith.addf %101, %103 : vector<8x128xf32>
    %cst_48 = arith.constant 5.000000e-01 : f32
    %105 = vector.broadcast %cst_48 : f32 to vector<8x128xf32>
    %106 = arith.mulf %105, %104 : vector<8x128xf32>
    %cst_49 = arith.constant 0.707106769 : f32
    %107 = vector.broadcast %cst_49 : f32 to vector<8x128xf32>
    %108 = arith.mulf %104, %107 : vector<8x128xf32>
    %109 = math.erf %108 : vector<8x128xf32>
    %cst_50 = arith.constant 1.000000e+00 : f32
    %110 = vector.broadcast %cst_50 : f32 to vector<8x128xf32>
    %111 = arith.addf %110, %109 : vector<8x128xf32>
    %112 = arith.mulf %106, %111 : vector<8x128xf32>
    %113 = arith.truncf %112 : vector<8x128xf32> to vector<8x128xbf16>
    %c0_51 = arith.constant 0 : index
    %c0_52 = arith.constant 0 : index
    %114 = vector.load %arg6[%c0_51, %c0_52] : memref<128x32xbf16, #tpu.memory_space<vmem>>, vector<128x32xbf16>
    %cst_53 = arith.constant dense<0.000000e+00> : vector<8x32xf32>
    %115 = tpu.matmul %113, %114, %cst_53 {dimension_numbers = #tpu.dot_dimension_numbers<[1], [0], [0], [1], [0, 0, 1, 1], [], []>} : vector<8x128xbf16>, vector<128x32xbf16>, vector<8x32xf32> -> vector<8x32xf32>
    %116 = vector.broadcast %7 : vector<1x32xf32> to vector<8x32xf32>
    %117 = arith.addf %115, %116 : vector<8x32xf32>
    %118 = arith.addf %98, %117 : vector<8x32xf32>
    %cst_54 = arith.constant dense<0.000000e+00> : vector<8xf32>
    %119 = vector.multi_reduction <add>, %118, %cst_54 [1] : vector<8x32xf32> to vector<8xf32>
    %120 = vector.shape_cast %119 : vector<8xf32> to vector<8x1xf32>
    %cst_55 = arith.constant 3.200000e+01 : f32
    %121 = vector.broadcast %cst_55 : f32 to vector<8x1xf32>
    %122 = arith.divf %120, %121 : vector<8x1xf32>
    %123 = vector.broadcast %122 : vector<8x1xf32> to vector<8x32xf32>
    %124 = arith.subf %118, %123 : vector<8x32xf32>
    %125 = arith.mulf %124, %124 : vector<8x32xf32>
    %cst_56 = arith.constant dense<0.000000e+00> : vector<8xf32>
    %126 = vector.multi_reduction <add>, %125, %cst_56 [1] : vector<8x32xf32> to vector<8xf32>
    %127 = vector.shape_cast %126 : vector<8xf32> to vector<8x1xf32>
    %cst_57 = arith.constant 3.200000e+01 : f32
    %128 = vector.broadcast %cst_57 : f32 to vector<8x1xf32>
    %129 = arith.divf %127, %128 : vector<8x1xf32>
    %130 = vector.broadcast %122 : vector<8x1xf32> to vector<8x32xf32>
    %131 = arith.subf %118, %130 : vector<8x32xf32>
    %cst_58 = arith.constant 9.99999974E-6 : f32
    %132 = vector.broadcast %cst_58 : f32 to vector<8x1xf32>
    %133 = arith.addf %129, %132 : vector<8x1xf32>
    %134 = math.rsqrt %133 : vector<8x1xf32>
    %135 = vector.broadcast %134 : vector<8x1xf32> to vector<8x32xf32>
    %136 = arith.mulf %131, %135 : vector<8x32xf32>
    %137 = vector.broadcast %8 : vector<1x32xf32> to vector<8x32xf32>
    %138 = arith.mulf %136, %137 : vector<8x32xf32>
    %139 = vector.broadcast %9 : vector<1x32xf32> to vector<8x32xf32>
    %140 = arith.addf %138, %139 : vector<8x32xf32>
    %c0_59 = arith.constant 0 : index
    %c0_60 = arith.constant 0 : index
    %141 = vector.load %arg10[%c0_59, %c0_60] : memref<8x32xf32, #tpu.memory_space<vmem>>, vector<8x32xf32>
    tpu.vector_store %arg10[%c0_59, %c0_60], %140 {strides = array<i32>} : memref<8x32xf32, #tpu.memory_space<vmem>>, vector<8x32xf32>,
    return
  }
  func.func @transform_0(%arg0: i32) -> (i32, i32) {
    %c0_i32 = arith.constant 0 : i32
    %c0_i32_0 = arith.constant 0 : i32
    return %arg0, %c0_i32 : i32, i32
  }
  func.func @transform_1(%arg0: i32) -> (i32, i32) {
    %c0_i32 = arith.constant 0 : i32
    %c0_i32_0 = arith.constant 0 : i32
    %c0_i32_1 = arith.constant 0 : i32
    return %c0_i32, %c0_i32_0 : i32, i32
  }
  func.func @transform_2(%arg0: i32) -> (i32, i32) {
    %c0_i32 = arith.constant 0 : i32
    %c0_i32_0 = arith.constant 0 : i32
    %c0_i32_1 = arith.constant 0 : i32
    return %c0_i32, %c0_i32_0 : i32, i32
  }
  func.func @transform_3(%arg0: i32) -> (i32, i32, i32) {
    %c0_i32 = arith.constant 0 : i32
    %c0_i32_0 = arith.constant 0 : i32
    %c0_i32_1 = arith.constant 0 : i32
    %c0_i32_2 = arith.constant 0 : i32
    return %c0_i32, %c0_i32_0, %c0_i32_1 : i32, i32, i32
  }
  func.func @transform_4(%arg0: i32) -> (i32, i32) {
    %c0_i32 = arith.constant 0 : i32
    %c0_i32_0 = arith.constant 0 : i32
    %c0_i32_1 = arith.constant 0 : i32
    return %c0_i32, %c0_i32_0 : i32, i32
  }
  func.func @transform_5(%arg0: i32) -> (i32, i32) {
    %c0_i32 = arith.constant 0 : i32
    %c0_i32_0 = arith.constant 0 : i32
    %c0_i32_1 = arith.constant 0 : i32
    return %c0_i32, %c0_i32_0 : i32, i32
  }
  func.func @transform_6(%arg0: i32) -> (i32, i32) {
    %c0_i32 = arith.constant 0 : i32
    %c0_i32_0 = arith.constant 0 : i32
    %c0_i32_1 = arith.constant 0 : i32
    return %c0_i32, %c0_i32_0 : i32, i32
  }
  func.func @transform_7(%arg0: i32) -> (i32, i32) {
    %c0_i32 = arith.constant 0 : i32
    %c0_i32_0 = arith.constant 0 : i32
    %c0_i32_1 = arith.constant 0 : i32
    return %c0_i32, %c0_i32_0 : i32, i32
  }
  func.func @transform_8(%arg0: i32) -> (i32, i32) {
    %c0_i32 = arith.constant 0 : i32
    %c0_i32_0 = arith.constant 0 : i32
    %c0_i32_1 = arith.constant 0 : i32
    return %c0_i32, %c0_i32_0 : i32, i32
  }
  func.func @transform_9(%arg0: i32) -> (i32, i32) {
    %c0_i32 = arith.constant 0 : i32
    %c0_i32_0 = arith.constant 0 : i32
    return %arg0, %c0_i32 : i32, i32
  }
}

</mosaic_0001>

<llo_original>
// kernel: tpu_custom_call.1
$region0: #{tpu_custom_call.1}
  #allocation0 [shape = 'u32[]', space=smem, size = 0x4, offset = 0x4, fixed_abs, tag = 'smem constant byte address 0x4 - core index']
  #allocation1 [shape = 'u32[144,128]{1,0:T(1,128)}', space=vmem, size = 0x12000, scoped, tag = 'internal scratch']
  %s0 = inlined_call_operand.vmem [shape: f32[16,32], index: 0, kind: input, shape index: {}]
  %s1 = inlined_call_operand.vmem [shape: bf16[32,32], index: 1, kind: input, shape index: {}]
  %s2 = inlined_call_operand.vmem [shape: bf16[32,32], index: 2, kind: input, shape index: {}]
  %s3 = inlined_call_operand.vmem [shape: bf16[4,8,32], index: 3, kind: input, shape index: {}]
  %s4 = inlined_call_operand.vmem [shape: bf16[32,128], index: 4, kind: input, shape index: {}]
  %s5 = inlined_call_operand.vmem [shape: bf16[128,32], index: 5, kind: input, shape index: {}]
  %s6 = inlined_call_operand.vmem [shape: f32[2,32], index: 6, kind: input, shape index: {}]
  %s7 = inlined_call_operand.vmem [shape: f32[6,32], index: 7, kind: input, shape index: {}]
  %s8 = inlined_call_operand.vmem [shape: f32[1,128], index: 8, kind: input, shape index: {}]
  %s9 = inlined_call_operand.hbm [shape: f32[16,32], index: 9, kind: output, shape index: {}]
  %s10 = sld [smem:[#allocation0]]
  $region69: #{tpu_custom_call.1} parent=0
    _
  %s12 = ssub.s32 1, %s10
  %s13 = scalar_select 0, %s12, %s10
  $region1: #{tpu_custom_call.1} parent=0
    #allocation2 [shape = 'u8[8192]{0}', space=vmem, size = 0x2000, scoped, tag = 'output window, operand 0']
    #allocation3 [shape = 's32[2]{0}', space=sflag, size = 0x8, scoped, tag = 'scoped memory for tpu_custom_call.1']
    %14 = vsyncpa [#allocation3], 0
    %s15 = scalar_lea.sflag [#allocation3], 1
    %16 = vsyncpa %s15, 0
    loop: start=0, step=1, limit=4
    $region2: #{tpu_custom_call.1} parent=1 // loop_pre_header
      _
    $region3: #{tpu_custom_call.1} parent=1 // loop_header
      %s18 = sphi 0, %s22
      %p19 = scmp.ge.s32.totalorder %s18, 4
      %s28 = sphi 0, %s30
      %s31 = sphi 0, %s28
      %s32 = sphi 0, %s31
      %s48 = sphi 0, %s32
      %s52 = sphi 0, %s52
      %s54 = sphi 0, %s52
      %s55 = sphi 0, %s54
      %s69 = sphi 0, %s55
      %s73 = sphi 0, %s73
      %s75 = sphi 0, %s73
      %s76 = sphi 0, %s75
      %s90 = sphi 0, %s76
      %s94 = sphi 0, %s94
      %s96 = sphi 0, %s94
      %s97 = sphi 0, %s96
      %s111 = sphi 0, %s97
      %s115 = sphi 0, %s115
      %s117 = sphi 0, %s115
      %s118 = sphi 0, %s117
      %s132 = sphi 0, %s118
      %s136 = sphi 0, %s136
      %s138 = sphi 0, %s136
      %s139 = sphi 0, %s138
      %s153 = sphi 0, %s139
      %s157 = sphi 0, %s157
      %s159 = sphi 0, %s157
      %s160 = sphi 0, %s159
      %s174 = sphi 0, %s160
      %s178 = sphi 0, %s178
      %s180 = sphi 0, %s178
      %s181 = sphi 0, %s180
      %s195 = sphi 0, %s181
      %s199 = sphi 0, %s199
      %s201 = sphi 0, %s199
      %s202 = sphi 0, %s201
      %s216 = sphi 0, %s202
      %s222 = sphi 0, %s224
      %s225 = sphi 0, %s222
      %s226 = sphi 0, %s225
      %s242 = sphi 0, %s226
    $region4: #{tpu_custom_call.1} parent=1 // loop_header_branch
      %21 = sbr.rel (%p19) target = $region8
    $region5: #{tpu_custom_call.1} parent=1 // loop_body
      %s23 = ssub.s32 %s18, 1
      %s24 = ssub.s32 %s18, 2
      %s25 = sadd.s32 %s18, 1
      %s26 = ssub.s32 %s18, %s25
      %p27 = scmp.eq.s32.totalorder %s26, 0
      %s29 = sadd.s32 %s28, 1
      %s30 = scalar_select %p27, %s28, %s29
      %p33 = pneg %p27
      %p34 = scmp.eq.s32.totalorder %s18, 1
      %p35 = por %p33, %p34
      %p36 = scmp.ne.s32.totalorder %s28, %s31
      %p37 = scmp.eq.s32.totalorder %s18, 0
      %p38 = por %p36, %p37
      %p39 = scmp.ne.s32.totalorder %s28, %s31
      %p40 = scmp.eq.s32.totalorder %s23, 1
      %p41 = por %p39, %p40
      %p42 = scmp.ne.s32.totalorder %s31, %s32
      %p43 = scmp.eq.s32.totalorder %s23, 0
      %p44 = por %p42, %p43
      %p45 = scmp.ne.s32.totalorder %s31, %s32
      %p46 = scmp.eq.s32.totalorder %s24, 1
      %p47 = por %p45, %p46
      %p49 = scmp.ne.s32.totalorder %s32, %s48
      %p50 = scmp.eq.s32.totalorder %s24, 0
      %p51 = por %p49, %p50
      %s53 = sadd.s32 %s52, 1
      %p56 = scmp.eq.s32.totalorder %s18, 1
      %p57 = scmp.ne.s32.totalorder %s52, %s54
      %p58 = scmp.eq.s32.totalorder %s18, 0
      %p59 = por %p57, %p58
      %p60 = scmp.ne.s32.totalorder %s52, %s54
      %p61 = scmp.eq.s32.totalorder %s23, 1
      %p62 = por %p60, %p61
      %p63 = scmp.ne.s32.totalorder %s54, %s55
      %p64 = scmp.eq.s32.totalorder %s23, 0
      %p65 = por %p63, %p64
      %p66 = scmp.ne.s32.totalorder %s54, %s55
      %p67 = scmp.eq.s32.totalorder %s24, 1
      %p68 = por %p66, %p67
      %p70 = scmp.ne.s32.totalorder %s55, %s69
      %p71 = scmp.eq.s32.totalorder %s24, 0
      %p72 = por %p70, %p71
      %s74 = sadd.s32 %s73, 1
      %p77 = scmp.eq.s32.totalorder %s18, 1
      %p78 = scmp.ne.s32.totalorder %s73, %s75
      %p79 = scmp.eq.s32.totalorder %s18, 0
      %p80 = por %p78, %p79
      %p81 = scmp.ne.s32.totalorder %s73, %s75
      %p82 = scmp.eq.s32.totalorder %s23, 1
      %p83 = por %p81, %p82
      %p84 = scmp.ne.s32.totalorder %s75, %s76
      %p85 = scmp.eq.s32.totalorder %s23, 0
      %p86 = por %p84, %p85
      %p87 = scmp.ne.s32.totalorder %s75, %s76
      %p88 = scmp.eq.s32.totalorder %s24, 1
      %p89 = por %p87, %p88
      %p91 = scmp.ne.s32.totalorder %s76, %s90
      %p92 = scmp.eq.s32.totalorder %s24, 0
      %p93 = por %p91, %p92
      %s95 = sadd.s32 %s94, 1
      %p98 = scmp.eq.s32.totalorder %s18, 1
      %p99 = scmp.ne.s32.totalorder %s94, %s96
      %p100 = scmp.eq.s32.totalorder %s18, 0
      %p101 = por %p99, %p100
      %p102 = scmp.ne.s32.totalorder %s94, %s96
      %p103 = scmp.eq.s32.totalorder %s23, 1
      %p104 = por %p102, %p103
      %p105 = scmp.ne.s32.totalorder %s96, %s97
      %p106 = scmp.eq.s32.totalorder %s23, 0
      %p107 = por %p105, %p106
      %p108 = scmp.ne.s32.totalorder %s96, %s97
      %p109 = scmp.eq.s32.totalorder %s24, 1
      %p110 = por %p108, %p109
      %p112 = scmp.ne.s32.totalorder %s97, %s111
      %p113 = scmp.eq.s32.totalorder %s24, 0
      %p114 = por %p112, %p113
      %s116 = sadd.s32 %s115, 1
      %p119 = scmp.eq.s32.totalorder %s18, 1
      %p120 = scmp.ne.s32.totalorder %s115, %s117
      %p121 = scmp.eq.s32.totalorder %s18, 0
      %p122 = por %p120, %p121
      %p123 = scmp.ne.s32.totalorder %s115, %s117
      %p124 = scmp.eq.s32.totalorder %s23, 1
      %p125 = por %p123, %p124
      %p126 = scmp.ne.s32.totalorder %s117, %s118
      %p127 = scmp.eq.s32.totalorder %s23, 0
      %p128 = por %p126, %p127
      %p129 = scmp.ne.s32.totalorder %s117, %s118
      %p130 = scmp.eq.s32.totalorder %s24, 1
      %p131 = por %p129, %p130
      %p133 = scmp.ne.s32.totalorder %s118, %s132
      %p134 = scmp.eq.s32.totalorder %s24, 0
      %p135 = por %p133, %p134
      %s137 = sadd.s32 %s136, 1
      %p140 = scmp.eq.s32.totalorder %s18, 1
      %p141 = scmp.ne.s32.totalorder %s136, %s138
      %p142 = scmp.eq.s32.totalorder %s18, 0
      %p143 = por %p141, %p142
      %p144 = scmp.ne.s32.totalorder %s136, %s138
      %p145 = scmp.eq.s32.totalorder %s23, 1
      %p146 = por %p144, %p145
      %p147 = scmp.ne.s32.totalorder %s138, %s139
      %p148 = scmp.eq.s32.totalorder %s23, 0
      %p149 = por %p147, %p148
      %p150 = scmp.ne.s32.totalorder %s138, %s139
      %p151 = scmp.eq.s32.totalorder %s24, 1
      %p152 = por %p150, %p151
      %p154 = scmp.ne.s32.totalorder %s139, %s153
      %p155 = scmp.eq.s32.totalorder %s24, 0
      %p156 = por %p154, %p155
      %s158 = sadd.s32 %s157, 1
      %p161 = scmp.eq.s32.totalorder %s18, 1
      %p162 = scmp.ne.s32.totalorder %s157, %s159
      %p163 = scmp.eq.s32.totalorder %s18, 0
      %p164 = por %p162, %p163
      %p165 = scmp.ne.s32.totalorder %s157, %s159
      %p166 = scmp.eq.s32.totalorder %s23, 1
      %p167 = por %p165, %p166
      %p168 = scmp.ne.s32.totalorder %s159, %s160
      %p169 = scmp.eq.s32.totalorder %s23, 0
      %p170 = por %p168, %p169
      %p171 = scmp.ne.s32.totalorder %s159, %s160
      %p172 = scmp.eq.s32.totalorder %s24, 1
      %p173 = por %p171, %p172
      %p175 = scmp.ne.s32.totalorder %s160, %s174
      %p176 = scmp.eq.s32.totalorder %s24, 0
      %p177 = por %p175, %p176
      %s179 = sadd.s32 %s178, 1
      %p182 = scmp.eq.s32.totalorder %s18, 1
      %p183 = scmp.ne.s32.totalorder %s178, %s180
      %p184 = scmp.eq.s32.totalorder %s18, 0
      %p185 = por %p183, %p184
      %p186 = scmp.ne.s32.totalorder %s178, %s180
      %p187 = scmp.eq.s32.totalorder %s23, 1
      %p188 = por %p186, %p187
      %p189 = scmp.ne.s32.totalorder %s180, %s181
      %p190 = scmp.eq.s32.totalorder %s23, 0
      %p191 = por %p189, %p190
      %p192 = scmp.ne.s32.totalorder %s180, %s181
      %p193 = scmp.eq.s32.totalorder %s24, 1
      %p194 = por %p192, %p193
      %p196 = scmp.ne.s32.totalorder %s181, %s195
      %p197 = scmp.eq.s32.totalorder %s24, 0
      %p198 = por %p196, %p197
      %s200 = sadd.s32 %s199, 1
      %p203 = scmp.eq.s32.totalorder %s18, 1
      %p204 = scmp.ne.s32.totalorder %s199, %s201
      %p205 = scmp.eq.s32.totalorder %s18, 0
      %p206 = por %p204, %p205
      %p207 = scmp.ne.s32.totalorder %s199, %s201
      %p208 = scmp.eq.s32.totalorder %s23, 1
      %p209 = por %p207, %p208
      %p210 = scmp.ne.s32.totalorder %s201, %s202
      %p211 = scmp.eq.s32.totalorder %s23, 0
      %p212 = por %p210, %p211
      %p213 = scmp.ne.s32.totalorder %s201, %s202
      %p214 = scmp.eq.s32.totalorder %s24, 1
      %p215 = por %p213, %p214
      %p217 = scmp.ne.s32.totalorder %s202, %s216
      %p218 = scmp.eq.s32.totalorder %s24, 0
      %p219 = por %p217, %p218
      %s220 = ssub.s32 %s18, %s25
      %p221 = scmp.eq.s32.totalorder %s220, 0
      %s223 = sadd.s32 %s222, 1
      %s224 = scalar_select %p221, %s222, %s223
      %p227 = pneg %p221
      %p228 = scmp.eq.s32.totalorder %s18, 1
      %p229 = por %p227, %p228
      %p230 = scmp.ne.s32.totalorder %s222, %s225
      %p231 = scmp.eq.s32.totalorder %s18, 0
      %p232 = por %p230, %p231
      %p233 = scmp.ne.s32.totalorder %s222, %s225
      %p234 = scmp.eq.s32.totalorder %s23, 1
      %p235 = por %p233, %p234
      %p236 = scmp.ne.s32.totalorder %s225, %s226
      %p237 = scmp.eq.s32.totalorder %s23, 0
      %p238 = por %p236, %p237
      %p239 = scmp.ne.s32.totalorder %s225, %s226
      %p240 = scmp.eq.s32.totalorder %s24, 1
      %p241 = por %p239, %p240
      %p243 = scmp.ne.s32.totalorder %s226, %s242
      %p244 = scmp.eq.s32.totalorder %s24, 0
      %p245 = por %p243, %p244
      %p246 = scmp.le.s32.totalorder 1, %s18
      %p247 = scmp.lt.s32.totalorder %s18, 3
      %p248 = pnand %p246, %p247
      %p249 = pneg %p248
      // Predicated region
      $region9: #{tpu_custom_call.1} parent=5 // pred_check
        _
      $region10: #{tpu_custom_call.1} parent=5 // pred_check_branch
        %251 = sbr.rel (%p248) target = $region12
      $region11: #{tpu_custom_call.1} parent=5 // pred_region
        %s252 = ssub.s32 %s18, 1
        // Predicated region
        $region13: #{tpu_custom_call.1} parent=11 // pred_check
          %p253 = pneg %p65
        $region14: #{tpu_custom_call.1} parent=11 // pred_check_branch
          %255 = sbr.rel (%p253) target = $region16
        $region15: #{tpu_custom_call.1} parent=11 // pred_region
          _
        $region16: #{tpu_custom_call.1} parent=11 // pred_fallthru
          _
        // Predicated region
        $region17: #{tpu_custom_call.1} parent=11 // pred_check
          %p256 = pneg %p86
        $region18: #{tpu_custom_call.1} parent=11 // pred_check_branch
          %258 = sbr.rel (%p256) target = $region20
        $region19: #{tpu_custom_call.1} parent=11 // pred_region
          _
        $region20: #{tpu_custom_call.1} parent=11 // pred_fallthru
          _
        // Predicated region
        $region21: #{tpu_custom_call.1} parent=11 // pred_check
          %p259 = pneg %p107
        $region22: #{tpu_custom_call.1} parent=11 // pred_check_branch
          %261 = sbr.rel (%p259) target = $region24
        $region23: #{tpu_custom_call.1} parent=11 // pred_region
          _
        $region24: #{tpu_custom_call.1} parent=11 // pred_fallthru
          _
        // Predicated region
        $region25: #{tpu_custom_call.1} parent=11 // pred_check
          %p262 = pneg %p128
        $region26: #{tpu_custom_call.1} parent=11 // pred_check_branch
          %264 = sbr.rel (%p262) target = $region28
        $region27: #{tpu_custom_call.1} parent=11 // pred_region
          _
        $region28: #{tpu_custom_call.1} parent=11 // pred_fallthru
          _
        // Predicated region
        $region29: #{tpu_custom_call.1} parent=11 // pred_check
          %p265 = pneg %p149
        $region30: #{tpu_custom_call.1} parent=11 // pred_check_branch
          %267 = sbr.rel (%p265) target = $region32
        $region31: #{tpu_custom_call.1} parent=11 // pred_region
          _
        $region32: #{tpu_custom_call.1} parent=11 // pred_fallthru
          _
        // Predicated region
        $region33: #{tpu_custom_call.1} parent=11 // pred_check
          %p268 = pneg %p170
        $region34: #{tpu_custom_call.1} parent=11 // pred_check_branch
          %270 = sbr.rel (%p268) target = $region36
        $region35: #{tpu_custom_call.1} parent=11 // pred_region
          _
        $region36: #{tpu_custom_call.1} parent=11 // pred_fallthru
          _
        // Predicated region
        $region37: #{tpu_custom_call.1} parent=11 // pred_check
          %p271 = pneg %p191
        $region38: #{tpu_custom_call.1} parent=11 // pred_check_branch
          %273 = sbr.rel (%p271) target = $region40
        $region39: #{tpu_custom_call.1} parent=11 // pred_region
          _
        $region40: #{tpu_custom_call.1} parent=11 // pred_fallthru
          _
        // Predicated region
        $region41: #{tpu_custom_call.1} parent=11 // pred_check
          %p274 = pneg %p212
        $region42: #{tpu_custom_call.1} parent=11 // pred_check_branch
          %276 = sbr.rel (%p274) target = $region44
        $region43: #{tpu_custom_call.1} parent=11 // pred_region
          _
        $region44: #{tpu_custom_call.1} parent=11 // pred_fallthru
          _
      $region12: #{tpu_custom_call.1} parent=5 // pred_fallthru
        _
      %p277 = scmp.lt.s32.totalorder %s18, 2
      // Predicated region
      $region45: #{tpu_custom_call.1} parent=5 // pred_check
        %p278 = pneg %p277
      $region46: #{tpu_custom_call.1} parent=5 // pred_check_branch
        %280 = sbr.rel (%p278) target = $region48
      $region47: #{tpu_custom_call.1} parent=5 // pred_region
        // Predicated region
        $region49: #{tpu_custom_call.1} parent=47 // pred_check
          %p281 = pneg %p38
        $region50: #{tpu_custom_call.1} parent=47 // pred_check_branch
          %283 = sbr.rel (%p281) target = $region52
        $region51: #{tpu_custom_call.1} parent=47 // pred_region
          %p284 = scmp.lt.s32.totalorder %s18, 1
          %s285 = scalar_select %p284, %s18, 1
          %s286 = smul.addr %s285, 8
          %s287 = scalar_lea.vmem %s0, %s286
        $region52: #{tpu_custom_call.1} parent=47 // pred_fallthru
          _
      $region48: #{tpu_custom_call.1} parent=5 // pred_fallthru
        _
      %p288 = scmp.le.s32.totalorder 1, %s18
      %p289 = scmp.lt.s32.totalorder %s18, 3
      %p290 = pnand %p288, %p289
      %p291 = pneg %p290
      // Predicated region
      $region53: #{tpu_custom_call.1} parent=5 // pred_check
        _
      $region54: #{tpu_custom_call.1} parent=5 // pred_check_branch
        %293 = sbr.rel (%p290) target = $region56
      $region55: #{tpu_custom_call.1} parent=5 // pred_region
        %s294 = ssub.s32 %s18, 1
        %p295 = scmp.lt.s32.totalorder %s23, 1
        %s296 = scalar_select %p295, %s23, 1
        %s297 = smul.addr %s296, 8
        %s298 = scalar_lea.vmem %s0, %s297
        %p299 = pneg %p44
        %p300 = pneg %p41
        %p301 = pneg %p65
        %p302 = pneg %p62
        %p303 = pneg %p86
        %p304 = pneg %p83
        %p305 = pneg %p107
        %p306 = pneg %p104
        %p307 = pneg %p128
        %p308 = pneg %p125
        %p309 = pneg %p149
        %p310 = pneg %p146
        %p311 = pneg %p170
        %p312 = pneg %p167
        %p313 = pneg %p191
        %p314 = pneg %p188
        %p315 = pneg %p212
        %p316 = pneg %p209
        %p317 = pneg %p238
        %p318 = pneg %p235
        %s319 = sand.u32 %s225, 1
        %s320 = scalar_lea.sflag [#allocation3], %s319
        %s321 = sand.u32 %s225, 1
        %s322 = smul.addr %s321, 8
        %s323 = scalar_lea.vmem [#allocation2], %s322
        %p324 = scmp.lt.s32.totalorder %s23, 1
        %s325 = scalar_select %p324, %s23, 1
        %s326 = smul.addr %s325, 8
        %s327 = scalar_lea.vmem %s0, %s326
        %v329 = vld [vmem:[%s327] sm:$0xff]
        %v330 = vpack.c.bf16 %v329, %v329
        %v331 = vld [vmem:[%s6] sm:$0x1]
        %v332 = vld [vmem:[%s6 + $0x1] sm:$0x1]
        %v333 = vld [vmem:[%s7] sm:$0x1]
        %v334 = vld [vmem:[%s7 + $0x1] sm:$0x1]
        %v335 = vld [vmem:[%s7 + $0x2] sm:$0x1]
        %v336 = vld [vmem:[%s7 + $0x3] sm:$0x1]
        %v337 = vld [vmem:[%s7 + $0x4] sm:$0x1]
        %v338 = vld [vmem:[%s7 + $0x5] sm:$0x1]
        %v339 = vld [vmem:[%s1] sm:$0xf]
        %v340 = vld [vmem:[%s1 + $0x4] sm:$0xf]
        %v341 = vld [vmem:[%s1 + $0x8] sm:$0xf]
        %v342 = vld [vmem:[%s1 + $0xc] sm:$0xf]
        %v343 = vlaneseq
        %v344 = vshrl.u32 %v343, 7
        %v345 = vsub.s32 0, %v344
        %v346 = vrot.slane %v331, %v345
        %v351 = vunpack.c.l.b16 %v339
        %v352 = vunpack.c.l.b16 %v340
        %v353 = vunpack.c.l.b16 %v341
        %v354 = vunpack.c.l.b16 %v342
        %v355 = vpack.c.b16 %v352, %v351
        %v356 = vpack.c.b16 %v354, %v353
        %vm359 = vcmask 261120
        %v361 = vsel %vm359, %v330, 0
        %363 = vmatprep.subr.bf16.mxu0 0
        %364 = vmatpush1.bf16.msra.mxu0 0
        %365 = vmatprep.subr.bf16.mxu0 0
        %366 = vmatpush1.bf16.msra.mxu0 0
        %367 = vmatprep.subr.bf16.mxu0 0
        %368 = vmatpush1.bf16.msra.mxu0 0
        %369 = vmatprep.subr.bf16.mxu0 0
        %370 = vmatpush1.bf16.msra.mxu0 0
        %371 = vmatprep.subr.bf16.mxu0 0
        %372 = vmatpush1.bf16.msra.mxu0 0
        %373 = vmatprep.subr.bf16.mxu0 0
        %374 = vmatpush1.bf16.msra.mxu0 0
        %375 = vmatprep.subr.bf16.mxu0 0
        %376 = vmatpush1.bf16.msra.mxu0 %v356
        %377 = vmatprep.subr.bf16.mxu0 0
        %378 = vmatpush1.bf16.msra.mxu0 %v355
        %379 = vmatprep.subr.bf16.mxu0 0
        %380 = vmatpush2.bf16.msra.mxu0 0
        %381 = vmatprep.subr.bf16.mxu0 0
        %382 = vmatpush2.bf16.msra.mxu0 0
        %383 = vmatprep.subr.bf16.mxu0 0
        %384 = vmatpush2.bf16.msra.mxu0 0
        %385 = vmatprep.subr.bf16.mxu0 0
        %386 = vmatpush2.bf16.msra.mxu0 0
        %387 = vmatprep.subr.bf16.mxu0 0
        %388 = vmatpush2.bf16.msra.mxu0 0
        %389 = vmatprep.subr.bf16.mxu0 0
        %390 = vmatpush2.bf16.msra.mxu0 0
        %391 = vmatprep.subr.bf16.mxu0 0
        %392 = vmatpush2.bf16.msra.mxu0 0
        %393 = vmatprep.subr.bf16.mxu0 0
        %394 = vmatpush2.bf16.msra.mxu0 0
        %395 = vmatprep.mubr.bf16.mxu0 0
        %396 = vmatmul.mubr.bf16.gmra.mxu0 %v361
        %v397 = vpop.f32.mrf.mxu0
        %v398 = vadd.f32 %v346, %v397
        %v399 = vpop.f32.mrf.mxu0
        %v400 = vpop.f32.mrf.mxu0
        %v401 = vpop.f32.mrf.mxu0
        %402 = vdwg.mxu0
        %v403 = vld [vmem:[%s2] sm:$0xf]
        %v404 = vld [vmem:[%s2 + $0x4] sm:$0xf]
        %v405 = vld [vmem:[%s2 + $0x8] sm:$0xf]
        %v406 = vld [vmem:[%s2 + $0xc] sm:$0xf]
        %v407 = vlaneseq
        %v408 = vshrl.u32 %v407, 7
        %v409 = vsub.s32 0, %v408
        %v410 = vrot.slane %v332, %v409
        %v415 = vunpack.c.l.b16 %v403
        %v416 = vunpack.c.l.b16 %v404
        %v417 = vunpack.c.l.b16 %v405
        %v418 = vunpack.c.l.b16 %v406
        %v419 = vpack.c.b16 %v416, %v415
        %v420 = vpack.c.b16 %v418, %v417
        %423 = vmatprep.subr.bf16.mxu0 0
        %424 = vmatpush1.bf16.msra.mxu0 0
        %425 = vmatprep.subr.bf16.mxu0 0
        %426 = vmatpush1.bf16.msra.mxu0 0
        %427 = vmatprep.subr.bf16.mxu0 0
        %428 = vmatpush1.bf16.msra.mxu0 0
        %429 = vmatprep.subr.bf16.mxu0 0
        %430 = vmatpush1.bf16.msra.mxu0 0
        %431 = vmatprep.subr.bf16.mxu0 0
        %432 = vmatpush1.bf16.msra.mxu0 0
        %433 = vmatprep.subr.bf16.mxu0 0
        %434 = vmatpush1.bf16.msra.mxu0 0
        %435 = vmatprep.subr.bf16.mxu0 0
        %436 = vmatpush1.bf16.msra.mxu0 %v420
        %437 = vmatprep.subr.bf16.mxu0 0
        %438 = vmatpush1.bf16.msra.mxu0 %v419
        %439 = vmatprep.subr.bf16.mxu0 0
        %440 = vmatpush2.bf16.msra.mxu0 0
        %441 = vmatprep.subr.bf16.mxu0 0
        %442 = vmatpush2.bf16.msra.mxu0 0
        %443 = vmatprep.subr.bf16.mxu0 0
        %444 = vmatpush2.bf16.msra.mxu0 0
        %445 = vmatprep.subr.bf16.mxu0 0
        %446 = vmatpush2.bf16.msra.mxu0 0
        %447 = vmatprep.subr.bf16.mxu0 0
        %448 = vmatpush2.bf16.msra.mxu0 0
        %449 = vmatprep.subr.bf16.mxu0 0
        %450 = vmatpush2.bf16.msra.mxu0 0
        %451 = vmatprep.subr.bf16.mxu0 0
        %452 = vmatpush2.bf16.msra.mxu0 0
        %453 = vmatprep.subr.bf16.mxu0 0
        %454 = vmatpush2.bf16.msra.mxu0 0
        %455 = vmatprep.mubr.bf16.mxu0 0
        %456 = vmatmul.mubr.bf16.gmra.mxu0 %v361
        %v457 = vpop.f32.mrf.mxu0
        %v458 = vadd.f32 %v410, %v457
        %v459 = vpop.f32.mrf.mxu0
        %v460 = vpop.f32.mrf.mxu0
        %v461 = vpop.f32.mrf.mxu0
        %462 = vdwg.mxu0
        %463 = vxpose.xlu0.b32.start [1/16] %v398, 128
        %464 = vxpose.xlu0.b32.cont [2/16] 0.0, 128
        %465 = vxpose.xlu0.b32.cont [3/16] 0.0, 128
        %466 = vxpose.xlu0.b32.cont [4/16] 0.0, 128
        %467 = vxpose.xlu0.b32.cont [5/16] 0.0, 128
        %468 = vxpose.xlu0.b32.cont [6/16] 0.0, 128
        %469 = vxpose.xlu0.b32.cont [7/16] 0.0, 128
        %470 = vxpose.xlu0.b32.cont [8/16] 0.0, 128
        %471 = vxpose.xlu0.b32.cont [9/16] 0.0, 128
        %472 = vxpose.xlu0.b32.cont [10/16] 0.0, 128
        %473 = vxpose.xlu0.b32.cont [11/16] 0.0, 128
        %474 = vxpose.xlu0.b32.cont [12/16] 0.0, 128
        %475 = vxpose.xlu0.b32.cont [13/16] 0.0, 128
        %476 = vxpose.xlu0.b32.cont [14/16] 0.0, 128
        %477 = vxpose.xlu0.b32.cont [15/16] 0.0, 128
        %478 = vxpose.xlu0.b32.end [16/16] 0.0, 128
        %v479 = vpop.trf.xlu0
        %v480 = vpop.trf.xlu0
        %v481 = vpop.trf.xlu0
        %v482 = vpop.trf.xlu0
        %v483 = vpop.trf.xlu0
        %v484 = vpop.trf.xlu0
        %v485 = vpop.trf.xlu0
        %v486 = vpop.trf.xlu0
        %v487 = vpop.trf.xlu0
        %v488 = vpop.trf.xlu0
        %v489 = vpop.trf.xlu0
        %v490 = vpop.trf.xlu0
        %v491 = vpop.trf.xlu0
        %v492 = vpop.trf.xlu0
        %v493 = vpop.trf.xlu0
        %v494 = vpop.trf.xlu0
        %495 = vxpose.xlu0.b32.start [1/16] %v479, 128
        %496 = vxpose.xlu0.b32.cont [2/16] 0.0, 128
        %497 = vxpose.xlu0.b32.cont [3/16] 0.0, 128
        %498 = vxpose.xlu0.b32.cont [4/16] 0.0, 128
        %499 = vxpose.xlu0.b32.cont [5/16] 0.0, 128
        %500 = vxpose.xlu0.b32.cont [6/16] 0.0, 128
        %501 = vxpose.xlu0.b32.cont [7/16] 0.0, 128
        %502 = vxpose.xlu0.b32.cont [8/16] 0.0, 128
        %503 = vxpose.xlu0.b32.cont [9/16] 0.0, 128
        %504 = vxpose.xlu0.b32.cont [10/16] 0.0, 128
        %505 = vxpose.xlu0.b32.cont [11/16] 0.0, 128
        %506 = vxpose.xlu0.b32.cont [12/16] 0.0, 128
        %507 = vxpose.xlu0.b32.cont [13/16] 0.0, 128
        %508 = vxpose.xlu0.b32.cont [14/16] 0.0, 128
        %509 = vxpose.xlu0.b32.cont [15/16] 0.0, 128
        %510 = vxpose.xlu0.b32.end [16/16] 0.0, 128
        %v511 = vpop.trf.xlu0
        %v512 = vpop.trf.xlu0
        %v513 = vpop.trf.xlu0
        %v514 = vpop.trf.xlu0
        %v515 = vpop.trf.xlu0
        %v516 = vpop.trf.xlu0
        %v517 = vpop.trf.xlu0
        %v518 = vpop.trf.xlu0
        %v519 = vpop.trf.xlu0
        %v520 = vpop.trf.xlu0
        %v521 = vpop.trf.xlu0
        %v522 = vpop.trf.xlu0
        %v523 = vpop.trf.xlu0
        %v524 = vpop.trf.xlu0
        %v525 = vpop.trf.xlu0
        %v526 = vpop.trf.xlu0
        %527 = vxpose.xlu0.b32.start [1/16] %v480, 128
        %528 = vxpose.xlu0.b32.cont [2/16] 0.0, 128
        %529 = vxpose.xlu0.b32.cont [3/16] 0.0, 128
        %530 = vxpose.xlu0.b32.cont [4/16] 0.0, 128
        %531 = vxpose.xlu0.b32.cont [5/16] 0.0, 128
        %532 = vxpose.xlu0.b32.cont [6/16] 0.0, 128
        %533 = vxpose.xlu0.b32.cont [7/16] 0.0, 128
        %534 = vxpose.xlu0.b32.cont [8/16] 0.0, 128
        %535 = vxpose.xlu0.b32.cont [9/16] 0.0, 128
        %536 = vxpose.xlu0.b32.cont [10/16] 0.0, 128
        %537 = vxpose.xlu0.b32.cont [11/16] 0.0, 128
        %538 = vxpose.xlu0.b32.cont [12/16] 0.0, 128
        %539 = vxpose.xlu0.b32.cont [13/16] 0.0, 128
        %540 = vxpose.xlu0.b32.cont [14/16] 0.0, 128
        %541 = vxpose.xlu0.b32.cont [15/16] 0.0, 128
        %542 = vxpose.xlu0.b32.end [16/16] 0.0, 128
        %v543 = vpop.trf.xlu0
        %v544 = vpop.trf.xlu0
        %v545 = vpop.trf.xlu0
        %v546 = vpop.trf.xlu0
        %v547 = vpop.trf.xlu0
        %v548 = vpop.trf.xlu0
        %v549 = vpop.trf.xlu0
        %v550 = vpop.trf.xlu0
        %v551 = vpop.trf.xlu0
        %v552 = vpop.trf.xlu0
        %v553 = vpop.trf.xlu0
        %v554 = vpop.trf.xlu0
        %v555 = vpop.trf.xlu0
        %v556 = vpop.trf.xlu0
        %v557 = vpop.trf.xlu0
        %v558 = vpop.trf.xlu0
        %559 = vxpose.xlu0.b32.start [1/16] %v481, 128
        %560 = vxpose.xlu0.b32.cont [2/16] 0.0, 128
        %561 = vxpose.xlu0.b32.cont [3/16] 0.0, 128
        %562 = vxpose.xlu0.b32.cont [4/16] 0.0, 128
        %563 = vxpose.xlu0.b32.cont [5/16] 0.0, 128
        %564 = vxpose.xlu0.b32.cont [6/16] 0.0, 128
        %565 = vxpose.xlu0.b32.cont [7/16] 0.0, 128
        %566 = vxpose.xlu0.b32.cont [8/16] 0.0, 128
        %567 = vxpose.xlu0.b32.cont [9/16] 0.0, 128
        %568 = vxpose.xlu0.b32.cont [10/16] 0.0, 128
        %569 = vxpose.xlu0.b32.cont [11/16] 0.0, 128
        %570 = vxpose.xlu0.b32.cont [12/16] 0.0, 128
        %571 = vxpose.xlu0.b32.cont [13/16] 0.0, 128
        %572 = vxpose.xlu0.b32.cont [14/16] 0.0, 128
        %573 = vxpose.xlu0.b32.cont [15/16] 0.0, 128
        %574 = vxpose.xlu0.b32.end [16/16] 0.0, 128
        %v575 = vpop.trf.xlu0
        %v576 = vpop.trf.xlu0
        %v577 = vpop.trf.xlu0
        %v578 = vpop.trf.xlu0
        %v579 = vpop.trf.xlu0
        %v580 = vpop.trf.xlu0
        %v581 = vpop.trf.xlu0
        %v582 = vpop.trf.xlu0
        %v583 = vpop.trf.xlu0
        %v584 = vpop.trf.xlu0
        %v585 = vpop.trf.xlu0
        %v586 = vpop.trf.xlu0
        %v587 = vpop.trf.xlu0
        %v588 = vpop.trf.xlu0
        %v589 = vpop.trf.xlu0
        %v590 = vpop.trf.xlu0
        %591 = vxpose.xlu0.b32.start [1/16] %v482, 128
        %592 = vxpose.xlu0.b32.cont [2/16] 0.0, 128
        %593 = vxpose.xlu0.b32.cont [3/16] 0.0, 128
        %594 = vxpose.xlu0.b32.cont [4/16] 0.0, 128
        %595 = vxpose.xlu0.b32.cont [5/16] 0.0, 128
        %596 = vxpose.xlu0.b32.cont [6/16] 0.0, 128
        %597 = vxpose.xlu0.b32.cont [7/16] 0.0, 128
        %598 = vxpose.xlu0.b32.cont [8/16] 0.0, 128
        %599 = vxpose.xlu0.b32.cont [9/16] 0.0, 128
        %600 = vxpose.xlu0.b32.cont [10/16] 0.0, 128
        %601 = vxpose.xlu0.b32.cont [11/16] 0.0, 128
        %602 = vxpose.xlu0.b32.cont [12/16] 0.0, 128
        %603 = vxpose.xlu0.b32.cont [13/16] 0.0, 128
        %604 = vxpose.xlu0.b32.cont [14/16] 0.0, 128
        %605 = vxpose.xlu0.b32.cont [15/16] 0.0, 128
        %606 = vxpose.xlu0.b32.end [16/16] 0.0, 128
        %v607 = vpop.trf.xlu0
        %v608 = vpop.trf.xlu0
        %v609 = vpop.trf.xlu0
        %v610 = vpop.trf.xlu0
        %v611 = vpop.trf.xlu0
        %v612 = vpop.trf.xlu0
        %v613 = vpop.trf.xlu0
        %v614 = vpop.trf.xlu0
        %v615 = vpop.trf.xlu0
        %v616 = vpop.trf.xlu0
        %v617 = vpop.trf.xlu0
        %v618 = vpop.trf.xlu0
        %v619 = vpop.trf.xlu0
        %v620 = vpop.trf.xlu0
        %v621 = vpop.trf.xlu0
        %v622 = vpop.trf.xlu0
        %v623 = vpack.c.bf16 %v511, %v511
        %v624 = vpack.c.bf16 %v543, %v543
        %v625 = vpack.c.bf16 %v575, %v575
        %v626 = vpack.c.bf16 %v607, %v607
        %627 = vxpose.xlu0.b32.start [1/16] %v458, 128
        %628 = vxpose.xlu0.b32.cont [2/16] 0.0, 128
        %629 = vxpose.xlu0.b32.cont [3/16] 0.0, 128
        %630 = vxpose.xlu0.b32.cont [4/16] 0.0, 128
        %631 = vxpose.xlu0.b32.cont [5/16] 0.0, 128
        %632 = vxpose.xlu0.b32.cont [6/16] 0.0, 128
        %633 = vxpose.xlu0.b32.cont [7/16] 0.0, 128
        %634 = vxpose.xlu0.b32.cont [8/16] 0.0, 128
        %635 = vxpose.xlu0.b32.cont [9/16] 0.0, 128
        %636 = vxpose.xlu0.b32.cont [10/16] 0.0, 128
        %637 = vxpose.xlu0.b32.cont [11/16] 0.0, 128
        %638 = vxpose.xlu0.b32.cont [12/16] 0.0, 128
        %639 = vxpose.xlu0.b32.cont [13/16] 0.0, 128
        %640 = vxpose.xlu0.b32.cont [14/16] 0.0, 128
        %641 = vxpose.xlu0.b32.cont [15/16] 0.0, 128
        %642 = vxpose.xlu0.b32.end [16/16] 0.0, 128
        %v643 = vpop.trf.xlu0
        %v644 = vpop.trf.xlu0
        %v645 = vpop.trf.xlu0
        %v646 = vpop.trf.xlu0
        %v647 = vpop.trf.xlu0
        %v648 = vpop.trf.xlu0
        %v649 = vpop.trf.xlu0
        %v650 = vpop.trf.xlu0
        %v651 = vpop.trf.xlu0
        %v652 = vpop.trf.xlu0
        %v653 = vpop.trf.xlu0
        %v654 = vpop.trf.xlu0
        %v655 = vpop.trf.xlu0
        %v656 = vpop.trf.xlu0
        %v657 = vpop.trf.xlu0
        %v658 = vpop.trf.xlu0
        %659 = vxpose.xlu0.b32.start [1/16] %v643, 128
        %660 = vxpose.xlu0.b32.cont [2/16] 0.0, 128
        %661 = vxpose.xlu0.b32.cont [3/16] 0.0, 128
        %662 = vxpose.xlu0.b32.cont [4/16] 0.0, 128
        %663 = vxpose.xlu0.b32.cont [5/16] 0.0, 128
        %664 = vxpose.xlu0.b32.cont [6/16] 0.0, 128
        %665 = vxpose.xlu0.b32.cont [7/16] 0.0, 128
        %666 = vxpose.xlu0.b32.cont [8/16] 0.0, 128
        %667 = vxpose.xlu0.b32.cont [9/16] 0.0, 128
        %668 = vxpose.xlu0.b32.cont [10/16] 0.0, 128
        %669 = vxpose.xlu0.b32.cont [11/16] 0.0, 128
        %670 = vxpose.xlu0.b32.cont [12/16] 0.0, 128
        %671 = vxpose.xlu0.b32.cont [13/16] 0.0, 128
        %672 = vxpose.xlu0.b32.cont [14/16] 0.0, 128
        %673 = vxpose.xlu0.b32.cont [15/16] 0.0, 128
        %674 = vxpose.xlu0.b32.end [16/16] 0.0, 128
        %v675 = vpop.trf.xlu0
        %v676 = vpop.trf.xlu0
        %v677 = vpop.trf.xlu0
        %v678 = vpop.trf.xlu0
        %v679 = vpop.trf.xlu0
        %v680 = vpop.trf.xlu0
        %v681 = vpop.trf.xlu0
        %v682 = vpop.trf.xlu0
        %v683 = vpop.trf.xlu0
        %v684 = vpop.trf.xlu0
        %v685 = vpop.trf.xlu0
        %v686 = vpop.trf.xlu0
        %v687 = vpop.trf.xlu0
        %v688 = vpop.trf.xlu0
        %v689 = vpop.trf.xlu0
        %v690 = vpop.trf.xlu0
        %691 = vxpose.xlu0.b32.start [1/16] %v644, 128
        %692 = vxpose.xlu0.b32.cont [2/16] 0.0, 128
        %693 = vxpose.xlu0.b32.cont [3/16] 0.0, 128
        %694 = vxpose.xlu0.b32.cont [4/16] 0.0, 128
        %695 = vxpose.xlu0.b32.cont [5/16] 0.0, 128
        %696 = vxpose.xlu0.b32.cont [6/16] 0.0, 128
        %697 = vxpose.xlu0.b32.cont [7/16] 0.0, 128
        %698 = vxpose.xlu0.b32.cont [8/16] 0.0, 128
        %699 = vxpose.xlu0.b32.cont [9/16] 0.0, 128
        %700 = vxpose.xlu0.b32.cont [10/16] 0.0, 128
        %701 = vxpose.xlu0.b32.cont [11/16] 0.0, 128
        %702 = vxpose.xlu0.b32.cont [12/16] 0.0, 128
        %703 = vxpose.xlu0.b32.cont [13/16] 0.0, 128
        %704 = vxpose.xlu0.b32.cont [14/16] 0.0, 128
        %705 = vxpose.xlu0.b32.cont [15/16] 0.0, 128
        %706 = vxpose.xlu0.b32.end [16/16] 0.0, 128
        %v707 = vpop.trf.xlu0
        %v708 = vpop.trf.xlu0
        %v709 = vpop.trf.xlu0
        %v710 = vpop.trf.xlu0
        %v711 = vpop.trf.xlu0
        %v712 = vpop.trf.xlu0
        %v713 = vpop.trf.xlu0
        %v714 = vpop.trf.xlu0
        %v715 = vpop.trf.xlu0
        %v716 = vpop.trf.xlu0
        %v717 = vpop.trf.xlu0
        %v718 = vpop.trf.xlu0
        %v719 = vpop.trf.xlu0
        %v720 = vpop.trf.xlu0
        %v721 = vpop.trf.xlu0
        %v722 = vpop.trf.xlu0
        %723 = vxpose.xlu0.b32.start [1/16] %v645, 128
        %724 = vxpose.xlu0.b32.cont [2/16] 0.0, 128
        %725 = vxpose.xlu0.b32.cont [3/16] 0.0, 128
        %726 = vxpose.xlu0.b32.cont [4/16] 0.0, 128
        %727 = vxpose.xlu0.b32.cont [5/16] 0.0, 128
        %728 = vxpose.xlu0.b32.cont [6/16] 0.0, 128
        %729 = vxpose.xlu0.b32.cont [7/16] 0.0, 128
        %730 = vxpose.xlu0.b32.cont [8/16] 0.0, 128
        %731 = vxpose.xlu0.b32.cont [9/16] 0.0, 128
        %732 = vxpose.xlu0.b32.cont [10/16] 0.0, 128
        %733 = vxpose.xlu0.b32.cont [11/16] 0.0, 128
        %734 = vxpose.xlu0.b32.cont [12/16] 0.0, 128
        %735 = vxpose.xlu0.b32.cont [13/16] 0.0, 128
        %736 = vxpose.xlu0.b32.cont [14/16] 0.0, 128
        %737 = vxpose.xlu0.b32.cont [15/16] 0.0, 128
        %738 = vxpose.xlu0.b32.end [16/16] 0.0, 128
        %v739 = vpop.trf.xlu0
        %v740 = vpop.trf.xlu0
        %v741 = vpop.trf.xlu0
        %v742 = vpop.trf.xlu0
        %v743 = vpop.trf.xlu0
        %v744 = vpop.trf.xlu0
        %v745 = vpop.trf.xlu0
        %v746 = vpop.trf.xlu0
        %v747 = vpop.trf.xlu0
        %v748 = vpop.trf.xlu0
        %v749 = vpop.trf.xlu0
        %v750 = vpop.trf.xlu0
        %v751 = vpop.trf.xlu0
        %v752 = vpop.trf.xlu0
        %v753 = vpop.trf.xlu0
        %v754 = vpop.trf.xlu0
        %755 = vxpose.xlu0.b32.start [1/16] %v646, 128
        %756 = vxpose.xlu0.b32.cont [2/16] 0.0, 128
        %757 = vxpose.xlu0.b32.cont [3/16] 0.0, 128
        %758 = vxpose.xlu0.b32.cont [4/16] 0.0, 128
        %759 = vxpose.xlu0.b32.cont [5/16] 0.0, 128
        %760 = vxpose.xlu0.b32.cont [6/16] 0.0, 128
        %761 = vxpose.xlu0.b32.cont [7/16] 0.0, 128
        %762 = vxpose.xlu0.b32.cont [8/16] 0.0, 128
        %763 = vxpose.xlu0.b32.cont [9/16] 0.0, 128
        %764 = vxpose.xlu0.b32.cont [10/16] 0.0, 128
        %765 = vxpose.xlu0.b32.cont [11/16] 0.0, 128
        %766 = vxpose.xlu0.b32.cont [12/16] 0.0, 128
        %767 = vxpose.xlu0.b32.cont [13/16] 0.0, 128
        %768 = vxpose.xlu0.b32.cont [14/16] 0.0, 128
        %769 = vxpose.xlu0.b32.cont [15/16] 0.0, 128
        %770 = vxpose.xlu0.b32.end [16/16] 0.0, 128
        %v771 = vpop.trf.xlu0
        %v772 = vpop.trf.xlu0
        %v773 = vpop.trf.xlu0
        %v774 = vpop.trf.xlu0
        %v775 = vpop.trf.xlu0
        %v776 = vpop.trf.xlu0
        %v777 = vpop.trf.xlu0
        %v778 = vpop.trf.xlu0
        %v779 = vpop.trf.xlu0
        %v780 = vpop.trf.xlu0
        %v781 = vpop.trf.xlu0
        %v782 = vpop.trf.xlu0
        %v783 = vpop.trf.xlu0
        %v784 = vpop.trf.xlu0
        %v785 = vpop.trf.xlu0
        %v786 = vpop.trf.xlu0
        %v787 = vpack.c.bf16 %v675, %v675
        %v788 = vpack.c.bf16 %v707, %v707
        %v789 = vpack.c.bf16 %v739, %v739
        %v790 = vpack.c.bf16 %v771, %v771
        %vm791 = vcmask 64512
        %v793 = vsel %vm791, %v623, 0
        %v796 = vsel %vm791, %v787, 0
        %798 = vmatprep.subr.bf16.mxu0 0
        %799 = vmatpush1.bf16.xpose.msra.mxu0 0
        %800 = vmatprep.subr.bf16.mxu0 0
        %801 = vmatpush1.bf16.xpose.msra.mxu0 0
        %802 = vmatprep.subr.bf16.mxu0 0
        %803 = vmatpush1.bf16.xpose.msra.mxu0 0
        %804 = vmatprep.subr.bf16.mxu0 0
        %805 = vmatpush1.bf16.xpose.msra.mxu0 0
        %806 = vmatprep.subr.bf16.mxu0 0
        %807 = vmatpush1.bf16.xpose.msra.mxu0 0
        %808 = vmatprep.subr.bf16.mxu0 0
        %809 = vmatpush1.bf16.xpose.msra.mxu0 0
        %810 = vmatprep.subr.bf16.mxu0 0
        %811 = vmatpush1.bf16.xpose.msra.mxu0 0
        %812 = vmatprep.subr.bf16.mxu0 0
        %813 = vmatpush1.bf16.xpose.msra.mxu0 %v796
        %814 = vmatprep.subr.bf16.mxu0 0
        %815 = vmatpush2.bf16.xpose.msra.mxu0 0
        %816 = vmatprep.subr.bf16.mxu0 0
        %817 = vmatpush2.bf16.xpose.msra.mxu0 0
        %818 = vmatprep.subr.bf16.mxu0 0
        %819 = vmatpush2.bf16.xpose.msra.mxu0 0
        %820 = vmatprep.subr.bf16.mxu0 0
        %821 = vmatpush2.bf16.xpose.msra.mxu0 0
        %822 = vmatprep.subr.bf16.mxu0 0
        %823 = vmatpush2.bf16.xpose.msra.mxu0 0
        %824 = vmatprep.subr.bf16.mxu0 0
        %825 = vmatpush2.bf16.xpose.msra.mxu0 0
        %826 = vmatprep.subr.bf16.mxu0 0
        %827 = vmatpush2.bf16.xpose.msra.mxu0 0
        %828 = vmatprep.subr.bf16.mxu0 0
        %829 = vmatpush2.bf16.xpose.msra.mxu0 0
        %830 = vmatprep.mubr.bf16.mxu0 0
        %831 = vmatmul.mubr.bf16.gmra.mxu0 %v793
        %v832 = vpop.f32.mrf.mxu0
        %v833 = vadd.f32 0.0, %v832
        %v834 = vpop.f32.mrf.mxu0
        %v835 = vpop.f32.mrf.mxu0
        %v836 = vpop.f32.mrf.mxu0
        %837 = vdwg.mxu0
        %v839 = vsel %vm791, %v624, 0
        %v842 = vsel %vm791, %v788, 0
        %844 = vmatprep.subr.bf16.mxu0 0
        %845 = vmatpush1.bf16.xpose.msra.mxu0 0
        %846 = vmatprep.subr.bf16.mxu0 0
        %847 = vmatpush1.bf16.xpose.msra.mxu0 0
        %848 = vmatprep.subr.bf16.mxu0 0
        %849 = vmatpush1.bf16.xpose.msra.mxu0 0
        %850 = vmatprep.subr.bf16.mxu0 0
        %851 = vmatpush1.bf16.xpose.msra.mxu0 0
        %852 = vmatprep.subr.bf16.mxu0 0
        %853 = vmatpush1.bf16.xpose.msra.mxu0 0
        %854 = vmatprep.subr.bf16.mxu0 0
        %855 = vmatpush1.bf16.xpose.msra.mxu0 0
        %856 = vmatprep.subr.bf16.mxu0 0
        %857 = vmatpush1.bf16.xpose.msra.mxu0 0
        %858 = vmatprep.subr.bf16.mxu0 0
        %859 = vmatpush1.bf16.xpose.msra.mxu0 %v842
        %860 = vmatprep.subr.bf16.mxu0 0
        %861 = vmatpush2.bf16.xpose.msra.mxu0 0
        %862 = vmatprep.subr.bf16.mxu0 0
        %863 = vmatpush2.bf16.xpose.msra.mxu0 0
        %864 = vmatprep.subr.bf16.mxu0 0
        %865 = vmatpush2.bf16.xpose.msra.mxu0 0
        %866 = vmatprep.subr.bf16.mxu0 0
        %867 = vmatpush2.bf16.xpose.msra.mxu0 0
        %868 = vmatprep.subr.bf16.mxu0 0
        %869 = vmatpush2.bf16.xpose.msra.mxu0 0
        %870 = vmatprep.subr.bf16.mxu0 0
        %871 = vmatpush2.bf16.xpose.msra.mxu0 0
        %872 = vmatprep.subr.bf16.mxu0 0
        %873 = vmatpush2.bf16.xpose.msra.mxu0 0
        %874 = vmatprep.subr.bf16.mxu0 0
        %875 = vmatpush2.bf16.xpose.msra.mxu0 0
        %876 = vmatprep.mubr.bf16.mxu0 0
        %877 = vmatmul.mubr.bf16.gmra.mxu0 %v839
        %v878 = vpop.f32.mrf.mxu0
        %v879 = vadd.f32 0.0, %v878
        %v880 = vpop.f32.mrf.mxu0
        %v881 = vpop.f32.mrf.mxu0
        %v882 = vpop.f32.mrf.mxu0
        %883 = vdwg.mxu0
        %v885 = vsel %vm791, %v625, 0
        %v888 = vsel %vm791, %v789, 0
        %890 = vmatprep.subr.bf16.mxu0 0
        %891 = vmatpush1.bf16.xpose.msra.mxu0 0
        %892 = vmatprep.subr.bf16.mxu0 0
        %893 = vmatpush1.bf16.xpose.msra.mxu0 0
        %894 = vmatprep.subr.bf16.mxu0 0
        %895 = vmatpush1.bf16.xpose.msra.mxu0 0
        %896 = vmatprep.subr.bf16.mxu0 0
        %897 = vmatpush1.bf16.xpose.msra.mxu0 0
        %898 = vmatprep.subr.bf16.mxu0 0
        %899 = vmatpush1.bf16.xpose.msra.mxu0 0
        %900 = vmatprep.subr.bf16.mxu0 0
        %901 = vmatpush1.bf16.xpose.msra.mxu0 0
        %902 = vmatprep.subr.bf16.mxu0 0
        %903 = vmatpush1.bf16.xpose.msra.mxu0 0
        %904 = vmatprep.subr.bf16.mxu0 0
        %905 = vmatpush1.bf16.xpose.msra.mxu0 %v888
        %906 = vmatprep.subr.bf16.mxu0 0
        %907 = vmatpush2.bf16.xpose.msra.mxu0 0
        %908 = vmatprep.subr.bf16.mxu0 0
        %909 = vmatpush2.bf16.xpose.msra.mxu0 0
        %910 = vmatprep.subr.bf16.mxu0 0
        %911 = vmatpush2.bf16.xpose.msra.mxu0 0
        %912 = vmatprep.subr.bf16.mxu0 0
        %913 = vmatpush2.bf16.xpose.msra.mxu0 0
        %914 = vmatprep.subr.bf16.mxu0 0
        %915 = vmatpush2.bf16.xpose.msra.mxu0 0
        %916 = vmatprep.subr.bf16.mxu0 0
        %917 = vmatpush2.bf16.xpose.msra.mxu0 0
        %918 = vmatprep.subr.bf16.mxu0 0
        %919 = vmatpush2.bf16.xpose.msra.mxu0 0
        %920 = vmatprep.subr.bf16.mxu0 0
        %921 = vmatpush2.bf16.xpose.msra.mxu0 0
        %922 = vmatprep.mubr.bf16.mxu0 0
        %923 = vmatmul.mubr.bf16.gmra.mxu0 %v885
        %v924 = vpop.f32.mrf.mxu0
        %v925 = vadd.f32 0.0, %v924
        %v926 = vpop.f32.mrf.mxu0
        %v927 = vpop.f32.mrf.mxu0
        %v928 = vpop.f32.mrf.mxu0
        %929 = vdwg.mxu0
        %v931 = vsel %vm791, %v626, 0
        %v934 = vsel %vm791, %v790, 0
        %936 = vmatprep.subr.bf16.mxu0 0
        %937 = vmatpush1.bf16.xpose.msra.mxu0 0
        %938 = vmatprep.subr.bf16.mxu0 0
        %939 = vmatpush1.bf16.xpose.msra.mxu0 0
        %940 = vmatprep.subr.bf16.mxu0 0
        %941 = vmatpush1.bf16.xpose.msra.mxu0 0
        %942 = vmatprep.subr.bf16.mxu0 0
        %943 = vmatpush1.bf16.xpose.msra.mxu0 0
        %944 = vmatprep.subr.bf16.mxu0 0
        %945 = vmatpush1.bf16.xpose.msra.mxu0 0
        %946 = vmatprep.subr.bf16.mxu0 0
        %947 = vmatpush1.bf16.xpose.msra.mxu0 0
        %948 = vmatprep.subr.bf16.mxu0 0
        %949 = vmatpush1.bf16.xpose.msra.mxu0 0
        %950 = vmatprep.subr.bf16.mxu0 0
        %951 = vmatpush1.bf16.xpose.msra.mxu0 %v934
        %952 = vmatprep.subr.bf16.mxu0 0
        %953 = vmatpush2.bf16.xpose.msra.mxu0 0
        %954 = vmatprep.subr.bf16.mxu0 0
        %955 = vmatpush2.bf16.xpose.msra.mxu0 0
        %956 = vmatprep.subr.bf16.mxu0 0
        %957 = vmatpush2.bf16.xpose.msra.mxu0 0
        %958 = vmatprep.subr.bf16.mxu0 0
        %959 = vmatpush2.bf16.xpose.msra.mxu0 0
        %960 = vmatprep.subr.bf16.mxu0 0
        %961 = vmatpush2.bf16.xpose.msra.mxu0 0
        %962 = vmatprep.subr.bf16.mxu0 0
        %963 = vmatpush2.bf16.xpose.msra.mxu0 0
        %964 = vmatprep.subr.bf16.mxu0 0
        %965 = vmatpush2.bf16.xpose.msra.mxu0 0
        %966 = vmatprep.subr.bf16.mxu0 0
        %967 = vmatpush2.bf16.xpose.msra.mxu0 0
        %968 = vmatprep.mubr.bf16.mxu0 0
        %969 = vmatmul.mubr.bf16.gmra.mxu0 %v931
        %v970 = vpop.f32.mrf.mxu0
        %v971 = vadd.f32 0.0, %v970
        %v972 = vpop.f32.mrf.mxu0
        %v973 = vpop.f32.mrf.mxu0
        %v974 = vpop.f32.mrf.mxu0
        %975 = vdwg.mxu0
        %v976 = vlaneseq
        %v977 = vshrl.u32 %v976, 7
        %v978 = vlaneseq
        %v979 = vand.u32 %v978, 127
        %vm980 = vcmp.lt.s32.totalorder %v979, 4
        %vm981 = vcmp.le.s32.totalorder %v979, %v977
        %vm982 = vmor %vm980, %vm981
        %v983 = vsel %vm982, 1, 0
        %vm984 = vcmp.eq.s32.totalorder %v983, 1
        %v985 = vsel %vm984, %v833, -1e+30
        %v986 = vsel %vm984, %v879, -1e+30
        %v987 = vsel %vm984, %v925, -1e+30
        %v988 = vsel %vm984, %v971, -1e+30
        %v989 = vsel %vm791, %v985, -inf
        %990 = vmax.xlane.f32.xlu0 %v989
        %v991 = vpop.xlane.xlu0 %990
        %v992 = vsel %vm791, %v986, -inf
        %993 = vmax.xlane.f32.xlu0 %v992
        %v994 = vpop.xlane.xlu0 %993
        %v995 = vsel %vm791, %v987, -inf
        %996 = vmax.xlane.f32.xlu0 %v995
        %v997 = vpop.xlane.xlu0 %996
        %v998 = vsel %vm791, %v988, -inf
        %999 = vmax.xlane.f32.xlu0 %v998
        %v1000 = vpop.xlane.xlu0 %999
        %v1001 = vsub.f32 %v985, %v991
        %v1002 = vsub.f32 %v986, %v994
        %v1003 = vsub.f32 %v987, %v997
        %v1004 = vsub.f32 %v988, %v1000
        %v1005 = vmul.f32 %v1001, 1.442695
        %v1006 = vpow.pop %v1005
        %v1007 = vmul.f32 %v1002, 1.442695
        %v1008 = vpow.pop %v1007
        %v1009 = vmul.f32 %v1003, 1.442695
        %v1010 = vpow.pop %v1009
        %v1011 = vmul.f32 %v1004, 1.442695
        %v1012 = vpow.pop %v1011
        %v1013 = vsel %vm791, %v1006, 0.0
        %1014 = vadd.xlane.f32.xlu0 %v1013
        %v1015 = vpop.xlane.xlu0 %1014
        %v1016 = vsel %vm791, %v1008, 0.0
        %1017 = vadd.xlane.f32.xlu0 %v1016
        %v1018 = vpop.xlane.xlu0 %1017
        %v1019 = vsel %vm791, %v1010, 0.0
        %1020 = vadd.xlane.f32.xlu0 %v1019
        %v1021 = vpop.xlane.xlu0 %1020
        %v1022 = vsel %vm791, %v1012, 0.0
        %1023 = vadd.xlane.f32.xlu0 %v1022
        %v1024 = vpop.xlane.xlu0 %1023
        %v1025 = vrcp.pop %v1015
        %v1026 = vrcp.pop %v1018
        %v1027 = vrcp.pop %v1021
        %v1028 = vrcp.pop %v1024
        %v1029 = vmul.f32 %v1006, %v1025
        %v1030 = vmul.f32 %v1008, %v1026
        %v1031 = vmul.f32 %v1010, %v1027
        %v1032 = vmul.f32 %v1012, %v1028
        %v1033 = vpack.c.bf16 %v1029, %v1029
        %v1034 = vpack.c.bf16 %v1030, %v1030
        %v1035 = vpack.c.bf16 %v1031, %v1031
        %v1036 = vpack.c.bf16 %v1032, %v1032
        %v1038 = vsel %vm791, %v1033, 0
        %vm1040 = vcmask 1043456
        %v1041 = vsel %vm1040, %v623, 0
        %1043 = vmatprep.subr.bf16.mxu0 0
        %1044 = vmatpush1.bf16.msra.mxu0 0
        %1045 = vmatprep.subr.bf16.mxu0 0
        %1046 = vmatpush1.bf16.msra.mxu0 0
        %1047 = vmatprep.subr.bf16.mxu0 0
        %1048 = vmatpush1.bf16.msra.mxu0 0
        %1049 = vmatprep.subr.bf16.mxu0 0
        %1050 = vmatpush1.bf16.msra.mxu0 0
        %1051 = vmatprep.subr.bf16.mxu0 0
        %1052 = vmatpush1.bf16.msra.mxu0 0
        %1053 = vmatprep.subr.bf16.mxu0 0
        %1054 = vmatpush1.bf16.msra.mxu0 0
        %1055 = vmatprep.subr.bf16.mxu0 0
        %1056 = vmatpush1.bf16.msra.mxu0 0
        %1057 = vmatprep.subr.bf16.mxu0 0
        %1058 = vmatpush1.bf16.msra.mxu0 %v1041
        %1059 = vmatprep.subr.bf16.mxu0 0
        %1060 = vmatpush2.bf16.msra.mxu0 0
        %1061 = vmatprep.subr.bf16.mxu0 0
        %1062 = vmatpush2.bf16.msra.mxu0 0
        %1063 = vmatprep.subr.bf16.mxu0 0
        %1064 = vmatpush2.bf16.msra.mxu0 0
        %1065 = vmatprep.subr.bf16.mxu0 0
        %1066 = vmatpush2.bf16.msra.mxu0 0
        %1067 = vmatprep.subr.bf16.mxu0 0
        %1068 = vmatpush2.bf16.msra.mxu0 0
        %1069 = vmatprep.subr.bf16.mxu0 0
        %1070 = vmatpush2.bf16.msra.mxu0 0
        %1071 = vmatprep.subr.bf16.mxu0 0
        %1072 = vmatpush2.bf16.msra.mxu0 0
        %1073 = vmatprep.subr.bf16.mxu0 0
        %1074 = vmatpush2.bf16.msra.mxu0 0
        %1075 = vmatprep.mubr.bf16.mxu0 0
        %1076 = vmatmul.mubr.bf16.gmra.mxu0 %v1038
        %v1077 = vpop.f32.mrf.mxu0
        %v1078 = vadd.f32 0.0, %v1077
        %v1079 = vpop.f32.mrf.mxu0
        %v1080 = vpop.f32.mrf.mxu0
        %v1081 = vpop.f32.mrf.mxu0
        %1082 = vdwg.mxu0
        %v1084 = vsel %vm791, %v1034, 0
        %v1086 = vsel %vm1040, %v624, 0
        %1088 = vmatprep.subr.bf16.mxu0 0
        %1089 = vmatpush1.bf16.msra.mxu0 0
        %1090 = vmatprep.subr.bf16.mxu0 0
        %1091 = vmatpush1.bf16.msra.mxu0 0
        %1092 = vmatprep.subr.bf16.mxu0 0
        %1093 = vmatpush1.bf16.msra.mxu0 0
        %1094 = vmatprep.subr.bf16.mxu0 0
        %1095 = vmatpush1.bf16.msra.mxu0 0
        %1096 = vmatprep.subr.bf16.mxu0 0
        %1097 = vmatpush1.bf16.msra.mxu0 0
        %1098 = vmatprep.subr.bf16.mxu0 0
        %1099 = vmatpush1.bf16.msra.mxu0 0
        %1100 = vmatprep.subr.bf16.mxu0 0
        %1101 = vmatpush1.bf16.msra.mxu0 0
        %1102 = vmatprep.subr.bf16.mxu0 0
        %1103 = vmatpush1.bf16.msra.mxu0 %v1086
        %1104 = vmatprep.subr.bf16.mxu0 0
        %1105 = vmatpush2.bf16.msra.mxu0 0
        %1106 = vmatprep.subr.bf16.mxu0 0
        %1107 = vmatpush2.bf16.msra.mxu0 0
        %1108 = vmatprep.subr.bf16.mxu0 0
        %1109 = vmatpush2.bf16.msra.mxu0 0
        %1110 = vmatprep.subr.bf16.mxu0 0
        %1111 = vmatpush2.bf16.msra.mxu0 0
        %1112 = vmatprep.subr.bf16.mxu0 0
        %1113 = vmatpush2.bf16.msra.mxu0 0
        %1114 = vmatprep.subr.bf16.mxu0 0
        %1115 = vmatpush2.bf16.msra.mxu0 0
        %1116 = vmatprep.subr.bf16.mxu0 0
        %1117 = vmatpush2.bf16.msra.mxu0 0
        %1118 = vmatprep.subr.bf16.mxu0 0
        %1119 = vmatpush2.bf16.msra.mxu0 0
        %1120 = vmatprep.mubr.bf16.mxu0 0
        %1121 = vmatmul.mubr.bf16.gmra.mxu0 %v1084
        %v1122 = vpop.f32.mrf.mxu0
        %v1123 = vadd.f32 0.0, %v1122
        %v1124 = vpop.f32.mrf.mxu0
        %v1125 = vpop.f32.mrf.mxu0
        %v1126 = vpop.f32.mrf.mxu0
        %1127 = vdwg.mxu0
        %v1129 = vsel %vm791, %v1035, 0
        %v1131 = vsel %vm1040, %v625, 0
        %1133 = vmatprep.subr.bf16.mxu0 0
        %1134 = vmatpush1.bf16.msra.mxu0 0
        %1135 = vmatprep.subr.bf16.mxu0 0
        %1136 = vmatpush1.bf16.msra.mxu0 0
        %1137 = vmatprep.subr.bf16.mxu0 0
        %1138 = vmatpush1.bf16.msra.mxu0 0
        %1139 = vmatprep.subr.bf16.mxu0 0
        %1140 = vmatpush1.bf16.msra.mxu0 0
        %1141 = vmatprep.subr.bf16.mxu0 0
        %1142 = vmatpush1.bf16.msra.mxu0 0
        %1143 = vmatprep.subr.bf16.mxu0 0
        %1144 = vmatpush1.bf16.msra.mxu0 0
        %1145 = vmatprep.subr.bf16.mxu0 0
        %1146 = vmatpush1.bf16.msra.mxu0 0
        %1147 = vmatprep.subr.bf16.mxu0 0
        %1148 = vmatpush1.bf16.msra.mxu0 %v1131
        %1149 = vmatprep.subr.bf16.mxu0 0
        %1150 = vmatpush2.bf16.msra.mxu0 0
        %1151 = vmatprep.subr.bf16.mxu0 0
        %1152 = vmatpush2.bf16.msra.mxu0 0
        %1153 = vmatprep.subr.bf16.mxu0 0
        %1154 = vmatpush2.bf16.msra.mxu0 0
        %1155 = vmatprep.subr.bf16.mxu0 0
        %1156 = vmatpush2.bf16.msra.mxu0 0
        %1157 = vmatprep.subr.bf16.mxu0 0
        %1158 = vmatpush2.bf16.msra.mxu0 0
        %1159 = vmatprep.subr.bf16.mxu0 0
        %1160 = vmatpush2.bf16.msra.mxu0 0
        %1161 = vmatprep.subr.bf16.mxu0 0
        %1162 = vmatpush2.bf16.msra.mxu0 0
        %1163 = vmatprep.subr.bf16.mxu0 0
        %1164 = vmatpush2.bf16.msra.mxu0 0
        %1165 = vmatprep.mubr.bf16.mxu0 0
        %1166 = vmatmul.mubr.bf16.gmra.mxu0 %v1129
        %v1167 = vpop.f32.mrf.mxu0
        %v1168 = vadd.f32 0.0, %v1167
        %v1169 = vpop.f32.mrf.mxu0
        %v1170 = vpop.f32.mrf.mxu0
        %v1171 = vpop.f32.mrf.mxu0
        %1172 = vdwg.mxu0
        %v1174 = vsel %vm791, %v1036, 0
        %v1176 = vsel %vm1040, %v626, 0
        %1178 = vmatprep.subr.bf16.mxu0 0
        %1179 = vmatpush1.bf16.msra.mxu0 0
        %1180 = vmatprep.subr.bf16.mxu0 0
        %1181 = vmatpush1.bf16.msra.mxu0 0
        %1182 = vmatprep.subr.bf16.mxu0 0
        %1183 = vmatpush1.bf16.msra.mxu0 0
        %1184 = vmatprep.subr.bf16.mxu0 0
        %1185 = vmatpush1.bf16.msra.mxu0 0
        %1186 = vmatprep.subr.bf16.mxu0 0
        %1187 = vmatpush1.bf16.msra.mxu0 0
        %1188 = vmatprep.subr.bf16.mxu0 0
        %1189 = vmatpush1.bf16.msra.mxu0 0
        %1190 = vmatprep.subr.bf16.mxu0 0
        %1191 = vmatpush1.bf16.msra.mxu0 0
        %1192 = vmatprep.subr.bf16.mxu0 0
        %1193 = vmatpush1.bf16.msra.mxu0 %v1176
        %1194 = vmatprep.subr.bf16.mxu0 0
        %1195 = vmatpush2.bf16.msra.mxu0 0
        %1196 = vmatprep.subr.bf16.mxu0 0
        %1197 = vmatpush2.bf16.msra.mxu0 0
        %1198 = vmatprep.subr.bf16.mxu0 0
        %1199 = vmatpush2.bf16.msra.mxu0 0
        %1200 = vmatprep.subr.bf16.mxu0 0
        %1201 = vmatpush2.bf16.msra.mxu0 0
        %1202 = vmatprep.subr.bf16.mxu0 0
        %1203 = vmatpush2.bf16.msra.mxu0 0
        %1204 = vmatprep.subr.bf16.mxu0 0
        %1205 = vmatpush2.bf16.msra.mxu0 0
        %1206 = vmatprep.subr.bf16.mxu0 0
        %1207 = vmatpush2.bf16.msra.mxu0 0
        %1208 = vmatprep.subr.bf16.mxu0 0
        %1209 = vmatpush2.bf16.msra.mxu0 0
        %1210 = vmatprep.mubr.bf16.mxu0 0
        %1211 = vmatmul.mubr.bf16.gmra.mxu0 %v1174
        %v1212 = vpop.f32.mrf.mxu0
        %v1213 = vadd.f32 0.0, %v1212
        %v1214 = vpop.f32.mrf.mxu0
        %v1215 = vpop.f32.mrf.mxu0
        %v1216 = vpop.f32.mrf.mxu0
        %1217 = vdwg.mxu0
        %v1218 = vpack.c.bf16 %v1078, %v1078
        %v1219 = vpack.c.bf16 %v1123, %v1123
        %v1220 = vpack.c.bf16 %v1168, %v1168
        %v1221 = vpack.c.bf16 %v1213, %v1213
        %v1222 = vld [vmem:[%s3] sm:$0xf]
        %s1223 = scalar_lea.vmem %s3, 4
        %v1224 = vld [vmem:[%s1223] sm:$0xf]
        %v1226 = vsel %vm791, %v1219, 0
        %v1229 = vsel %vm1040, %v1224, 0
        %1231 = vmatprep.subr.bf16.mxu0 0
        %1232 = vmatpush1.bf16.msra.mxu0 0
        %1233 = vmatprep.subr.bf16.mxu0 0
        %1234 = vmatpush1.bf16.msra.mxu0 0
        %1235 = vmatprep.subr.bf16.mxu0 0
        %1236 = vmatpush1.bf16.msra.mxu0 0
        %1237 = vmatprep.subr.bf16.mxu0 0
        %1238 = vmatpush1.bf16.msra.mxu0 0
        %1239 = vmatprep.subr.bf16.mxu0 0
        %1240 = vmatpush1.bf16.msra.mxu0 0
        %1241 = vmatprep.subr.bf16.mxu0 0
        %1242 = vmatpush1.bf16.msra.mxu0 0
        %1243 = vmatprep.subr.bf16.mxu0 0
        %1244 = vmatpush1.bf16.msra.mxu0 0
        %1245 = vmatprep.subr.bf16.mxu0 0
        %1246 = vmatpush1.bf16.msra.mxu0 %v1229
        %1247 = vmatprep.subr.bf16.mxu0 0
        %1248 = vmatpush2.bf16.msra.mxu0 0
        %1249 = vmatprep.subr.bf16.mxu0 0
        %1250 = vmatpush2.bf16.msra.mxu0 0
        %1251 = vmatprep.subr.bf16.mxu0 0
        %1252 = vmatpush2.bf16.msra.mxu0 0
        %1253 = vmatprep.subr.bf16.mxu0 0
        %1254 = vmatpush2.bf16.msra.mxu0 0
        %1255 = vmatprep.subr.bf16.mxu0 0
        %1256 = vmatpush2.bf16.msra.mxu0 0
        %1257 = vmatprep.subr.bf16.mxu0 0
        %1258 = vmatpush2.bf16.msra.mxu0 0
        %1259 = vmatprep.subr.bf16.mxu0 0
        %1260 = vmatpush2.bf16.msra.mxu0 0
        %1261 = vmatprep.subr.bf16.mxu0 0
        %1262 = vmatpush2.bf16.msra.mxu0 0
        %1263 = vmatprep.mubr.bf16.mxu0 0
        %1264 = vmatmul.mubr.bf16.gmra.mxu0 %v1226
        %v1265 = vpop.f32.mrf.mxu0
        %v1266 = vadd.f32 0.0, %v1265
        %v1267 = vpop.f32.mrf.mxu0
        %v1268 = vpop.f32.mrf.mxu0
        %v1269 = vpop.f32.mrf.mxu0
        %1270 = vdwg.mxu0
        %v1272 = vsel %vm791, %v1218, 0
        %v1275 = vsel %vm1040, %v1222, 0
        %1277 = vmatprep.subr.bf16.mxu0 0
        %1278 = vmatpush1.bf16.msra.mxu0 0
        %1279 = vmatprep.subr.bf16.mxu0 0
        %1280 = vmatpush1.bf16.msra.mxu0 0
        %1281 = vmatprep.subr.bf16.mxu0 0
        %1282 = vmatpush1.bf16.msra.mxu0 0
        %1283 = vmatprep.subr.bf16.mxu0 0
        %1284 = vmatpush1.bf16.msra.mxu0 0
        %1285 = vmatprep.subr.bf16.mxu0 0
        %1286 = vmatpush1.bf16.msra.mxu0 0
        %1287 = vmatprep.subr.bf16.mxu0 0
        %1288 = vmatpush1.bf16.msra.mxu0 0
        %1289 = vmatprep.subr.bf16.mxu0 0
        %1290 = vmatpush1.bf16.msra.mxu0 0
        %1291 = vmatprep.subr.bf16.mxu0 0
        %1292 = vmatpush1.bf16.msra.mxu0 %v1275
        %1293 = vmatprep.subr.bf16.mxu0 0
        %1294 = vmatpush2.bf16.msra.mxu0 0
        %1295 = vmatprep.subr.bf16.mxu0 0
        %1296 = vmatpush2.bf16.msra.mxu0 0
        %1297 = vmatprep.subr.bf16.mxu0 0
        %1298 = vmatpush2.bf16.msra.mxu0 0
        %1299 = vmatprep.subr.bf16.mxu0 0
        %1300 = vmatpush2.bf16.msra.mxu0 0
        %1301 = vmatprep.subr.bf16.mxu0 0
        %1302 = vmatpush2.bf16.msra.mxu0 0
        %1303 = vmatprep.subr.bf16.mxu0 0
        %1304 = vmatpush2.bf16.msra.mxu0 0
        %1305 = vmatprep.subr.bf16.mxu0 0
        %1306 = vmatpush2.bf16.msra.mxu0 0
        %1307 = vmatprep.subr.bf16.mxu0 0
        %1308 = vmatpush2.bf16.msra.mxu0 0
        %1309 = vmatprep.mubr.bf16.mxu0 0
        %1310 = vmatmul.mubr.bf16.gmra.mxu0 %v1272
        %v1311 = vpop.f32.mrf.mxu0
        %v1312 = vadd.f32 %v1266, %v1311
        %v1313 = vpop.f32.mrf.mxu0
        %v1314 = vpop.f32.mrf.mxu0
        %v1315 = vpop.f32.mrf.mxu0
        %1316 = vdwg.mxu0
        %s1317 = scalar_lea.vmem %s3, 8
        %v1318 = vld [vmem:[%s1317] sm:$0xf]
        %v1320 = vsel %vm791, %v1220, 0
        %v1323 = vsel %vm1040, %v1318, 0
        %1325 = vmatprep.subr.bf16.mxu0 0
        %1326 = vmatpush1.bf16.msra.mxu0 0
        %1327 = vmatprep.subr.bf16.mxu0 0
        %1328 = vmatpush1.bf16.msra.mxu0 0
        %1329 = vmatprep.subr.bf16.mxu0 0
        %1330 = vmatpush1.bf16.msra.mxu0 0
        %1331 = vmatprep.subr.bf16.mxu0 0
        %1332 = vmatpush1.bf16.msra.mxu0 0
        %1333 = vmatprep.subr.bf16.mxu0 0
        %1334 = vmatpush1.bf16.msra.mxu0 0
        %1335 = vmatprep.subr.bf16.mxu0 0
        %1336 = vmatpush1.bf16.msra.mxu0 0
        %1337 = vmatprep.subr.bf16.mxu0 0
        %1338 = vmatpush1.bf16.msra.mxu0 0
        %1339 = vmatprep.subr.bf16.mxu0 0
        %1340 = vmatpush1.bf16.msra.mxu0 %v1323
        %1341 = vmatprep.subr.bf16.mxu0 0
        %1342 = vmatpush2.bf16.msra.mxu0 0
        %1343 = vmatprep.subr.bf16.mxu0 0
        %1344 = vmatpush2.bf16.msra.mxu0 0
        %1345 = vmatprep.subr.bf16.mxu0 0
        %1346 = vmatpush2.bf16.msra.mxu0 0
        %1347 = vmatprep.subr.bf16.mxu0 0
        %1348 = vmatpush2.bf16.msra.mxu0 0
        %1349 = vmatprep.subr.bf16.mxu0 0
        %1350 = vmatpush2.bf16.msra.mxu0 0
        %1351 = vmatprep.subr.bf16.mxu0 0
        %1352 = vmatpush2.bf16.msra.mxu0 0
        %1353 = vmatprep.subr.bf16.mxu0 0
        %1354 = vmatpush2.bf16.msra.mxu0 0
        %1355 = vmatprep.subr.bf16.mxu0 0
        %1356 = vmatpush2.bf16.msra.mxu0 0
        %1357 = vmatprep.mubr.bf16.mxu0 0
        %1358 = vmatmul.mubr.bf16.gmra.mxu0 %v1320
        %v1359 = vpop.f32.mrf.mxu0
        %v1360 = vadd.f32 0.0, %v1359
        %v1361 = vpop.f32.mrf.mxu0
        %v1362 = vpop.f32.mrf.mxu0
        %v1363 = vpop.f32.mrf.mxu0
        %1364 = vdwg.mxu0
        %v1365 = vadd.f32 %v1312, %v1360
        %s1366 = scalar_lea.vmem %s3, 12
        %v1367 = vld [vmem:[%s1366] sm:$0xf]
        %v1369 = vsel %vm791, %v1221, 0
        %v1372 = vsel %vm1040, %v1367, 0
        %1374 = vmatprep.subr.bf16.mxu0 0
        %1375 = vmatpush1.bf16.msra.mxu0 0
        %1376 = vmatprep.subr.bf16.mxu0 0
        %1377 = vmatpush1.bf16.msra.mxu0 0
        %1378 = vmatprep.subr.bf16.mxu0 0
        %1379 = vmatpush1.bf16.msra.mxu0 0
        %1380 = vmatprep.subr.bf16.mxu0 0
        %1381 = vmatpush1.bf16.msra.mxu0 0
        %1382 = vmatprep.subr.bf16.mxu0 0
        %1383 = vmatpush1.bf16.msra.mxu0 0
        %1384 = vmatprep.subr.bf16.mxu0 0
        %1385 = vmatpush1.bf16.msra.mxu0 0
        %1386 = vmatprep.subr.bf16.mxu0 0
        %1387 = vmatpush1.bf16.msra.mxu0 0
        %1388 = vmatprep.subr.bf16.mxu0 0
        %1389 = vmatpush1.bf16.msra.mxu0 %v1372
        %1390 = vmatprep.subr.bf16.mxu0 0
        %1391 = vmatpush2.bf16.msra.mxu0 0
        %1392 = vmatprep.subr.bf16.mxu0 0
        %1393 = vmatpush2.bf16.msra.mxu0 0
        %1394 = vmatprep.subr.bf16.mxu0 0
        %1395 = vmatpush2.bf16.msra.mxu0 0
        %1396 = vmatprep.subr.bf16.mxu0 0
        %1397 = vmatpush2.bf16.msra.mxu0 0
        %1398 = vmatprep.subr.bf16.mxu0 0
        %1399 = vmatpush2.bf16.msra.mxu0 0
        %1400 = vmatprep.subr.bf16.mxu0 0
        %1401 = vmatpush2.bf16.msra.mxu0 0
        %1402 = vmatprep.subr.bf16.mxu0 0
        %1403 = vmatpush2.bf16.msra.mxu0 0
        %1404 = vmatprep.subr.bf16.mxu0 0
        %1405 = vmatpush2.bf16.msra.mxu0 0
        %1406 = vmatprep.mubr.bf16.mxu0 0
        %1407 = vmatmul.mubr.bf16.gmra.mxu0 %v1369
        %v1408 = vpop.f32.mrf.mxu0
        %v1409 = vadd.f32 0.0, %v1408
        %v1410 = vpop.f32.mrf.mxu0
        %v1411 = vpop.f32.mrf.mxu0
        %v1412 = vpop.f32.mrf.mxu0
        %1413 = vdwg.mxu0
        %v1414 = vadd.f32 %v1365, %v1409
        %v1415 = vlaneseq
        %v1416 = vshrl.u32 %v1415, 7
        %v1417 = vsub.s32 0, %v1416
        %v1418 = vrot.slane %v333, %v1417
        %v1419 = vadd.f32 %v1414, %v1418
        %v1420 = vadd.f32 %v329, %v1419
        %v1421 = vsel %vm359, %v1420, 0.0
        %1422 = vadd.xlane.f32.xlu0 %v1421
        %v1423 = vpop.xlane.xlu0 %1422
        %v1424 = vrcp.pop 32.0
        %v1425 = vmul.f32 %v1423, %v1424
        %v1426 = vsub.f32 %v1420, %v1425
        %v1427 = vmul.f32 %v1426, %v1426
        %v1428 = vsel %vm359, %v1427, 0.0
        %1429 = vadd.xlane.f32.xlu0 %v1428
        %v1430 = vpop.xlane.xlu0 %1429
        %v1431 = vmul.f32 %v1430, %v1424
        %v1432 = vadd.f32 %v1431, 1e-05
        %v1433 = vrsqrt.pop %v1432
        %v1434 = vmul.f32 %v1426, %v1433
        %v1435 = vlaneseq
        %v1436 = vshrl.u32 %v1435, 7
        %v1437 = vsub.s32 0, %v1436
        %v1438 = vrot.slane %v334, %v1437
        %v1439 = vmul.f32 %v1434, %v1438
        %v1440 = vlaneseq
        %v1441 = vshrl.u32 %v1440, 7
        %v1442 = vsub.s32 0, %v1441
        %v1443 = vrot.slane %v335, %v1442
        %v1444 = vadd.f32 %v1439, %v1443
        %v1445 = vpack.c.bf16 %v1444, %v1444
        %v1446 = vld [vmem:[%s4] sm:$0xf]
        %v1447 = vld [vmem:[%s4 + $0x4] sm:$0xf]
        %v1448 = vld [vmem:[%s4 + $0x8] sm:$0xf]
        %v1449 = vld [vmem:[%s4 + $0xc] sm:$0xf]
        %v1450 = vld [vmem:[%s8] sm:$0x1]
        %v1452 = vlaneseq
        %v1453 = vshrl.u32 %v1452, 7
        %v1454 = vsub.s32 0, %v1453
        %v1455 = vrot.slane %v1450, %v1454
        %v1461 = vunpack.c.l.b16 %v1446
        %v1462 = vunpack.c.l.b16 %v1447
        %v1463 = vunpack.c.l.b16 %v1448
        %v1464 = vunpack.c.l.b16 %v1449
        %v1465 = vpack.c.b16 %v1462, %v1461
        %v1466 = vpack.c.b16 %v1464, %v1463
        %v1470 = vsel %vm359, %v1445, 0
        %1472 = vmatprep.subr.bf16.mxu0 0
        %1473 = vmatpush1.bf16.msra.mxu0 0
        %1474 = vmatprep.subr.bf16.mxu0 0
        %1475 = vmatpush1.bf16.msra.mxu0 0
        %1476 = vmatprep.subr.bf16.mxu0 0
        %1477 = vmatpush1.bf16.msra.mxu0 0
        %1478 = vmatprep.subr.bf16.mxu0 0
        %1479 = vmatpush1.bf16.msra.mxu0 0
        %1480 = vmatprep.subr.bf16.mxu0 0
        %1481 = vmatpush1.bf16.msra.mxu0 0
        %1482 = vmatprep.subr.bf16.mxu0 0
        %1483 = vmatpush1.bf16.msra.mxu0 0
        %1484 = vmatprep.subr.bf16.mxu0 0
        %1485 = vmatpush1.bf16.msra.mxu0 %v1466
        %1486 = vmatprep.subr.bf16.mxu0 0
        %1487 = vmatpush1.bf16.msra.mxu0 %v1465
        %1488 = vmatprep.subr.bf16.mxu0 0
        %1489 = vmatpush2.bf16.msra.mxu0 0
        %1490 = vmatprep.subr.bf16.mxu0 0
        %1491 = vmatpush2.bf16.msra.mxu0 0
        %1492 = vmatprep.subr.bf16.mxu0 0
        %1493 = vmatpush2.bf16.msra.mxu0 0
        %1494 = vmatprep.subr.bf16.mxu0 0
        %1495 = vmatpush2.bf16.msra.mxu0 0
        %1496 = vmatprep.subr.bf16.mxu0 0
        %1497 = vmatpush2.bf16.msra.mxu0 0
        %1498 = vmatprep.subr.bf16.mxu0 0
        %1499 = vmatpush2.bf16.msra.mxu0 0
        %1500 = vmatprep.subr.bf16.mxu0 0
        %1501 = vmatpush2.bf16.msra.mxu0 0
        %1502 = vmatprep.subr.bf16.mxu0 0
        %1503 = vmatpush2.bf16.msra.mxu0 0
        %1504 = vmatprep.mubr.bf16.mxu0 0
        %1505 = vmatmul.mubr.bf16.gmra.mxu0 %v1470
        %v1506 = vpop.f32.mrf.mxu0
        %v1507 = vadd.f32 %v1455, %v1506
        %v1508 = vpop.f32.mrf.mxu0
        %v1509 = vpop.f32.mrf.mxu0
        %v1510 = vpop.f32.mrf.mxu0
        %1511 = vdwg.mxu0
        %v1512 = vmul.f32 %v1507, 0.5
        %v1513 = vmul.f32 %v1507, 0.70710677
        %v1514 = verf.f32.pop %v1513
        %v1515 = vadd.f32 %v1514, 1.0
        %v1516 = vmul.f32 %v1512, %v1515
        %v1517 = vpack.c.bf16 %v1516, %v1516
        %v1518 = vld [vmem:[%s5] sm:$0xf]
        %v1519 = vld [vmem:[%s5 + $0x4] sm:$0xf]
        %v1520 = vld [vmem:[%s5 + $0x8] sm:$0xf]
        %v1521 = vld [vmem:[%s5 + $0xc] sm:$0xf]
        %v1522 = vld [vmem:[%s5 + $0x10] sm:$0xf]
        %v1523 = vld [vmem:[%s5 + $0x14] sm:$0xf]
        %v1524 = vld [vmem:[%s5 + $0x18] sm:$0xf]
        %v1525 = vld [vmem:[%s5 + $0x1c] sm:$0xf]
        %v1526 = vld [vmem:[%s5 + $0x20] sm:$0xf]
        %v1527 = vld [vmem:[%s5 + $0x24] sm:$0xf]
        %v1528 = vld [vmem:[%s5 + $0x28] sm:$0xf]
        %v1529 = vld [vmem:[%s5 + $0x2c] sm:$0xf]
        %v1530 = vld [vmem:[%s5 + $0x30] sm:$0xf]
        %v1531 = vld [vmem:[%s5 + $0x34] sm:$0xf]
        %v1532 = vld [vmem:[%s5 + $0x38] sm:$0xf]
        %v1533 = vld [vmem:[%s5 + $0x3c] sm:$0xf]
        %v1534 = vlaneseq
        %v1535 = vshrl.u32 %v1534, 7
        %v1536 = vsub.s32 0, %v1535
        %v1537 = vrot.slane %v336, %v1536
        %v1554 = vunpack.c.l.b16 %v1518
        %v1555 = vunpack.c.l.b16 %v1519
        %v1556 = vunpack.c.l.b16 %v1520
        %v1557 = vunpack.c.l.b16 %v1521
        %v1558 = vunpack.c.l.b16 %v1522
        %v1559 = vunpack.c.l.b16 %v1523
        %v1560 = vunpack.c.l.b16 %v1524
        %v1561 = vunpack.c.l.b16 %v1525
        %v1562 = vunpack.c.l.b16 %v1526
        %v1563 = vunpack.c.l.b16 %v1527
        %v1564 = vunpack.c.l.b16 %v1528
        %v1565 = vunpack.c.l.b16 %v1529
        %v1566 = vunpack.c.l.b16 %v1530
        %v1567 = vunpack.c.l.b16 %v1531
        %v1568 = vunpack.c.l.b16 %v1532
        %v1569 = vunpack.c.l.b16 %v1533
        %v1570 = vpack.c.b16 %v1555, %v1554
        %v1571 = vpack.c.b16 %v1557, %v1556
        %v1572 = vpack.c.b16 %v1559, %v1558
        %v1573 = vpack.c.b16 %v1561, %v1560
        %v1574 = vpack.c.b16 %v1563, %v1562
        %v1575 = vpack.c.b16 %v1565, %v1564
        %v1576 = vpack.c.b16 %v1567, %v1566
        %v1577 = vpack.c.b16 %v1569, %v1568
        %1586 = vmatprep.subr.bf16.mxu0 0
        %1587 = vmatpush1.bf16.msra.mxu0 %v1577
        %1588 = vmatprep.subr.bf16.mxu0 0
        %1589 = vmatpush1.bf16.msra.mxu0 %v1576
        %1590 = vmatprep.subr.bf16.mxu0 0
        %1591 = vmatpush1.bf16.msra.mxu0 %v1575
        %1592 = vmatprep.subr.bf16.mxu0 0
        %1593 = vmatpush1.bf16.msra.mxu0 %v1574
        %1594 = vmatprep.subr.bf16.mxu0 0
        %1595 = vmatpush1.bf16.msra.mxu0 %v1573
        %1596 = vmatprep.subr.bf16.mxu0 0
        %1597 = vmatpush1.bf16.msra.mxu0 %v1572
        %1598 = vmatprep.subr.bf16.mxu0 0
        %1599 = vmatpush1.bf16.msra.mxu0 %v1571
        %1600 = vmatprep.subr.bf16.mxu0 0
        %1601 = vmatpush1.bf16.msra.mxu0 %v1570
        %1602 = vmatprep.subr.bf16.mxu0 0
        %1603 = vmatpush2.bf16.msra.mxu0 0
        %1604 = vmatprep.subr.bf16.mxu0 0
        %1605 = vmatpush2.bf16.msra.mxu0 0
        %1606 = vmatprep.subr.bf16.mxu0 0
        %1607 = vmatpush2.bf16.msra.mxu0 0
        %1608 = vmatprep.subr.bf16.mxu0 0
        %1609 = vmatpush2.bf16.msra.mxu0 0
        %1610 = vmatprep.subr.bf16.mxu0 0
        %1611 = vmatpush2.bf16.msra.mxu0 0
        %1612 = vmatprep.subr.bf16.mxu0 0
        %1613 = vmatpush2.bf16.msra.mxu0 0
        %1614 = vmatprep.subr.bf16.mxu0 0
        %1615 = vmatpush2.bf16.msra.mxu0 0
        %1616 = vmatprep.subr.bf16.mxu0 0
        %1617 = vmatpush2.bf16.msra.mxu0 0
        %1618 = vmatprep.mubr.bf16.mxu0 0
        %1619 = vmatmul.mubr.bf16.gmra.mxu0 %v1517
        %v1620 = vpop.f32.mrf.mxu0
        %v1621 = vadd.f32 %v1537, %v1620
        %v1622 = vpop.f32.mrf.mxu0
        %v1623 = vpop.f32.mrf.mxu0
        %v1624 = vpop.f32.mrf.mxu0
        %1625 = vdwg.mxu0
        %v1626 = vadd.f32 %v1444, %v1621
        %v1627 = vsel %vm359, %v1626, 0.0
        %1628 = vadd.xlane.f32.xlu0 %v1627
        %v1629 = vpop.xlane.xlu0 %1628
        %v1630 = vmul.f32 %v1629, %v1424
        %v1631 = vsub.f32 %v1626, %v1630
        %v1632 = vmul.f32 %v1631, %v1631
        %v1633 = vsel %vm359, %v1632, 0.0
        %1634 = vadd.xlane.f32.xlu0 %v1633
        %v1635 = vpop.xlane.xlu0 %1634
        %v1636 = vmul.f32 %v1635, %v1424
        %v1637 = vadd.f32 %v1636, 1e-05
        %v1638 = vrsqrt.pop %v1637
        %v1639 = vmul.f32 %v1631, %v1638
        %v1640 = vlaneseq
        %v1641 = vshrl.u32 %v1640, 7
        %v1642 = vsub.s32 0, %v1641
        %v1643 = vrot.slane %v337, %v1642
        %v1644 = vmul.f32 %v1639, %v1643
        %v1645 = vlaneseq
        %v1646 = vshrl.u32 %v1645, 7
        %v1647 = vsub.s32 0, %v1646
        %v1648 = vrot.slane %v338, %v1647
        %v1649 = vadd.f32 %v1644, %v1648
        %1650 = vst.msk [vmem:[%s323] sm:$0xff] %vm359, %v1649
        %s1651 = sand.u32 %s225, 1
        %s1652 = scalar_lea.sflag [#allocation3], %s1651
        %s1653 = sand.u32 %s225, 1
        %s1654 = smul.addr %s1653, 8
        %s1655 = scalar_lea.vmem [#allocation2], %s1654
        // Predicated region
        $region57: #{tpu_custom_call.1} parent=55 // pred_check
          %p1656 = pneg %p235
        $region58: #{tpu_custom_call.1} parent=55 // pred_check_branch
          %1658 = sbr.rel (%p1656) target = $region60
        $region59: #{tpu_custom_call.1} parent=55 // pred_region
          %s1660 = ssub.s32 128, 128
          %1661 = vsyncadd %s1652, %s1660
          %s1662 = smul.addr %s23, 128
          %s1663 = scalar_lea.hbm %s9, %s1662
          %s1665 = sshll.u32 %s1655, 4
          %s1666 = int_to_ptr.vmem [resolvable:$true] %s1665
          %1668 = dma.vmem_to_hbm [thread:$0]  %s1666, 128, %s1663, %s1652
        $region60: #{tpu_custom_call.1} parent=55 // pred_fallthru
          _
      $region56: #{tpu_custom_call.1} parent=5 // pred_fallthru
        _
      %p1669 = scmp.le.s32.totalorder 2, %s18
      // Predicated region
      $region61: #{tpu_custom_call.1} parent=5 // pred_check
        %p1670 = pneg %p1669
      $region62: #{tpu_custom_call.1} parent=5 // pred_check_branch
        %1672 = sbr.rel (%p1670) target = $region64
      $region63: #{tpu_custom_call.1} parent=5 // pred_region
        %s1673 = ssub.s32 %s18, 2
        // Predicated region
        $region65: #{tpu_custom_call.1} parent=63 // pred_check
          %p1674 = pneg %p241
        $region66: #{tpu_custom_call.1} parent=63 // pred_check_branch
          %1676 = sbr.rel (%p1674) target = $region68
        $region67: #{tpu_custom_call.1} parent=63 // pred_region
          %s1677 = sand.u32 %s226, 1
          %s1678 = scalar_lea.sflag [#allocation3], %s1677
          %s1679 = sand.u32 %s226, 1
          %s1680 = smul.addr %s1679, 8
          %s1681 = scalar_lea.vmem [#allocation2], %s1680
          %1682 = dma.done %s1678, 128
        $region68: #{tpu_custom_call.1} parent=63 // pred_fallthru
          _
      $region64: #{tpu_custom_call.1} parent=5 // pred_fallthru
        _
    $region6: #{tpu_custom_call.1} parent=1 // loop_footer
      %s22 = sadd.s32 1, %s18
    $region7: #{tpu_custom_call.1} parent=1 // loop_footer_branch
      %17 = sbr.rel target = $region3
    $region8: #{tpu_custom_call.1} parent=1 // loop_exit
      _
    %1683 = vsyncpa [#allocation3], 1
    %s1684 = scalar_lea.sflag [#allocation3], 1
    %1685 = vsyncpa %s1684, 1

// kernel: tpu_custom_call.1
$region0: #{tpu_custom_call.1}
  #allocation0 [shape = 'u32[]', space=smem, size = 0x4, offset = 0x4, fixed_abs, tag = 'smem constant byte address 0x4 - core index']
  #allocation1 [shape = 'u32[144,128]{1,0:T(1,128)}', space=vmem, size = 0x12000, scoped, tag = 'internal scratch']
  %s0 = inlined_call_operand.vmem [shape: f32[16,32], index: 0, kind: input, shape index: {}]
  %s1 = inlined_call_operand.vmem [shape: bf16[32,32], index: 1, kind: input, shape index: {}]
  %s2 = inlined_call_operand.vmem [shape: bf16[32,32], index: 2, kind: input, shape index: {}]
  %s3 = inlined_call_operand.vmem [shape: bf16[4,8,32], index: 3, kind: input, shape index: {}]
  %s4 = inlined_call_operand.vmem [shape: bf16[32,128], index: 4, kind: input, shape index: {}]
  %s5 = inlined_call_operand.vmem [shape: bf16[128,32], index: 5, kind: input, shape index: {}]
  %s6 = inlined_call_operand.vmem [shape: f32[2,32], index: 6, kind: input, shape index: {}]
  %s7 = inlined_call_operand.vmem [shape: f32[6,32], index: 7, kind: input, shape index: {}]
  %s8 = inlined_call_operand.vmem [shape: f32[1,128], index: 8, kind: input, shape index: {}]
  %s9 = inlined_call_operand.hbm [shape: f32[16,32], index: 9, kind: output, shape index: {}]
  %s10 = sld [smem:[#allocation0]]
  $region69: #{tpu_custom_call.1} parent=0
    _
  %s12 = ssub.s32 1, %s10
  %s13 = scalar_select 0, %s12, %s10
  $region1: #{tpu_custom_call.1} parent=0
    #allocation2 [shape = 'u8[8192]{0}', space=vmem, size = 0x2000, scoped, tag = 'output window, operand 0']
    #allocation3 [shape = 's32[2]{0}', space=sflag, size = 0x8, scoped, tag = 'scoped memory for tpu_custom_call.1']
    %14 = vsyncpa [#allocation3], 0
    %s15 = scalar_lea.sflag [#allocation3], 1
    %16 = vsyncpa %s15, 0
    loop: start=0, step=1, limit=4
    $region2: #{tpu_custom_call.1} parent=1 // loop_pre_header
      _
    $region3: #{tpu_custom_call.1} parent=1 // loop_header
      %s18 = sphi 0, %s22
      %p19 = scmp.ge.s32.totalorder %s18, 4
      %s28 = sphi 0, %s30
      %s31 = sphi 0, %s28
      %s32 = sphi 0, %s31
      %s48 = sphi 0, %s32
      %s52 = sphi 0, %s52
      %s54 = sphi 0, %s52
      %s55 = sphi 0, %s54
      %s69 = sphi 0, %s55
      %s73 = sphi 0, %s73
      %s75 = sphi 0, %s73
      %s76 = sphi 0, %s75
      %s90 = sphi 0, %s76
      %s94 = sphi 0, %s94
      %s96 = sphi 0, %s94
      %s97 = sphi 0, %s96
      %s111 = sphi 0, %s97
      %s115 = sphi 0, %s115
      %s117 = sphi 0, %s115
      %s118 = sphi 0, %s117
      %s132 = sphi 0, %s118
      %s136 = sphi 0, %s136
      %s138 = sphi 0, %s136
      %s139 = sphi 0, %s138
      %s153 = sphi 0, %s139
      %s157 = sphi 0, %s157
      %s159 = sphi 0, %s157
      %s160 = sphi 0, %s159
      %s174 = sphi 0, %s160
      %s178 = sphi 0, %s178
      %s180 = sphi 0, %s178
      %s181 = sphi 0, %s180
      %s195 = sphi 0, %s181
      %s199 = sphi 0, %s199
      %s201 = sphi 0, %s199
      %s202 = sphi 0, %s201
      %s216 = sphi 0, %s202
      %s222 = sphi 0, %s224
      %s225 = sphi 0, %s222
      %s226 = sphi 0, %s225
      %s242 = sphi 0, %s226
    $region4: #{tpu_custom_call.1} parent=1 // loop_header_branch
      %21 = sbr.rel (%p19) target = $region8
    $region5: #{tpu_custom_call.1} parent=1 // loop_body
      %s23 = ssub.s32 %s18, 1
      %s24 = ssub.s32 %s18, 2
      %s25 = sadd.s32 %s18, 1
      %s26 = ssub.s32 %s18, %s25
      %p27 = scmp.eq.s32.totalorder %s26, 0
      %s29 = sadd.s32 %s28, 1
      %s30 = scalar_select %p27, %s28, %s29
      %p33 = pneg %p27
      %p34 = scmp.eq.s32.totalorder %s18, 1
      %p35 = por %p33, %p34
      %p36 = scmp.ne.s32.totalorder %s28, %s31
      %p37 = scmp.eq.s32.totalorder %s18, 0
      %p38 = por %p36, %p37
      %p39 = scmp.ne.s32.totalorder %s28, %s31
      %p40 = scmp.eq.s32.totalorder %s23, 1
      %p41 = por %p39, %p40
      %p42 = scmp.ne.s32.totalorder %s31, %s32
      %p43 = scmp.eq.s32.totalorder %s23, 0
      %p44 = por %p42, %p43
      %p45 = scmp.ne.s32.totalorder %s31, %s32
      %p46 = scmp.eq.s32.totalorder %s24, 1
      %p47 = por %p45, %p46
      %p49 = scmp.ne.s32.totalorder %s32, %s48
      %p50 = scmp.eq.s32.totalorder %s24, 0
      %p51 = por %p49, %p50
      %s53 = sadd.s32 %s52, 1
      %p56 = scmp.eq.s32.totalorder %s18, 1
      %p57 = scmp.ne.s32.totalorder %s52, %s54
      %p58 = scmp.eq.s32.totalorder %s18, 0
      %p59 = por %p57, %p58
      %p60 = scmp.ne.s32.totalorder %s52, %s54
      %p61 = scmp.eq.s32.totalorder %s23, 1
      %p62 = por %p60, %p61
      %p63 = scmp.ne.s32.totalorder %s54, %s55
      %p64 = scmp.eq.s32.totalorder %s23, 0
      %p65 = por %p63, %p64
      %p66 = scmp.ne.s32.totalorder %s54, %s55
      %p67 = scmp.eq.s32.totalorder %s24, 1
      %p68 = por %p66, %p67
      %p70 = scmp.ne.s32.totalorder %s55, %s69
      %p71 = scmp.eq.s32.totalorder %s24, 0
      %p72 = por %p70, %p71
      %s74 = sadd.s32 %s73, 1
      %p77 = scmp.eq.s32.totalorder %s18, 1
      %p78 = scmp.ne.s32.totalorder %s73, %s75
      %p79 = scmp.eq.s32.totalorder %s18, 0
      %p80 = por %p78, %p79
      %p81 = scmp.ne.s32.totalorder %s73, %s75
      %p82 = scmp.eq.s32.totalorder %s23, 1
      %p83 = por %p81, %p82
      %p84 = scmp.ne.s32.totalorder %s75, %s76
      %p85 = scmp.eq.s32.totalorder %s23, 0
      %p86 = por %p84, %p85
      %p87 = scmp.ne.s32.totalorder %s75, %s76
      %p88 = scmp.eq.s32.totalorder %s24, 1
      %p89 = por %p87, %p88
      %p91 = scmp.ne.s32.totalorder %s76, %s90
      %p92 = scmp.eq.s32.totalorder %s24, 0
      %p93 = por %p91, %p92
      %s95 = sadd.s32 %s94, 1
      %p98 = scmp.eq.s32.totalorder %s18, 1
      %p99 = scmp.ne.s32.totalorder %s94, %s96
      %p100 = scmp.eq.s32.totalorder %s18, 0
      %p101 = por %p99, %p100
      %p102 = scmp.ne.s32.totalorder %s94, %s96
      %p103 = scmp.eq.s32.totalorder %s23, 1
      %p104 = por %p102, %p103
      %p105 = scmp.ne.s32.totalorder %s96, %s97
      %p106 = scmp.eq.s32.totalorder %s23, 0
      %p107 = por %p105, %p106
      %p108 = scmp.ne.s32.totalorder %s96, %s97
      %p109 = scmp.eq.s32.totalorder %s24, 1
      %p110 = por %p108, %p109
      %p112 = scmp.ne.s32.totalorder %s97, %s111
      %p113 = scmp.eq.s32.totalorder %s24, 0
      %p114 = por %p112, %p113
      %s116 = sadd.s32 %s115, 1
      %p119 = scmp.eq.s32.totalorder %s18, 1
      %p120 = scmp.ne.s32.totalorder %s115, %s117
      %p121 = scmp.eq.s32.totalorder %s18, 0
      %p122 = por %p120, %p121
      %p123 = scmp.ne.s32.totalorder %s115, %s117
      %p124 = scmp.eq.s32.totalorder %s23, 1
      %p125 = por %p123, %p124
      %p126 = scmp.ne.s32.totalorder %s117, %s118
      %p127 = scmp.eq.s32.totalorder %s23, 0
      %p128 = por %p126, %p127
      %p129 = scmp.ne.s32.totalorder %s117, %s118
      %p130 = scmp.eq.s32.totalorder %s24, 1
      %p131 = por %p129, %p130
      %p133 = scmp.ne.s32.totalorder %s118, %s132
      %p134 = scmp.eq.s32.totalorder %s24, 0
      %p135 = por %p133, %p134
      %s137 = sadd.s32 %s136, 1
      %p140 = scmp.eq.s32.totalorder %s18, 1
      %p141 = scmp.ne.s32.totalorder %s136, %s138
      %p142 = scmp.eq.s32.totalorder %s18, 0
      %p143 = por %p141, %p142
      %p144 = scmp.ne.s32.totalorder %s136, %s138
      %p145 = scmp.eq.s32.totalorder %s23, 1
      %p146 = por %p144, %p145
      %p147 = scmp.ne.s32.totalorder %s138, %s139
      %p148 = scmp.eq.s32.totalorder %s23, 0
      %p149 = por %p147, %p148
      %p150 = scmp.ne.s32.totalorder %s138, %s139
      %p151 = scmp.eq.s32.totalorder %s24, 1
      %p152 = por %p150, %p151
      %p154 = scmp.ne.s32.totalorder %s139, %s153
      %p155 = scmp.eq.s32.totalorder %s24, 0
      %p156 = por %p154, %p155
      %s158 = sadd.s32 %s157, 1
      %p161 = scmp.eq.s32.totalorder %s18, 1
      %p162 = scmp.ne.s32.totalorder %s157, %s159
      %p163 = scmp.eq.s32.totalorder %s18, 0
      %p164 = por %p162, %p163
      %p165 = scmp.ne.s32.totalorder %s157, %s159
      %p166 = scmp.eq.s32.totalorder %s23, 1
      %p167 = por %p165, %p166
      %p168 = scmp.ne.s32.totalorder %s159, %s160
      %p169 = scmp.eq.s32.totalorder %s23, 0
      %p170 = por %p168, %p169
      %p171 = scmp.ne.s32.totalorder %s159, %s160
      %p172 = scmp.eq.s32.totalorder %s24, 1
      %p173 = por %p171, %p172
      %p175 = scmp.ne.s32.totalorder %s160, %s174
      %p176 = scmp.eq.s32.totalorder %s24, 0
      %p177 = por %p175, %p176
      %s179 = sadd.s32 %s178, 1
      %p182 = scmp.eq.s32.totalorder %s18, 1
      %p183 = scmp.ne.s32.totalorder %s178, %s180
      %p184 = scmp.eq.s32.totalorder %s18, 0
      %p185 = por %p183, %p184
      %p186 = scmp.ne.s32.totalorder %s178, %s180
      %p187 = scmp.eq.s32.totalorder %s23, 1
      %p188 = por %p186, %p187
      %p189 = scmp.ne.s32.totalorder %s180, %s181
      %p190 = scmp.eq.s32.totalorder %s23, 0
      %p191 = por %p189, %p190
      %p192 = scmp.ne.s32.totalorder %s180, %s181
      %p193 = scmp.eq.s32.totalorder %s24, 1
      %p194 = por %p192, %p193
      %p196 = scmp.ne.s32.totalorder %s181, %s195
      %p197 = scmp.eq.s32.totalorder %s24, 0
      %p198 = por %p196, %p197
      %s200 = sadd.s32 %s199, 1
      %p203 = scmp.eq.s32.totalorder %s18, 1
      %p204 = scmp.ne.s32.totalorder %s199, %s201
      %p205 = scmp.eq.s32.totalorder %s18, 0
      %p206 = por %p204, %p205
      %p207 = scmp.ne.s32.totalorder %s199, %s201
      %p208 = scmp.eq.s32.totalorder %s23, 1
      %p209 = por %p207, %p208
      %p210 = scmp.ne.s32.totalorder %s201, %s202
      %p211 = scmp.eq.s32.totalorder %s23, 0
      %p212 = por %p210, %p211
      %p213 = scmp.ne.s32.totalorder %s201, %s202
      %p214 = scmp.eq.s32.totalorder %s24, 1
      %p215 = por %p213, %p214
      %p217 = scmp.ne.s32.totalorder %s202, %s216
      %p218 = scmp.eq.s32.totalorder %s24, 0
      %p219 = por %p217, %p218
      %s220 = ssub.s32 %s18, %s25
      %p221 = scmp.eq.s32.totalorder %s220, 0
      %s223 = sadd.s32 %s222, 1
      %s224 = scalar_select %p221, %s222, %s223
      %p227 = pneg %p221
      %p228 = scmp.eq.s32.totalorder %s18, 1
      %p229 = por %p227, %p228
      %p230 = scmp.ne.s32.totalorder %s222, %s225
      %p231 = scmp.eq.s32.totalorder %s18, 0
      %p232 = por %p230, %p231
      %p233 = scmp.ne.s32.totalorder %s222, %s225
      %p234 = scmp.eq.s32.totalorder %s23, 1
      %p235 = por %p233, %p234
      %p236 = scmp.ne.s32.totalorder %s225, %s226
      %p237 = scmp.eq.s32.totalorder %s23, 0
      %p238 = por %p236, %p237
      %p239 = scmp.ne.s32.totalorder %s225, %s226
      %p240 = scmp.eq.s32.totalorder %s24, 1
      %p241 = por %p239, %p240
      %p243 = scmp.ne.s32.totalorder %s226, %s242
      %p244 = scmp.eq.s32.totalorder %s24, 0
      %p245 = por %p243, %p244
      %p246 = scmp.le.s32.totalorder 1, %s18
      %p247 = scmp.lt.s32.totalorder %s18, 3
      %p248 = pnand %p246, %p247
      %p249 = pneg %p248
      // Predicated region
      $region9: #{tpu_custom_call.1} parent=5 // pred_check
        _
      $region10: #{tpu_custom_call.1} parent=5 // pred_check_branch
        %251 = sbr.rel (%p248) target = $region12
      $region11: #{tpu_custom_call.1} parent=5 // pred_region
        %s252 = ssub.s32 %s18, 1
        // Predicated region
        $region13: #{tpu_custom_call.1} parent=11 // pred_check
          %p253 = pneg %p65
        $region14: #{tpu_custom_call.1} parent=11 // pred_check_branch
          %255 = sbr.rel (%p253) target = $region16
        $region15: #{tpu_custom_call.1} parent=11 // pred_region
          _
        $region16: #{tpu_custom_call.1} parent=11 // pred_fallthru
          _
        // Predicated region
        $region17: #{tpu_custom_call.1} parent=11 // pred_check
          %p256 = pneg %p86
        $region18: #{tpu_custom_call.1} parent=11 // pred_check_branch
          %258 = sbr.rel (%p256) target = $region20
        $region19: #{tpu_custom_call.1} parent=11 // pred_region
          _
        $region20: #{tpu_custom_call.1} parent=11 // pred_fallthru
          _
        // Predicated region
        $region21: #{tpu_custom_call.1} parent=11 // pred_check
          %p259 = pneg %p107
        $region22: #{tpu_custom_call.1} parent=11 // pred_check_branch
          %261 = sbr.rel (%p259) target = $region24
        $region23: #{tpu_custom_call.1} parent=11 // pred_region
          _
        $region24: #{tpu_custom_call.1} parent=11 // pred_fallthru
          _
        // Predicated region
        $region25: #{tpu_custom_call.1} parent=11 // pred_check
          %p262 = pneg %p128
        $region26: #{tpu_custom_call.1} parent=11 // pred_check_branch
          %264 = sbr.rel (%p262) target = $region28
        $region27: #{tpu_custom_call.1} parent=11 // pred_region
          _
        $region28: #{tpu_custom_call.1} parent=11 // pred_fallthru
          _
        // Predicated region
        $region29: #{tpu_custom_call.1} parent=11 // pred_check
          %p265 = pneg %p149
        $region30: #{tpu_custom_call.1} parent=11 // pred_check_branch
          %267 = sbr.rel (%p265) target = $region32
        $region31: #{tpu_custom_call.1} parent=11 // pred_region
          _
        $region32: #{tpu_custom_call.1} parent=11 // pred_fallthru
          _
        // Predicated region
        $region33: #{tpu_custom_call.1} parent=11 // pred_check
          %p268 = pneg %p170
        $region34: #{tpu_custom_call.1} parent=11 // pred_check_branch
          %270 = sbr.rel (%p268) target = $region36
        $region35: #{tpu_custom_call.1} parent=11 // pred_region
          _
        $region36: #{tpu_custom_call.1} parent=11 // pred_fallthru
          _
        // Predicated region
        $region37: #{tpu_custom_call.1} parent=11 // pred_check
          %p271 = pneg %p191
        $region38: #{tpu_custom_call.1} parent=11 // pred_check_branch
          %273 = sbr.rel (%p271) target = $region40
        $region39: #{tpu_custom_call.1} parent=11 // pred_region
          _
        $region40: #{tpu_custom_call.1} parent=11 // pred_fallthru
          _
        // Predicated region
        $region41: #{tpu_custom_call.1} parent=11 // pred_check
          %p274 = pneg %p212
        $region42: #{tpu_custom_call.1} parent=11 // pred_check_branch
          %276 = sbr.rel (%p274) target = $region44
        $region43: #{tpu_custom_call.1} parent=11 // pred_region
          _
        $region44: #{tpu_custom_call.1} parent=11 // pred_fallthru
          _
      $region12: #{tpu_custom_call.1} parent=5 // pred_fallthru
        _
      %p277 = scmp.lt.s32.totalorder %s18, 2
      // Predicated region
      $region45: #{tpu_custom_call.1} parent=5 // pred_check
        %p278 = pneg %p277
      $region46: #{tpu_custom_call.1} parent=5 // pred_check_branch
        %280 = sbr.rel (%p278) target = $region48
      $region47: #{tpu_custom_call.1} parent=5 // pred_region
        // Predicated region
        $region49: #{tpu_custom_call.1} parent=47 // pred_check
          %p281 = pneg %p38
        $region50: #{tpu_custom_call.1} parent=47 // pred_check_branch
          %283 = sbr.rel (%p281) target = $region52
        $region51: #{tpu_custom_call.1} parent=47 // pred_region
          %p284 = scmp.lt.s32.totalorder %s18, 1
          %s285 = scalar_select %p284, %s18, 1
          %s286 = smul.addr %s285, 8
          %s287 = scalar_lea.vmem %s0, %s286
        $region52: #{tpu_custom_call.1} parent=47 // pred_fallthru
          _
      $region48: #{tpu_custom_call.1} parent=5 // pred_fallthru
        _
      %p288 = scmp.le.s32.totalorder 1, %s18
      %p289 = scmp.lt.s32.totalorder %s18, 3
      %p290 = pnand %p288, %p289
      %p291 = pneg %p290
      // Predicated region
      $region53: #{tpu_custom_call.1} parent=5 // pred_check
        _
      $region54: #{tpu_custom_call.1} parent=5 // pred_check_branch
        %293 = sbr.rel (%p290) target = $region56
      $region55: #{tpu_custom_call.1} parent=5 // pred_region
        %s294 = ssub.s32 %s18, 1
        %p295 = scmp.lt.s32.totalorder %s23, 1
        %s296 = scalar_select %p295, %s23, 1
        %s297 = smul.addr %s296, 8
        %s298 = scalar_lea.vmem %s0, %s297
        %p299 = pneg %p44
        %p300 = pneg %p41
        %p301 = pneg %p65
        %p302 = pneg %p62
        %p303 = pneg %p86
        %p304 = pneg %p83
        %p305 = pneg %p107
        %p306 = pneg %p104
        %p307 = pneg %p128
        %p308 = pneg %p125
        %p309 = pneg %p149
        %p310 = pneg %p146
        %p311 = pneg %p170
        %p312 = pneg %p167
        %p313 = pneg %p191
        %p314 = pneg %p188
        %p315 = pneg %p212
        %p316 = pneg %p209
        %p317 = pneg %p238
        %p318 = pneg %p235
        %s319 = sand.u32 %s225, 1
        %s320 = scalar_lea.sflag [#allocation3], %s319
        %s321 = sand.u32 %s225, 1
        %s322 = smul.addr %s321, 8
        %s323 = scalar_lea.vmem [#allocation2], %s322
        %p324 = scmp.lt.s32.totalorder %s23, 1
        %s325 = scalar_select %p324, %s23, 1
        %s326 = smul.addr %s325, 8
        %s327 = scalar_lea.vmem %s0, %s326
        %v329 = vld [vmem:[%s327] sm:$0xff]
        %v330 = vpack.c.bf16 %v329, %v329
        %v331 = vld [vmem:[%s6] sm:$0x1]
        %v332 = vld [vmem:[%s6 + $0x1] sm:$0x1]
        %v333 = vld [vmem:[%s7] sm:$0x1]
        %v334 = vld [vmem:[%s7 + $0x1] sm:$0x1]
        %v335 = vld [vmem:[%s7 + $0x2] sm:$0x1]
        %v336 = vld [vmem:[%s7 + $0x3] sm:$0x1]
        %v337 = vld [vmem:[%s7 + $0x4] sm:$0x1]
        %v338 = vld [vmem:[%s7 + $0x5] sm:$0x1]
        %v339 = vld [vmem:[%s1] sm:$0xf]
        %v340 = vld [vmem:[%s1 + $0x4] sm:$0xf]
        %v341 = vld [vmem:[%s1 + $0x8] sm:$0xf]
        %v342 = vld [vmem:[%s1 + $0xc] sm:$0xf]
        %v343 = vlaneseq
        %v344 = vshrl.u32 %v343, 7
        %v345 = vsub.s32 0, %v344
        %v346 = vrot.slane %v331, %v345
        %v351 = vunpack.c.l.b16 %v339
        %v352 = vunpack.c.l.b16 %v340
        %v353 = vunpack.c.l.b16 %v341
        %v354 = vunpack.c.l.b16 %v342
        %v355 = vpack.c.b16 %v352, %v351
        %v356 = vpack.c.b16 %v354, %v353
        %vm359 = vcmask 261120
        %v361 = vsel %vm359, %v330, 0
        %363 = vmatprep.subr.bf16.mxu0 0
        %364 = vmatpush1.bf16.msra.mxu0 0
        %365 = vmatprep.subr.bf16.mxu0 0
        %366 = vmatpush1.bf16.msra.mxu0 0
        %367 = vmatprep.subr.bf16.mxu0 0
        %368 = vmatpush1.bf16.msra.mxu0 0
        %369 = vmatprep.subr.bf16.mxu0 0
        %370 = vmatpush1.bf16.msra.mxu0 0
        %371 = vmatprep.subr.bf16.mxu0 0
        %372 = vmatpush1.bf16.msra.mxu0 0
        %373 = vmatprep.subr.bf16.mxu0 0
        %374 = vmatpush1.bf16.msra.mxu0 0
        %375 = vmatprep.subr.bf16.mxu0 0
        %376 = vmatpush1.bf16.msra.mxu0 %v356
        %377 = vmatprep.subr.bf16.mxu0 0
        %378 = vmatpush1.bf16.msra.mxu0 %v355
        %379 = vmatprep.subr.bf16.mxu0 0
        %380 = vmatpush2.bf16.msra.mxu0 0
        %381 = vmatprep.subr.bf16.mxu0 0
        %382 = vmatpush2.bf16.msra.mxu0 0
        %383 = vmatprep.subr.bf16.mxu0 0
        %384 = vmatpush2.bf16.msra.mxu0 0
        %385 = vmatprep.subr.bf16.mxu0 0
        %386 = vmatpush2.bf16.msra.mxu0 0
        %387 = vmatprep.subr.bf16.mxu0 0
        %388 = vmatpush2.bf16.msra.mxu0 0
        %389 = vmatprep.subr.bf16.mxu0 0
        %390 = vmatpush2.bf16.msra.mxu0 0
        %391 = vmatprep.subr.bf16.mxu0 0
        %392 = vmatpush2.bf16.msra.mxu0 0
        %393 = vmatprep.subr.bf16.mxu0 0
        %394 = vmatpush2.bf16.msra.mxu0 0
        %395 = vmatprep.mubr.bf16.mxu0 0
        %396 = vmatmul.mubr.bf16.gmra.mxu0 %v361
        %v397 = vpop.f32.mrf.mxu0
        %v398 = vadd.f32 %v346, %v397
        %v399 = vpop.f32.mrf.mxu0
        %v400 = vpop.f32.mrf.mxu0
        %v401 = vpop.f32.mrf.mxu0
        %402 = vdwg.mxu0
        %v403 = vld [vmem:[%s2] sm:$0xf]
        %v404 = vld [vmem:[%s2 + $0x4] sm:$0xf]
        %v405 = vld [vmem:[%s2 + $0x8] sm:$0xf]
        %v406 = vld [vmem:[%s2 + $0xc] sm:$0xf]
        %v407 = vlaneseq
        %v408 = vshrl.u32 %v407, 7
        %v409 = vsub.s32 0, %v408
        %v410 = vrot.slane %v332, %v409
        %v415 = vunpack.c.l.b16 %v403
        %v416 = vunpack.c.l.b16 %v404
        %v417 = vunpack.c.l.b16 %v405
        %v418 = vunpack.c.l.b16 %v406
        %v419 = vpack.c.b16 %v416, %v415
        %v420 = vpack.c.b16 %v418, %v417
        %423 = vmatprep.subr.bf16.mxu0 0
        %424 = vmatpush1.bf16.msra.mxu0 0
        %425 = vmatprep.subr.bf16.mxu0 0
        %426 = vmatpush1.bf16.msra.mxu0 0
        %427 = vmatprep.subr.bf16.mxu0 0
        %428 = vmatpush1.bf16.msra.mxu0 0
        %429 = vmatprep.subr.bf16.mxu0 0
        %430 = vmatpush1.bf16.msra.mxu0 0
        %431 = vmatprep.subr.bf16.mxu0 0
        %432 = vmatpush1.bf16.msra.mxu0 0
        %433 = vmatprep.subr.bf16.mxu0 0
        %434 = vmatpush1.bf16.msra.mxu0 0
        %435 = vmatprep.subr.bf16.mxu0 0
        %436 = vmatpush1.bf16.msra.mxu0 %v420
        %437 = vmatprep.subr.bf16.mxu0 0
        %438 = vmatpush1.bf16.msra.mxu0 %v419
        %439 = vmatprep.subr.bf16.mxu0 0
        %440 = vmatpush2.bf16.msra.mxu0 0
        %441 = vmatprep.subr.bf16.mxu0 0
        %442 = vmatpush2.bf16.msra.mxu0 0
        %443 = vmatprep.subr.bf16.mxu0 0
        %444 = vmatpush2.bf16.msra.mxu0 0
        %445 = vmatprep.subr.bf16.mxu0 0
        %446 = vmatpush2.bf16.msra.mxu0 0
        %447 = vmatprep.subr.bf16.mxu0 0
        %448 = vmatpush2.bf16.msra.mxu0 0
        %449 = vmatprep.subr.bf16.mxu0 0
        %450 = vmatpush2.bf16.msra.mxu0 0
        %451 = vmatprep.subr.bf16.mxu0 0
        %452 = vmatpush2.bf16.msra.mxu0 0
        %453 = vmatprep.subr.bf16.mxu0 0
        %454 = vmatpush2.bf16.msra.mxu0 0
        %455 = vmatprep.mubr.bf16.mxu0 0
        %456 = vmatmul.mubr.bf16.gmra.mxu0 %v361
        %v457 = vpop.f32.mrf.mxu0
        %v458 = vadd.f32 %v410, %v457
        %v459 = vpop.f32.mrf.mxu0
        %v460 = vpop.f32.mrf.mxu0
        %v461 = vpop.f32.mrf.mxu0
        %462 = vdwg.mxu0
        %463 = vxpose.xlu0.b32.start [1/16] %v398, 128
        %464 = vxpose.xlu0.b32.cont [2/16] 0.0, 128
        %465 = vxpose.xlu0.b32.cont [3/16] 0.0, 128
        %466 = vxpose.xlu0.b32.cont [4/16] 0.0, 128
        %467 = vxpose.xlu0.b32.cont [5/16] 0.0, 128
        %468 = vxpose.xlu0.b32.cont [6/16] 0.0, 128
        %469 = vxpose.xlu0.b32.cont [7/16] 0.0, 128
        %470 = vxpose.xlu0.b32.cont [8/16] 0.0, 128
        %471 = vxpose.xlu0.b32.cont [9/16] 0.0, 128
        %472 = vxpose.xlu0.b32.cont [10/16] 0.0, 128
        %473 = vxpose.xlu0.b32.cont [11/16] 0.0, 128
        %474 = vxpose.xlu0.b32.cont [12/16] 0.0, 128
        %475 = vxpose.xlu0.b32.cont [13/16] 0.0, 128
        %476 = vxpose.xlu0.b32.cont [14/16] 0.0, 128
        %477 = vxpose.xlu0.b32.cont [15/16] 0.0, 128
        %478 = vxpose.xlu0.b32.end [16/16] 0.0, 128
        %v479 = vpop.trf.xlu0
        %v480 = vpop.trf.xlu0
        %v481 = vpop.trf.xlu0
        %v482 = vpop.trf.xlu0
        %v483 = vpop.trf.xlu0
        %v484 = vpop.trf.xlu0
        %v485 = vpop.trf.xlu0
        %v486 = vpop.trf.xlu0
        %v487 = vpop.trf.xlu0
        %v488 = vpop.trf.xlu0
        %v489 = vpop.trf.xlu0
        %v490 = vpop.trf.xlu0
        %v491 = vpop.trf.xlu0
        %v492 = vpop.trf.xlu0
        %v493 = vpop.trf.xlu0
        %v494 = vpop.trf.xlu0
        %495 = vxpose.xlu0.b32.start [1/16] %v479, 128
        %496 = vxpose.xlu0.b32.cont [2/16] 0.0, 128
        %497 = vxpose.xlu0.b32.cont [3/16] 0.0, 128
        %498 = vxpose.xlu0.b32.cont [4/16] 0.0, 128
        %499 = vxpose.xlu0.b32.cont [5/16] 0.0, 128
        %500 = vxpose.xlu0.b32.cont [6/16] 0.0, 128
        %501 = vxpose.xlu0.b32.cont [7/16] 0.0, 128
        %502 = vxpose.xlu0.b32.cont [8/16] 0.0, 128
        %503 = vxpose.xlu0.b32.cont [9/16] 0.0, 128
        %504 = vxpose.xlu0.b32.cont [10/16] 0.0, 128
        %505 = vxpose.xlu0.b32.cont [11/16] 0.0, 128
        %506 = vxpose.xlu0.b32.cont [12/16] 0.0, 128
        %507 = vxpose.xlu0.b32.cont [13/16] 0.0, 128
        %508 = vxpose.xlu0.b32.cont [14/16] 0.0, 128
        %509 = vxpose.xlu0.b32.cont [15/16] 0.0, 128
        %510 = vxpose.xlu0.b32.end [16/16] 0.0, 128
        %v511 = vpop.trf.xlu0
        %v512 = vpop.trf.xlu0
        %v513 = vpop.trf.xlu0
        %v514 = vpop.trf.xlu0
        %v515 = vpop.trf.xlu0
        %v516 = vpop.trf.xlu0
        %v517 = vpop.trf.xlu0
        %v518 = vpop.trf.xlu0
        %v519 = vpop.trf.xlu0
        %v520 = vpop.trf.xlu0
        %v521 = vpop.trf.xlu0
        %v522 = vpop.trf.xlu0
        %v523 = vpop.trf.xlu0
        %v524 = vpop.trf.xlu0
        %v525 = vpop.trf.xlu0
        %v526 = vpop.trf.xlu0
        %527 = vxpose.xlu0.b32.start [1/16] %v480, 128
        %528 = vxpose.xlu0.b32.cont [2/16] 0.0, 128
        %529 = vxpose.xlu0.b32.cont [3/16] 0.0, 128
        %530 = vxpose.xlu0.b32.cont [4/16] 0.0, 128
        %531 = vxpose.xlu0.b32.cont [5/16] 0.0, 128
        %532 = vxpose.xlu0.b32.cont [6/16] 0.0, 128
        %533 = vxpose.xlu0.b32.cont [7/16] 0.0, 128
        %534 = vxpose.xlu0.b32.cont [8/16] 0.0, 128
        %535 = vxpose.xlu0.b32.cont [9/16] 0.0, 128
        %536 = vxpose.xlu0.b32.cont [10/16] 0.0, 128
        %537 = vxpose.xlu0.b32.cont [11/16] 0.0, 128
        %538 = vxpose.xlu0.b32.cont [12/16] 0.0, 128
        %539 = vxpose.xlu0.b32.cont [13/16] 0.0, 128
        %540 = vxpose.xlu0.b32.cont [14/16] 0.0, 128
        %541 = vxpose.xlu0.b32.cont [15/16] 0.0, 128
        %542 = vxpose.xlu0.b32.end [16/16] 0.0, 128
        %v543 = vpop.trf.xlu0
        %v544 = vpop.trf.xlu0
        %v545 = vpop.trf.xlu0
        %v546 = vpop.trf.xlu0
        %v547 = vpop.trf.xlu0
        %v548 = vpop.trf.xlu0
        %v549 = vpop.trf.xlu0
        %v550 = vpop.trf.xlu0
        %v551 = vpop.trf.xlu0
        %v552 = vpop.trf.xlu0
        %v553 = vpop.trf.xlu0
        %v554 = vpop.trf.xlu0
        %v555 = vpop.trf.xlu0
        %v556 = vpop.trf.xlu0
        %v557 = vpop.trf.xlu0
        %v558 = vpop.trf.xlu0
        %559 = vxpose.xlu0.b32.start [1/16] %v481, 128
        %560 = vxpose.xlu0.b32.cont [2/16] 0.0, 128
        %561 = vxpose.xlu0.b32.cont [3/16] 0.0, 128
        %562 = vxpose.xlu0.b32.cont [4/16] 0.0, 128
        %563 = vxpose.xlu0.b32.cont [5/16] 0.0, 128
        %564 = vxpose.xlu0.b32.cont [6/16] 0.0, 128
        %565 = vxpose.xlu0.b32.cont [7/16] 0.0, 128
        %566 = vxpose.xlu0.b32.cont [8/16] 0.0, 128
        %567 = vxpose.xlu0.b32.cont [9/16] 0.0, 128
        %568 = vxpose.xlu0.b32.cont [10/16] 0.0, 128
        %569 = vxpose.xlu0.b32.cont [11/16] 0.0, 128
        %570 = vxpose.xlu0.b32.cont [12/16] 0.0, 128
        %571 = vxpose.xlu0.b32.cont [13/16] 0.0, 128
        %572 = vxpose.xlu0.b32.cont [14/16] 0.0, 128
        %573 = vxpose.xlu0.b32.cont [15/16] 0.0, 128
        %574 = vxpose.xlu0.b32.end [16/16] 0.0, 128
        %v575 = vpop.trf.xlu0
        %v576 = vpop.trf.xlu0
        %v577 = vpop.trf.xlu0
        %v578 = vpop.trf.xlu0
        %v579 = vpop.trf.xlu0
        %v580 = vpop.trf.xlu0
        %v581 = vpop.trf.xlu0
        %v582 = vpop.trf.xlu0
        %v583 = vpop.trf.xlu0
        %v584 = vpop.trf.xlu0
        %v585 = vpop.trf.xlu0
        %v586 = vpop.trf.xlu0
        %v587 = vpop.trf.xlu0
        %v588 = vpop.trf.xlu0
        %v589 = vpop.trf.xlu0
        %v590 = vpop.trf.xlu0
        %591 = vxpose.xlu0.b32.start [1/16] %v482, 128
        %592 = vxpose.xlu0.b32.cont [2/16] 0.0, 128
        %593 = vxpose.xlu0.b32.cont [3/16] 0.0, 128
        %594 = vxpose.xlu0.b32.cont [4/16] 0.0, 128
        %595 = vxpose.xlu0.b32.cont [5/16] 0.0, 128
        %596 = vxpose.xlu0.b32.cont [6/16] 0.0, 128
        %597 = vxpose.xlu0.b32.cont [7/16] 0.0, 128
        %598 = vxpose.xlu0.b32.cont [8/16] 0.0, 128
        %599 = vxpose.xlu0.b32.cont [9/16] 0.0, 128
        %600 = vxpose.xlu0.b32.cont [10/16] 0.0, 128
        %601 = vxpose.xlu0.b32.cont [11/16] 0.0, 128
        %602 = vxpose.xlu0.b32.cont [12/16] 0.0, 128
        %603 = vxpose.xlu0.b32.cont [13/16] 0.0, 128
        %604 = vxpose.xlu0.b32.cont [14/16] 0.0, 128
        %605 = vxpose.xlu0.b32.cont [15/16] 0.0, 128
        %606 = vxpose.xlu0.b32.end [16/16] 0.0, 128
        %v607 = vpop.trf.xlu0
        %v608 = vpop.trf.xlu0
        %v609 = vpop.trf.xlu0
        %v610 = vpop.trf.xlu0
        %v611 = vpop.trf.xlu0
        %v612 = vpop.trf.xlu0
        %v613 = vpop.trf.xlu0
        %v614 = vpop.trf.xlu0
        %v615 = vpop.trf.xlu0
        %v616 = vpop.trf.xlu0
        %v617 = vpop.trf.xlu0
        %v618 = vpop.trf.xlu0
        %v619 = vpop.trf.xlu0
        %v620 = vpop.trf.xlu0
        %v621 = vpop.trf.xlu0
        %v622 = vpop.trf.xlu0
        %v623 = vpack.c.bf16 %v511, %v511
        %v624 = vpack.c.bf16 %v543, %v543
        %v625 = vpack.c.bf16 %v575, %v575
        %v626 = vpack.c.bf16 %v607, %v607
        %627 = vxpose.xlu0.b32.start [1/16] %v458, 128
        %628 = vxpose.xlu0.b32.cont [2/16] 0.0, 128
        %629 = vxpose.xlu0.b32.cont [3/16] 0.0, 128
        %630 = vxpose.xlu0.b32.cont [4/16] 0.0, 128
        %631 = vxpose.xlu0.b32.cont [5/16] 0.0, 128
        %632 = vxpose.xlu0.b32.cont [6/16] 0.0, 128
        %633 = vxpose.xlu0.b32.cont [7/16] 0.0, 128
        %634 = vxpose.xlu0.b32.cont [8/16] 0.0, 128
        %635 = vxpose.xlu0.b32.cont [9/16] 0.0, 128
        %636 = vxpose.xlu0.b32.cont [10/16] 0.0, 128
        %637 = vxpose.xlu0.b32.cont [11/16] 0.0, 128
        %638 = vxpose.xlu0.b32.cont [12/16] 0.0, 128
        %639 = vxpose.xlu0.b32.cont [13/16] 0.0, 128
        %640 = vxpose.xlu0.b32.cont [14/16] 0.0, 128
        %641 = vxpose.xlu0.b32.cont [15/16] 0.0, 128
        %642 = vxpose.xlu0.b32.end [16/16] 0.0, 128
        %v643 = vpop.trf.xlu0
        %v644 = vpop.trf.xlu0
        %v645 = vpop.trf.xlu0
        %v646 = vpop.trf.xlu0
        %v647 = vpop.trf.xlu0
        %v648 = vpop.trf.xlu0
        %v649 = vpop.trf.xlu0
        %v650 = vpop.trf.xlu0
        %v651 = vpop.trf.xlu0
        %v652 = vpop.trf.xlu0
        %v653 = vpop.trf.xlu0
        %v654 = vpop.trf.xlu0
        %v655 = vpop.trf.xlu0
        %v656 = vpop.trf.xlu0
        %v657 = vpop.trf.xlu0
        %v658 = vpop.trf.xlu0
        %659 = vxpose.xlu0.b32.start [1/16] %v643, 128
        %660 = vxpose.xlu0.b32.cont [2/16] 0.0, 128
        %661 = vxpose.xlu0.b32.cont [3/16] 0.0, 128
        %662 = vxpose.xlu0.b32.cont [4/16] 0.0, 128
        %663 = vxpose.xlu0.b32.cont [5/16] 0.0, 128
        %664 = vxpose.xlu0.b32.cont [6/16] 0.0, 128
        %665 = vxpose.xlu0.b32.cont [7/16] 0.0, 128
        %666 = vxpose.xlu0.b32.cont [8/16] 0.0, 128
        %667 = vxpose.xlu0.b32.cont [9/16] 0.0, 128
        %668 = vxpose.xlu0.b32.cont [10/16] 0.0, 128
        %669 = vxpose.xlu0.b32.cont [11/16] 0.0, 128
        %670 = vxpose.xlu0.b32.cont [12/16] 0.0, 128
        %671 = vxpose.xlu0.b32.cont [13/16] 0.0, 128
        %672 = vxpose.xlu0.b32.cont [14/16] 0.0, 128
        %673 = vxpose.xlu0.b32.cont [15/16] 0.0, 128
        %674 = vxpose.xlu0.b32.end [16/16] 0.0, 128
        %v675 = vpop.trf.xlu0
        %v676 = vpop.trf.xlu0
        %v677 = vpop.trf.xlu0
        %v678 = vpop.trf.xlu0
        %v679 = vpop.trf.xlu0
        %v680 = vpop.trf.xlu0
        %v681 = vpop.trf.xlu0
        %v682 = vpop.trf.xlu0
        %v683 = vpop.trf.xlu0
        %v684 = vpop.trf.xlu0
        %v685 = vpop.trf.xlu0
        %v686 = vpop.trf.xlu0
        %v687 = vpop.trf.xlu0
        %v688 = vpop.trf.xlu0
        %v689 = vpop.trf.xlu0
        %v690 = vpop.trf.xlu0
        %691 = vxpose.xlu0.b32.start [1/16] %v644, 128
        %692 = vxpose.xlu0.b32.cont [2/16] 0.0, 128
        %693 = vxpose.xlu0.b32.cont [3/16] 0.0, 128
        %694 = vxpose.xlu0.b32.cont [4/16] 0.0, 128
        %695 = vxpose.xlu0.b32.cont [5/16] 0.0, 128
        %696 = vxpose.xlu0.b32.cont [6/16] 0.0, 128
        %697 = vxpose.xlu0.b32.cont [7/16] 0.0, 128
        %698 = vxpose.xlu0.b32.cont [8/16] 0.0, 128
        %699 = vxpose.xlu0.b32.cont [9/16] 0.0, 128
        %700 = vxpose.xlu0.b32.cont [10/16] 0.0, 128
        %701 = vxpose.xlu0.b32.cont [11/16] 0.0, 128
        %702 = vxpose.xlu0.b32.cont [12/16] 0.0, 128
        %703 = vxpose.xlu0.b32.cont [13/16] 0.0, 128
        %704 = vxpose.xlu0.b32.cont [14/16] 0.0, 128
        %705 = vxpose.xlu0.b32.cont [15/16] 0.0, 128
        %706 = vxpose.xlu0.b32.end [16/16] 0.0, 128
        %v707 = vpop.trf.xlu0
        %v708 = vpop.trf.xlu0
        %v709 = vpop.trf.xlu0
        %v710 = vpop.trf.xlu0
        %v711 = vpop.trf.xlu0
        %v712 = vpop.trf.xlu0
        %v713 = vpop.trf.xlu0
        %v714 = vpop.trf.xlu0
        %v715 = vpop.trf.xlu0
        %v716 = vpop.trf.xlu0
        %v717 = vpop.trf.xlu0
        %v718 = vpop.trf.xlu0
        %v719 = vpop.trf.xlu0
        %v720 = vpop.trf.xlu0
        %v721 = vpop.trf.xlu0
        %v722 = vpop.trf.xlu0
        %723 = vxpose.xlu0.b32.start [1/16] %v645, 128
        %724 = vxpose.xlu0.b32.cont [2/16] 0.0, 128
        %725 = vxpose.xlu0.b32.cont [3/16] 0.0, 128
        %726 = vxpose.xlu0.b32.cont [4/16] 0.0, 128
        %727 = vxpose.xlu0.b32.cont [5/16] 0.0, 128
        %728 = vxpose.xlu0.b32.cont [6/16] 0.0, 128
        %729 = vxpose.xlu0.b32.cont [7/16] 0.0, 128
        %730 = vxpose.xlu0.b32.cont [8/16] 0.0, 128
        %731 = vxpose.xlu0.b32.cont [9/16] 0.0, 128
        %732 = vxpose.xlu0.b32.cont [10/16] 0.0, 128
        %733 = vxpose.xlu0.b32.cont [11/16] 0.0, 128
        %734 = vxpose.xlu0.b32.cont [12/16] 0.0, 128
        %735 = vxpose.xlu0.b32.cont [13/16] 0.0, 128
        %736 = vxpose.xlu0.b32.cont [14/16] 0.0, 128
        %737 = vxpose.xlu0.b32.cont [15/16] 0.0, 128
        %738 = vxpose.xlu0.b32.end [16/16] 0.0, 128
        %v739 = vpop.trf.xlu0
        %v740 = vpop.trf.xlu0
        %v741 = vpop.trf.xlu0
        %v742 = vpop.trf.xlu0
        %v743 = vpop.trf.xlu0
        %v744 = vpop.trf.xlu0
        %v745 = vpop.trf.xlu0
        %v746 = vpop.trf.xlu0
        %v747 = vpop.trf.xlu0
        %v748 = vpop.trf.xlu0
        %v749 = vpop.trf.xlu0
        %v750 = vpop.trf.xlu0
        %v751 = vpop.trf.xlu0
        %v752 = vpop.trf.xlu0
        %v753 = vpop.trf.xlu0
        %v754 = vpop.trf.xlu0
        %755 = vxpose.xlu0.b32.start [1/16] %v646, 128
        %756 = vxpose.xlu0.b32.cont [2/16] 0.0, 128
        %757 = vxpose.xlu0.b32.cont [3/16] 0.0, 128
        %758 = vxpose.xlu0.b32.cont [4/16] 0.0, 128
        %759 = vxpose.xlu0.b32.cont [5/16] 0.0, 128
        %760 = vxpose.xlu0.b32.cont [6/16] 0.0, 128
        %761 = vxpose.xlu0.b32.cont [7/16] 0.0, 128
        %762 = vxpose.xlu0.b32.cont [8/16] 0.0, 128
        %763 = vxpose.xlu0.b32.cont [9/16] 0.0, 128
        %764 = vxpose.xlu0.b32.cont [10/16] 0.0, 128
        %765 = vxpose.xlu0.b32.cont [11/16] 0.0, 128
        %766 = vxpose.xlu0.b32.cont [12/16] 0.0, 128
        %767 = vxpose.xlu0.b32.cont [13/16] 0.0, 128
        %768 = vxpose.xlu0.b32.cont [14/16] 0.0, 128
        %769 = vxpose.xlu0.b32.cont [15/16] 0.0, 128
        %770 = vxpose.xlu0.b32.end [16/16] 0.0, 128
        %v771 = vpop.trf.xlu0
        %v772 = vpop.trf.xlu0
        %v773 = vpop.trf.xlu0
        %v774 = vpop.trf.xlu0
        %v775 = vpop.trf.xlu0
        %v776 = vpop.trf.xlu0
        %v777 = vpop.trf.xlu0
        %v778 = vpop.trf.xlu0
        %v779 = vpop.trf.xlu0
        %v780 = vpop.trf.xlu0
        %v781 = vpop.trf.xlu0
        %v782 = vpop.trf.xlu0
        %v783 = vpop.trf.xlu0
        %v784 = vpop.trf.xlu0
        %v785 = vpop.trf.xlu0
        %v786 = vpop.trf.xlu0
        %v787 = vpack.c.bf16 %v675, %v675
        %v788 = vpack.c.bf16 %v707, %v707
        %v789 = vpack.c.bf16 %v739, %v739
        %v790 = vpack.c.bf16 %v771, %v771
        %vm791 = vcmask 64512
        %v793 = vsel %vm791, %v623, 0
        %v796 = vsel %vm791, %v787, 0
        %798 = vmatprep.subr.bf16.mxu0 0
        %799 = vmatpush1.bf16.xpose.msra.mxu0 0
        %800 = vmatprep.subr.bf16.mxu0 0
        %801 = vmatpush1.bf16.xpose.msra.mxu0 0
        %802 = vmatprep.subr.bf16.mxu0 0
        %803 = vmatpush1.bf16.xpose.msra.mxu0 0
        %804 = vmatprep.subr.bf16.mxu0 0
        %805 = vmatpush1.bf16.xpose.msra.mxu0 0
        %806 = vmatprep.subr.bf16.mxu0 0
        %807 = vmatpush1.bf16.xpose.msra.mxu0 0
        %808 = vmatprep.subr.bf16.mxu0 0
        %809 = vmatpush1.bf16.xpose.msra.mxu0 0
        %810 = vmatprep.subr.bf16.mxu0 0
        %811 = vmatpush1.bf16.xpose.msra.mxu0 0
        %812 = vmatprep.subr.bf16.mxu0 0
        %813 = vmatpush1.bf16.xpose.msra.mxu0 %v796
        %814 = vmatprep.subr.bf16.mxu0 0
        %815 = vmatpush2.bf16.xpose.msra.mxu0 0
        %816 = vmatprep.subr.bf16.mxu0 0
        %817 = vmatpush2.bf16.xpose.msra.mxu0 0
        %818 = vmatprep.subr.bf16.mxu0 0
        %819 = vmatpush2.bf16.xpose.msra.mxu0 0
        %820 = vmatprep.subr.bf16.mxu0 0
        %821 = vmatpush2.bf16.xpose.msra.mxu0 0
        %822 = vmatprep.subr.bf16.mxu0 0
        %823 = vmatpush2.bf16.xpose.msra.mxu0 0
        %824 = vmatprep.subr.bf16.mxu0 0
        %825 = vmatpush2.bf16.xpose.msra.mxu0 0
        %826 = vmatprep.subr.bf16.mxu0 0
        %827 = vmatpush2.bf16.xpose.msra.mxu0 0
        %828 = vmatprep.subr.bf16.mxu0 0
        %829 = vmatpush2.bf16.xpose.msra.mxu0 0
        %830 = vmatprep.mubr.bf16.mxu0 0
        %831 = vmatmul.mubr.bf16.gmra.mxu0 %v793
        %v832 = vpop.f32.mrf.mxu0
        %v833 = vadd.f32 0.0, %v832
        %v834 = vpop.f32.mrf.mxu0
        %v835 = vpop.f32.mrf.mxu0
        %v836 = vpop.f32.mrf.mxu0
        %837 = vdwg.mxu0
        %v839 = vsel %vm791, %v624, 0
        %v842 = vsel %vm791, %v788, 0
        %844 = vmatprep.subr.bf16.mxu0 0
        %845 = vmatpush1.bf16.xpose.msra.mxu0 0
        %846 = vmatprep.subr.bf16.mxu0 0
        %847 = vmatpush1.bf16.xpose.msra.mxu0 0
        %848 = vmatprep.subr.bf16.mxu0 0
        %849 = vmatpush1.bf16.xpose.msra.mxu0 0
        %850 = vmatprep.subr.bf16.mxu0 0
        %851 = vmatpush1.bf16.xpose.msra.mxu0 0
        %852 = vmatprep.subr.bf16.mxu0 0
        %853 = vmatpush1.bf16.xpose.msra.mxu0 0
        %854 = vmatprep.subr.bf16.mxu0 0
        %855 = vmatpush1.bf16.xpose.msra.mxu0 0
        %856 = vmatprep.subr.bf16.mxu0 0
        %857 = vmatpush1.bf16.xpose.msra.mxu0 0
        %858 = vmatprep.subr.bf16.mxu0 0
        %859 = vmatpush1.bf16.xpose.msra.mxu0 %v842
        %860 = vmatprep.subr.bf16.mxu0 0
        %861 = vmatpush2.bf16.xpose.msra.mxu0 0
        %862 = vmatprep.subr.bf16.mxu0 0
        %863 = vmatpush2.bf16.xpose.msra.mxu0 0
        %864 = vmatprep.subr.bf16.mxu0 0
        %865 = vmatpush2.bf16.xpose.msra.mxu0 0
        %866 = vmatprep.subr.bf16.mxu0 0
        %867 = vmatpush2.bf16.xpose.msra.mxu0 0
        %868 = vmatprep.subr.bf16.mxu0 0
        %869 = vmatpush2.bf16.xpose.msra.mxu0 0
        %870 = vmatprep.subr.bf16.mxu0 0
        %871 = vmatpush2.bf16.xpose.msra.mxu0 0
        %872 = vmatprep.subr.bf16.mxu0 0
        %873 = vmatpush2.bf16.xpose.msra.mxu0 0
        %874 = vmatprep.subr.bf16.mxu0 0
        %875 = vmatpush2.bf16.xpose.msra.mxu0 0
        %876 = vmatprep.mubr.bf16.mxu0 0
        %877 = vmatmul.mubr.bf16.gmra.mxu0 %v839
        %v878 = vpop.f32.mrf.mxu0
        %v879 = vadd.f32 0.0, %v878
        %v880 = vpop.f32.mrf.mxu0
        %v881 = vpop.f32.mrf.mxu0
        %v882 = vpop.f32.mrf.mxu0
        %883 = vdwg.mxu0
        %v885 = vsel %vm791, %v625, 0
        %v888 = vsel %vm791, %v789, 0
        %890 = vmatprep.subr.bf16.mxu0 0
        %891 = vmatpush1.bf16.xpose.msra.mxu0 0
        %892 = vmatprep.subr.bf16.mxu0 0
        %893 = vmatpush1.bf16.xpose.msra.mxu0 0
        %894 = vmatprep.subr.bf16.mxu0 0
        %895 = vmatpush1.bf16.xpose.msra.mxu0 0
        %896 = vmatprep.subr.bf16.mxu0 0
        %897 = vmatpush1.bf16.xpose.msra.mxu0 0
        %898 = vmatprep.subr.bf16.mxu0 0
        %899 = vmatpush1.bf16.xpose.msra.mxu0 0
        %900 = vmatprep.subr.bf16.mxu0 0
        %901 = vmatpush1.bf16.xpose.msra.mxu0 0
        %902 = vmatprep.subr.bf16.mxu0 0
        %903 = vmatpush1.bf16.xpose.msra.mxu0 0
        %904 = vmatprep.subr.bf16.mxu0 0
        %905 = vmatpush1.bf16.xpose.msra.mxu0 %v888
        %906 = vmatprep.subr.bf16.mxu0 0
        %907 = vmatpush2.bf16.xpose.msra.mxu0 0
        %908 = vmatprep.subr.bf16.mxu0 0
        %909 = vmatpush2.bf16.xpose.msra.mxu0 0
        %910 = vmatprep.subr.bf16.mxu0 0
        %911 = vmatpush2.bf16.xpose.msra.mxu0 0
        %912 = vmatprep.subr.bf16.mxu0 0
        %913 = vmatpush2.bf16.xpose.msra.mxu0 0
        %914 = vmatprep.subr.bf16.mxu0 0
        %915 = vmatpush2.bf16.xpose.msra.mxu0 0
        %916 = vmatprep.subr.bf16.mxu0 0
        %917 = vmatpush2.bf16.xpose.msra.mxu0 0
        %918 = vmatprep.subr.bf16.mxu0 0
        %919 = vmatpush2.bf16.xpose.msra.mxu0 0
        %920 = vmatprep.subr.bf16.mxu0 0
        %921 = vmatpush2.bf16.xpose.msra.mxu0 0
        %922 = vmatprep.mubr.bf16.mxu0 0
        %923 = vmatmul.mubr.bf16.gmra.mxu0 %v885
        %v924 = vpop.f32.mrf.mxu0
        %v925 = vadd.f32 0.0, %v924
        %v926 = vpop.f32.mrf.mxu0
        %v927 = vpop.f32.mrf.mxu0
        %v928 = vpop.f32.mrf.mxu0
        %929 = vdwg.mxu0
        %v931 = vsel %vm791, %v626, 0
        %v934 = vsel %vm791, %v790, 0
        %936 = vmatprep.subr.bf16.mxu0 0
        %937 = vmatpush1.bf16.xpose.msra.mxu0 0
        %938 = vmatprep.subr.bf16.mxu0 0
        %939 = vmatpush1.bf16.xpose.msra.mxu0 0
        %940 = vmatprep.subr.bf16.mxu0 0
        %941 = vmatpush1.bf16.xpose.msra.mxu0 0
        %942 = vmatprep.subr.bf16.mxu0 0
        %943 = vmatpush1.bf16.xpose.msra.mxu0 0
        %944 = vmatprep.subr.bf16.mxu0 0
        %945 = vmatpush1.bf16.xpose.msra.mxu0 0
        %946 = vmatprep.subr.bf16.mxu0 0
        %947 = vmatpush1.bf16.xpose.msra.mxu0 0
        %948 = vmatprep.subr.bf16.mxu0 0
        %949 = vmatpush1.bf16.xpose.msra.mxu0 0
        %950 = vmatprep.subr.bf16.mxu0 0
        %951 = vmatpush1.bf16.xpose.msra.mxu0 %v934
        %952 = vmatprep.subr.bf16.mxu0 0
        %953 = vmatpush2.bf16.xpose.msra.mxu0 0
        %954 = vmatprep.subr.bf16.mxu0 0
        %955 = vmatpush2.bf16.xpose.msra.mxu0 0
        %956 = vmatprep.subr.bf16.mxu0 0
        %957 = vmatpush2.bf16.xpose.msra.mxu0 0
        %958 = vmatprep.subr.bf16.mxu0 0
        %959 = vmatpush2.bf16.xpose.msra.mxu0 0
        %960 = vmatprep.subr.bf16.mxu0 0
        %961 = vmatpush2.bf16.xpose.msra.mxu0 0
        %962 = vmatprep.subr.bf16.mxu0 0
        %963 = vmatpush2.bf16.xpose.msra.mxu0 0
        %964 = vmatprep.subr.bf16.mxu0 0
        %965 = vmatpush2.bf16.xpose.msra.mxu0 0
        %966 = vmatprep.subr.bf16.mxu0 0
        %967 = vmatpush2.bf16.xpose.msra.mxu0 0
        %968 = vmatprep.mubr.bf16.mxu0 0
        %969 = vmatmul.mubr.bf16.gmra.mxu0 %v931
        %v970 = vpop.f32.mrf.mxu0
        %v971 = vadd.f32 0.0, %v970
        %v972 = vpop.f32.mrf.mxu0
        %v973 = vpop.f32.mrf.mxu0
        %v974 = vpop.f32.mrf.mxu0
        %975 = vdwg.mxu0
        %v976 = vlaneseq
        %v977 = vshrl.u32 %v976, 7
        %v978 = vlaneseq
        %v979 = vand.u32 %v978, 127
        %vm980 = vcmp.lt.s32.totalorder %v979, 4
        %vm981 = vcmp.le.s32.totalorder %v979, %v977
        %vm982 = vmor %vm980, %vm981
        %v983 = vsel %vm982, 1, 0
        %vm984 = vcmp.eq.s32.totalorder %v983, 1
        %v985 = vsel %vm984, %v833, -1e+30
        %v986 = vsel %vm984, %v879, -1e+30
        %v987 = vsel %vm984, %v925, -1e+30
        %v988 = vsel %vm984, %v971, -1e+30
        %v989 = vsel %vm791, %v985, -inf
        %990 = vmax.xlane.f32.xlu0 %v989
        %v991 = vpop.xlane.xlu0 %990
        %v992 = vsel %vm791, %v986, -inf
        %993 = vmax.xlane.f32.xlu0 %v992
        %v994 = vpop.xlane.xlu0 %993
        %v995 = vsel %vm791, %v987, -inf
        %996 = vmax.xlane.f32.xlu0 %v995
        %v997 = vpop.xlane.xlu0 %996
        %v998 = vsel %vm791, %v988, -inf
        %999 = vmax.xlane.f32.xlu0 %v998
        %v1000 = vpop.xlane.xlu0 %999
        %v1001 = vsub.f32 %v985, %v991
        %v1002 = vsub.f32 %v986, %v994
        %v1003 = vsub.f32 %v987, %v997
        %v1004 = vsub.f32 %v988, %v1000
        %v1005 = vmul.f32 %v1001, 1.442695
        %v1006 = vpow.pop %v1005
        %v1007 = vmul.f32 %v1002, 1.442695
        %v1008 = vpow.pop %v1007
        %v1009 = vmul.f32 %v1003, 1.442695
        %v1010 = vpow.pop %v1009
        %v1011 = vmul.f32 %v1004, 1.442695
        %v1012 = vpow.pop %v1011
        %v1013 = vsel %vm791, %v1006, 0.0
        %1014 = vadd.xlane.f32.xlu0 %v1013
        %v1015 = vpop.xlane.xlu0 %1014
        %v1016 = vsel %vm791, %v1008, 0.0
        %1017 = vadd.xlane.f32.xlu0 %v1016
        %v1018 = vpop.xlane.xlu0 %1017
        %v1019 = vsel %vm791, %v1010, 0.0
        %1020 = vadd.xlane.f32.xlu0 %v1019
        %v1021 = vpop.xlane.xlu0 %1020
        %v1022 = vsel %vm791, %v1012, 0.0
        %1023 = vadd.xlane.f32.xlu0 %v1022
        %v1024 = vpop.xlane.xlu0 %1023
        %v1025 = vrcp.pop %v1015
        %v1026 = vrcp.pop %v1018
        %v1027 = vrcp.pop %v1021
        %v1028 = vrcp.pop %v1024
        %v1029 = vmul.f32 %v1006, %v1025
        %v1030 = vmul.f32 %v1008, %v1026
        %v1031 = vmul.f32 %v1010, %v1027
        %v1032 = vmul.f32 %v1012, %v1028
        %v1033 = vpack.c.bf16 %v1029, %v1029
        %v1034 = vpack.c.bf16 %v1030, %v1030
        %v1035 = vpack.c.bf16 %v1031, %v1031
        %v1036 = vpack.c.bf16 %v1032, %v1032
        %v1038 = vsel %vm791, %v1033, 0
        %vm1040 = vcmask 1043456
        %v1041 = vsel %vm1040, %v623, 0
        %1043 = vmatprep.subr.bf16.mxu0 0
        %1044 = vmatpush1.bf16.msra.mxu0 0
        %1045 = vmatprep.subr.bf16.mxu0 0
        %1046 = vmatpush1.bf16.msra.mxu0 0
        %1047 = vmatprep.subr.bf16.mxu0 0
        %1048 = vmatpush1.bf16.msra.mxu0 0
        %1049 = vmatprep.subr.bf16.mxu0 0
        %1050 = vmatpush1.bf16.msra.mxu0 0
        %1051 = vmatprep.subr.bf16.mxu0 0
        %1052 = vmatpush1.bf16.msra.mxu0 0
        %1053 = vmatprep.subr.bf16.mxu0 0
        %1054 = vmatpush1.bf16.msra.mxu0 0
        %1055 = vmatprep.subr.bf16.mxu0 0
        %1056 = vmatpush1.bf16.msra.mxu0 0
        %1057 = vmatprep.subr.bf16.mxu0 0
        %1058 = vmatpush1.bf16.msra.mxu0 %v1041
        %1059 = vmatprep.subr.bf16.mxu0 0
        %1060 = vmatpush2.bf16.msra.mxu0 0
        %1061 = vmatprep.subr.bf16.mxu0 0
        %1062 = vmatpush2.bf16.msra.mxu0 0
        %1063 = vmatprep.subr.bf16.mxu0 0
        %1064 = vmatpush2.bf16.msra.mxu0 0
        %1065 = vmatprep.subr.bf16.mxu0 0
        %1066 = vmatpush2.bf16.msra.mxu0 0
        %1067 = vmatprep.subr.bf16.mxu0 0
        %1068 = vmatpush2.bf16.msra.mxu0 0
        %1069 = vmatprep.subr.bf16.mxu0 0
        %1070 = vmatpush2.bf16.msra.mxu0 0
        %1071 = vmatprep.subr.bf16.mxu0 0
        %1072 = vmatpush2.bf16.msra.mxu0 0
        %1073 = vmatprep.subr.bf16.mxu0 0
        %1074 = vmatpush2.bf16.msra.mxu0 0
        %1075 = vmatprep.mubr.bf16.mxu0 0
        %1076 = vmatmul.mubr.bf16.gmra.mxu0 %v1038
        %v1077 = vpop.f32.mrf.mxu0
        %v1078 = vadd.f32 0.0, %v1077
        %v1079 = vpop.f32.mrf.mxu0
        %v1080 = vpop.f32.mrf.mxu0
        %v1081 = vpop.f32.mrf.mxu0
        %1082 = vdwg.mxu0
        %v1084 = vsel %vm791, %v1034, 0
        %v1086 = vsel %vm1040, %v624, 0
        %1088 = vmatprep.subr.bf16.mxu0 0
        %1089 = vmatpush1.bf16.msra.mxu0 0
        %1090 = vmatprep.subr.bf16.mxu0 0
        %1091 = vmatpush1.bf16.msra.mxu0 0
        %1092 = vmatprep.subr.bf16.mxu0 0
        %1093 = vmatpush1.bf16.msra.mxu0 0
        %1094 = vmatprep.subr.bf16.mxu0 0
        %1095 = vmatpush1.bf16.msra.mxu0 0
        %1096 = vmatprep.subr.bf16.mxu0 0
        %1097 = vmatpush1.bf16.msra.mxu0 0
        %1098 = vmatprep.subr.bf16.mxu0 0
        %1099 = vmatpush1.bf16.msra.mxu0 0
        %1100 = vmatprep.subr.bf16.mxu0 0
        %1101 = vmatpush1.bf16.msra.mxu0 0
        %1102 = vmatprep.subr.bf16.mxu0 0
        %1103 = vmatpush1.bf16.msra.mxu0 %v1086
        %1104 = vmatprep.subr.bf16.mxu0 0
        %1105 = vmatpush2.bf16.msra.mxu0 0
        %1106 = vmatprep.subr.bf16.mxu0 0
        %1107 = vmatpush2.bf16.msra.mxu0 0
        %1108 = vmatprep.subr.bf16.mxu0 0
        %1109 = vmatpush2.bf16.msra.mxu0 0
        %1110 = vmatprep.subr.bf16.mxu0 0
        %1111 = vmatpush2.bf16.msra.mxu0 0
        %1112 = vmatprep.subr.bf16.mxu0 0
        %1113 = vmatpush2.bf16.msra.mxu0 0
        %1114 = vmatprep.subr.bf16.mxu0 0
        %1115 = vmatpush2.bf16.msra.mxu0 0
        %1116 = vmatprep.subr.bf16.mxu0 0
        %1117 = vmatpush2.bf16.msra.mxu0 0
        %1118 = vmatprep.subr.bf16.mxu0 0
        %1119 = vmatpush2.bf16.msra.mxu0 0
        %1120 = vmatprep.mubr.bf16.mxu0 0
        %1121 = vmatmul.mubr.bf16.gmra.mxu0 %v1084
        %v1122 = vpop.f32.mrf.mxu0
        %v1123 = vadd.f32 0.0, %v1122
        %v1124 = vpop.f32.mrf.mxu0
        %v1125 = vpop.f32.mrf.mxu0
        %v1126 = vpop.f32.mrf.mxu0
        %1127 = vdwg.mxu0
        %v1129 = vsel %vm791, %v1035, 0
        %v1131 = vsel %vm1040, %v625, 0
        %1133 = vmatprep.subr.bf16.mxu0 0
        %1134 = vmatpush1.bf16.msra.mxu0 0
        %1135 = vmatprep.subr.bf16.mxu0 0
        %1136 = vmatpush1.bf16.msra.mxu0 0
        %1137 = vmatprep.subr.bf16.mxu0 0
        %1138 = vmatpush1.bf16.msra.mxu0 0
        %1139 = vmatprep.subr.bf16.mxu0 0
        %1140 = vmatpush1.bf16.msra.mxu0 0
        %1141 = vmatprep.subr.bf16.mxu0 0
        %1142 = vmatpush1.bf16.msra.mxu0 0
        %1143 = vmatprep.subr.bf16.mxu0 0
        %1144 = vmatpush1.bf16.msra.mxu0 0
        %1145 = vmatprep.subr.bf16.mxu0 0
        %1146 = vmatpush1.bf16.msra.mxu0 0
        %1147 = vmatprep.subr.bf16.mxu0 0
        %1148 = vmatpush1.bf16.msra.mxu0 %v1131
        %1149 = vmatprep.subr.bf16.mxu0 0
        %1150 = vmatpush2.bf16.msra.mxu0 0
        %1151 = vmatprep.subr.bf16.mxu0 0
        %1152 = vmatpush2.bf16.msra.mxu0 0
        %1153 = vmatprep.subr.bf16.mxu0 0
        %1154 = vmatpush2.bf16.msra.mxu0 0
        %1155 = vmatprep.subr.bf16.mxu0 0
        %1156 = vmatpush2.bf16.msra.mxu0 0
        %1157 = vmatprep.subr.bf16.mxu0 0
        %1158 = vmatpush2.bf16.msra.mxu0 0
        %1159 = vmatprep.subr.bf16.mxu0 0
        %1160 = vmatpush2.bf16.msra.mxu0 0
        %1161 = vmatprep.subr.bf16.mxu0 0
        %1162 = vmatpush2.bf16.msra.mxu0 0
        %1163 = vmatprep.subr.bf16.mxu0 0
        %1164 = vmatpush2.bf16.msra.mxu0 0
        %1165 = vmatprep.mubr.bf16.mxu0 0
        %1166 = vmatmul.mubr.bf16.gmra.mxu0 %v1129
        %v1167 = vpop.f32.mrf.mxu0
        %v1168 = vadd.f32 0.0, %v1167
        %v1169 = vpop.f32.mrf.mxu0
        %v1170 = vpop.f32.mrf.mxu0
        %v1171 = vpop.f32.mrf.mxu0
        %1172 = vdwg.mxu0
        %v1174 = vsel %vm791, %v1036, 0
        %v1176 = vsel %vm1040, %v626, 0
        %1178 = vmatprep.subr.bf16.mxu0 0
        %1179 = vmatpush1.bf16.msra.mxu0 0
        %1180 = vmatprep.subr.bf16.mxu0 0
        %1181 = vmatpush1.bf16.msra.mxu0 0
        %1182 = vmatprep.subr.bf16.mxu0 0
        %1183 = vmatpush1.bf16.msra.mxu0 0
        %1184 = vmatprep.subr.bf16.mxu0 0
        %1185 = vmatpush1.bf16.msra.mxu0 0
        %1186 = vmatprep.subr.bf16.mxu0 0
        %1187 = vmatpush1.bf16.msra.mxu0 0
        %1188 = vmatprep.subr.bf16.mxu0 0
        %1189 = vmatpush1.bf16.msra.mxu0 0
        %1190 = vmatprep.subr.bf16.mxu0 0
        %1191 = vmatpush1.bf16.msra.mxu0 0
        %1192 = vmatprep.subr.bf16.mxu0 0
        %1193 = vmatpush1.bf16.msra.mxu0 %v1176
        %1194 = vmatprep.subr.bf16.mxu0 0
        %1195 = vmatpush2.bf16.msra.mxu0 0
        %1196 = vmatprep.subr.bf16.mxu0 0
        %1197 = vmatpush2.bf16.msra.mxu0 0
        %1198 = vmatprep.subr.bf16.mxu0 0
        %1199 = vmatpush2.bf16.msra.mxu0 0
        %1200 = vmatprep.subr.bf16.mxu0 0
        %1201 = vmatpush2.bf16.msra.mxu0 0
        %1202 = vmatprep.subr.bf16.mxu0 0
        %1203 = vmatpush2.bf16.msra.mxu0 0
        %1204 = vmatprep.subr.bf16.mxu0 0
        %1205 = vmatpush2.bf16.msra.mxu0 0
        %1206 = vmatprep.subr.bf16.mxu0 0
        %1207 = vmatpush2.bf16.msra.mxu0 0
        %1208 = vmatprep.subr.bf16.mxu0 0
        %1209 = vmatpush2.bf16.msra.mxu0 0
        %1210 = vmatprep.mubr.bf16.mxu0 0
        %1211 = vmatmul.mubr.bf16.gmra.mxu0 %v1174
        %v1212 = vpop.f32.mrf.mxu0
        %v1213 = vadd.f32 0.0, %v1212
        %v1214 = vpop.f32.mrf.mxu0
        %v1215 = vpop.f32.mrf.mxu0
        %v1216 = vpop.f32.mrf.mxu0
        %1217 = vdwg.mxu0
        %v1218 = vpack.c.bf16 %v1078, %v1078
        %v1219 = vpack.c.bf16 %v1123, %v1123
        %v1220 = vpack.c.bf16 %v1168, %v1168
        %v1221 = vpack.c.bf16 %v1213, %v1213
        %v1222 = vld [vmem:[%s3] sm:$0xf]
        %s1223 = scalar_lea.vmem %s3, 4
        %v1224 = vld [vmem:[%s1223] sm:$0xf]
        %v1226 = vsel %vm791, %v1219, 0
        %v1229 = vsel %vm1040, %v1224, 0
        %1231 = vmatprep.subr.bf16.mxu0 0
        %1232 = vmatpush1.bf16.msra.mxu0 0
        %1233 = vmatprep.subr.bf16.mxu0 0
        %1234 = vmatpush1.bf16.msra.mxu0 0
        %1235 = vmatprep.subr.bf16.mxu0 0
        %1236 = vmatpush1.bf16.msra.mxu0 0
        %1237 = vmatprep.subr.bf16.mxu0 0
        %1238 = vmatpush1.bf16.msra.mxu0 0
        %1239 = vmatprep.subr.bf16.mxu0 0
        %1240 = vmatpush1.bf16.msra.mxu0 0
        %1241 = vmatprep.subr.bf16.mxu0 0
        %1242 = vmatpush1.bf16.msra.mxu0 0
        %1243 = vmatprep.subr.bf16.mxu0 0
        %1244 = vmatpush1.bf16.msra.mxu0 0
        %1245 = vmatprep.subr.bf16.mxu0 0
        %1246 = vmatpush1.bf16.msra.mxu0 %v1229
        %1247 = vmatprep.subr.bf16.mxu0 0
        %1248 = vmatpush2.bf16.msra.mxu0 0
        %1249 = vmatprep.subr.bf16.mxu0 0
        %1250 = vmatpush2.bf16.msra.mxu0 0
        %1251 = vmatprep.subr.bf16.mxu0 0
        %1252 = vmatpush2.bf16.msra.mxu0 0
        %1253 = vmatprep.subr.bf16.mxu0 0
        %1254 = vmatpush2.bf16.msra.mxu0 0
        %1255 = vmatprep.subr.bf16.mxu0 0
        %1256 = vmatpush2.bf16.msra.mxu0 0
        %1257 = vmatprep.subr.bf16.mxu0 0
        %1258 = vmatpush2.bf16.msra.mxu0 0
        %1259 = vmatprep.subr.bf16.mxu0 0
        %1260 = vmatpush2.bf16.msra.mxu0 0
        %1261 = vmatprep.subr.bf16.mxu0 0
        %1262 = vmatpush2.bf16.msra.mxu0 0
        %1263 = vmatprep.mubr.bf16.mxu0 0
        %1264 = vmatmul.mubr.bf16.gmra.mxu0 %v1226
        %v1265 = vpop.f32.mrf.mxu0
        %v1266 = vadd.f32 0.0, %v1265
        %v1267 = vpop.f32.mrf.mxu0
        %v1268 = vpop.f32.mrf.mxu0
        %v1269 = vpop.f32.mrf.mxu0
        %1270 = vdwg.mxu0
        %v1272 = vsel %vm791, %v1218, 0
        %v1275 = vsel %vm1040, %v1222, 0
        %1277 = vmatprep.subr.bf16.mxu0 0
        %1278 = vmatpush1.bf16.msra.mxu0 0
        %1279 = vmatprep.subr.bf16.mxu0 0
        %1280 = vmatpush1.bf16.msra.mxu0 0
        %1281 = vmatprep.subr.bf16.mxu0 0
        %1282 = vmatpush1.bf16.msra.mxu0 0
        %1283 = vmatprep.subr.bf16.mxu0 0
        %1284 = vmatpush1.bf16.msra.mxu0 0
        %1285 = vmatprep.subr.bf16.mxu0 0
        %1286 = vmatpush1.bf16.msra.mxu0 0
        %1287 = vmatprep.subr.bf16.mxu0 0
        %1288 = vmatpush1.bf16.msra.mxu0 0
        %1289 = vmatprep.subr.bf16.mxu0 0
        %1290 = vmatpush1.bf16.msra.mxu0 0
        %1291 = vmatprep.subr.bf16.mxu0 0
        %1292 = vmatpush1.bf16.msra.mxu0 %v1275
        %1293 = vmatprep.subr.bf16.mxu0 0
        %1294 = vmatpush2.bf16.msra.mxu0 0
        %1295 = vmatprep.subr.bf16.mxu0 0
        %1296 = vmatpush2.bf16.msra.mxu0 0
        %1297 = vmatprep.subr.bf16.mxu0 0
        %1298 = vmatpush2.bf16.msra.mxu0 0
        %1299 = vmatprep.subr.bf16.mxu0 0
        %1300 = vmatpush2.bf16.msra.mxu0 0
        %1301 = vmatprep.subr.bf16.mxu0 0
        %1302 = vmatpush2.bf16.msra.mxu0 0
        %1303 = vmatprep.subr.bf16.mxu0 0
        %1304 = vmatpush2.bf16.msra.mxu0 0
        %1305 = vmatprep.subr.bf16.mxu0 0
        %1306 = vmatpush2.bf16.msra.mxu0 0
        %1307 = vmatprep.subr.bf16.mxu0 0
        %1308 = vmatpush2.bf16.msra.mxu0 0
        %1309 = vmatprep.mubr.bf16.mxu0 0
        %1310 = vmatmul.mubr.bf16.gmra.mxu0 %v1272
        %v1311 = vpop.f32.mrf.mxu0
        %v1312 = vadd.f32 %v1266, %v1311
        %v1313 = vpop.f32.mrf.mxu0
        %v1314 = vpop.f32.mrf.mxu0
        %v1315 = vpop.f32.mrf.mxu0
        %1316 = vdwg.mxu0
        %s1317 = scalar_lea.vmem %s3, 8
        %v1318 = vld [vmem:[%s1317] sm:$0xf]
        %v1320 = vsel %vm791, %v1220, 0
        %v1323 = vsel %vm1040, %v1318, 0
        %1325 = vmatprep.subr.bf16.mxu0 0
        %1326 = vmatpush1.bf16.msra.mxu0 0
        %1327 = vmatprep.subr.bf16.mxu0 0
        %1328 = vmatpush1.bf16.msra.mxu0 0
        %1329 = vmatprep.subr.bf16.mxu0 0
        %1330 = vmatpush1.bf16.msra.mxu0 0
        %1331 = vmatprep.subr.bf16.mxu0 0
        %1332 = vmatpush1.bf16.msra.mxu0 0
        %1333 = vmatprep.subr.bf16.mxu0 0
        %1334 = vmatpush1.bf16.msra.mxu0 0
        %1335 = vmatprep.subr.bf16.mxu0 0
        %1336 = vmatpush1.bf16.msra.mxu0 0
        %1337 = vmatprep.subr.bf16.mxu0 0
        %1338 = vmatpush1.bf16.msra.mxu0 0
        %1339 = vmatprep.subr.bf16.mxu0 0
        %1340 = vmatpush1.bf16.msra.mxu0 %v1323
        %1341 = vmatprep.subr.bf16.mxu0 0
        %1342 = vmatpush2.bf16.msra.mxu0 0
        %1343 = vmatprep.subr.bf16.mxu0 0
        %1344 = vmatpush2.bf16.msra.mxu0 0
        %1345 = vmatprep.subr.bf16.mxu0 0
        %1346 = vmatpush2.bf16.msra.mxu0 0
        %1347 = vmatprep.subr.bf16.mxu0 0
        %1348 = vmatpush2.bf16.msra.mxu0 0
        %1349 = vmatprep.subr.bf16.mxu0 0
        %1350 = vmatpush2.bf16.msra.mxu0 0
        %1351 = vmatprep.subr.bf16.mxu0 0
        %1352 = vmatpush2.bf16.msra.mxu0 0
        %1353 = vmatprep.subr.bf16.mxu0 0
        %1354 = vmatpush2.bf16.msra.mxu0 0
        %1355 = vmatprep.subr.bf16.mxu0 0
        %1356 = vmatpush2.bf16.msra.mxu0 0
        %1357 = vmatprep.mubr.bf16.mxu0 0
        %1358 = vmatmul.mubr.bf16.gmra.mxu0 %v1320
        %v1359 = vpop.f32.mrf.mxu0
        %v1360 = vadd.f32 0.0, %v1359
        %v1361 = vpop.f32.mrf.mxu0
        %v1362 = vpop.f32.mrf.mxu0
        %v1363 = vpop.f32.mrf.mxu0
        %1364 = vdwg.mxu0
        %v1365 = vadd.f32 %v1312, %v1360
        %s1366 = scalar_lea.vmem %s3, 12
        %v1367 = vld [vmem:[%s1366] sm:$0xf]
        %v1369 = vsel %vm791, %v1221, 0
        %v1372 = vsel %vm1040, %v1367, 0
        %1374 = vmatprep.subr.bf16.mxu0 0
        %1375 = vmatpush1.bf16.msra.mxu0 0
        %1376 = vmatprep.subr.bf16.mxu0 0
        %1377 = vmatpush1.bf16.msra.mxu0 0
        %1378 = vmatprep.subr.bf16.mxu0 0
        %1379 = vmatpush1.bf16.msra.mxu0 0
        %1380 = vmatprep.subr.bf16.mxu0 0
        %1381 = vmatpush1.bf16.msra.mxu0 0
        %1382 = vmatprep.subr.bf16.mxu0 0
        %1383 = vmatpush1.bf16.msra.mxu0 0
        %1384 = vmatprep.subr.bf16.mxu0 0
        %1385 = vmatpush1.bf16.msra.mxu0 0
        %1386 = vmatprep.subr.bf16.mxu0 0
        %1387 = vmatpush1.bf16.msra.mxu0 0
        %1388 = vmatprep.subr.bf16.mxu0 0
        %1389 = vmatpush1.bf16.msra.mxu0 %v1372
        %1390 = vmatprep.subr.bf16.mxu0 0
        %1391 = vmatpush2.bf16.msra.mxu0 0
        %1392 = vmatprep.subr.bf16.mxu0 0
        %1393 = vmatpush2.bf16.msra.mxu0 0
        %1394 = vmatprep.subr.bf16.mxu0 0
        %1395 = vmatpush2.bf16.msra.mxu0 0
        %1396 = vmatprep.subr.bf16.mxu0 0
        %1397 = vmatpush2.bf16.msra.mxu0 0
        %1398 = vmatprep.subr.bf16.mxu0 0
        %1399 = vmatpush2.bf16.msra.mxu0 0
        %1400 = vmatprep.subr.bf16.mxu0 0
        %1401 = vmatpush2.bf16.msra.mxu0 0
        %1402 = vmatprep.subr.bf16.mxu0 0
        %1403 = vmatpush2.bf16.msra.mxu0 0
        %1404 = vmatprep.subr.bf16.mxu0 0
        %1405 = vmatpush2.bf16.msra.mxu0 0
        %1406 = vmatprep.mubr.bf16.mxu0 0
        %1407 = vmatmul.mubr.bf16.gmra.mxu0 %v1369
        %v1408 = vpop.f32.mrf.mxu0
        %v1409 = vadd.f32 0.0, %v1408
        %v1410 = vpop.f32.mrf.mxu0
        %v1411 = vpop.f32.mrf.mxu0
        %v1412 = vpop.f32.mrf.mxu0
        %1413 = vdwg.mxu0
        %v1414 = vadd.f32 %v1365, %v1409
        %v1415 = vlaneseq
        %v1416 = vshrl.u32 %v1415, 7
        %v1417 = vsub.s32 0, %v1416
        %v1418 = vrot.slane %v333, %v1417
        %v1419 = vadd.f32 %v1414, %v1418
        %v1420 = vadd.f32 %v329, %v1419
        %v1421 = vsel %vm359, %v1420, 0.0
        %1422 = vadd.xlane.f32.xlu0 %v1421
        %v1423 = vpop.xlane.xlu0 %1422
        %v1424 = vrcp.pop 32.0
        %v1425 = vmul.f32 %v1423, %v1424
        %v1426 = vsub.f32 %v1420, %v1425
        %v1427 = vmul.f32 %v1426, %v1426
        %v1428 = vsel %vm359, %v1427, 0.0
        %1429 = vadd.xlane.f32.xlu0 %v1428
        %v1430 = vpop.xlane.xlu0 %1429
        %v1431 = vmul.f32 %v1430, %v1424
        %v1432 = vadd.f32 %v1431, 1e-05
        %v1433 = vrsqrt.pop %v1432
        %v1434 = vmul.f32 %v1426, %v1433
        %v1435 = vlaneseq
        %v1436 = vshrl.u32 %v1435, 7
        %v1437 = vsub.s32 0, %v1436
        %v1438 = vrot.slane %v334, %v1437
        %v1439 = vmul.f32 %v1434, %v1438
        %v1440 = vlaneseq
        %v1441 = vshrl.u32 %v1440, 7
        %v1442 = vsub.s32 0, %v1441
        %v1443 = vrot.slane %v335, %v1442
        %v1444 = vadd.f32 %v1439, %v1443
        %v1445 = vpack.c.bf16 %v1444, %v1444
        %v1446 = vld [vmem:[%s4] sm:$0xf]
        %v1447 = vld [vmem:[%s4 + $0x4] sm:$0xf]
        %v1448 = vld [vmem:[%s4 + $0x8] sm:$0xf]
        %v1449 = vld [vmem:[%s4 + $0xc] sm:$0xf]
        %v1450 = vld [vmem:[%s8] sm:$0x1]
        %v1452 = vlaneseq
        %v1453 = vshrl.u32 %v1452, 7
        %v1454 = vsub.s32 0, %v1453
        %v1455 = vrot.slane %v1450, %v1454
        %v1461 = vunpack.c.l.b16 %v1446
        %v1462 = vunpack.c.l.b16 %v1447
        %v1463 = vunpack.c.l.b16 %v1448
        %v1464 = vunpack.c.l.b16 %v1449
        %v1465 = vpack.c.b16 %v1462, %v1461
        %v1466 = vpack.c.b16 %v1464, %v1463
        %v1470 = vsel %vm359, %v1445, 0
        %1472 = vmatprep.subr.bf16.mxu0 0
        %1473 = vmatpush1.bf16.msra.mxu0 0
        %1474 = vmatprep.subr.bf16.mxu0 0
        %1475 = vmatpush1.bf16.msra.mxu0 0
        %1476 = vmatprep.subr.bf16.mxu0 0
        %1477 = vmatpush1.bf16.msra.mxu0 0
        %1478 = vmatprep.subr.bf16.mxu0 0
        %1479 = vmatpush1.bf16.msra.mxu0 0
        %1480 = vmatprep.subr.bf16.mxu0 0
        %1481 = vmatpush1.bf16.msra.mxu0 0
        %1482 = vmatprep.subr.bf16.mxu0 0
        %1483 = vmatpush1.bf16.msra.mxu0 0
        %1484 = vmatprep.subr.bf16.mxu0 0
        %1485 = vmatpush1.bf16.msra.mxu0 %v1466
        %1486 = vmatprep.subr.bf16.mxu0 0
        %1487 = vmatpush1.bf16.msra.mxu0 %v1465
        %1488 = vmatprep.subr.bf16.mxu0 0
        %1489 = vmatpush2.bf16.msra.mxu0 0
        %1490 = vmatprep.subr.bf16.mxu0 0
        %1491 = vmatpush2.bf16.msra.mxu0 0
        %1492 = vmatprep.subr.bf16.mxu0 0
        %1493 = vmatpush2.bf16.msra.mxu0 0
        %1494 = vmatprep.subr.bf16.mxu0 0
        %1495 = vmatpush2.bf16.msra.mxu0 0
        %1496 = vmatprep.subr.bf16.mxu0 0
        %1497 = vmatpush2.bf16.msra.mxu0 0
        %1498 = vmatprep.subr.bf16.mxu0 0
        %1499 = vmatpush2.bf16.msra.mxu0 0
        %1500 = vmatprep.subr.bf16.mxu0 0
        %1501 = vmatpush2.bf16.msra.mxu0 0
        %1502 = vmatprep.subr.bf16.mxu0 0
        %1503 = vmatpush2.bf16.msra.mxu0 0
        %1504 = vmatprep.mubr.bf16.mxu0 0
        %1505 = vmatmul.mubr.bf16.gmra.mxu0 %v1470
        %v1506 = vpop.f32.mrf.mxu0
        %v1507 = vadd.f32 %v1455, %v1506
        %v1508 = vpop.f32.mrf.mxu0
        %v1509 = vpop.f32.mrf.mxu0
        %v1510 = vpop.f32.mrf.mxu0
        %1511 = vdwg.mxu0
        %v1512 = vmul.f32 %v1507, 0.5
        %v1513 = vmul.f32 %v1507, 0.70710677
        %v1514 = verf.f32.pop %v1513
        %v1515 = vadd.f32 %v1514, 1.0
        %v1516 = vmul.f32 %v1512, %v1515
        %v1517 = vpack.c.bf16 %v1516, %v1516
        %v1518 = vld [vmem:[%s5] sm:$0xf]
        %v1519 = vld [vmem:[%s5 + $0x4] sm:$0xf]
        %v1520 = vld [vmem:[%s5 + $0x8] sm:$0xf]
        %v1521 = vld [vmem:[%s5 + $0xc] sm:$0xf]
        %v1522 = vld [vmem:[%s5 + $0x10] sm:$0xf]
        %v1523 = vld [vmem:[%s5 + $0x14] sm:$0xf]
        %v1524 = vld [vmem:[%s5 + $0x18] sm:$0xf]
        %v1525 = vld [vmem:[%s5 + $0x1c] sm:$0xf]
        %v1526 = vld [vmem:[%s5 + $0x20] sm:$0xf]
        %v1527 = vld [vmem:[%s5 + $0x24] sm:$0xf]
        %v1528 = vld [vmem:[%s5 + $0x28] sm:$0xf]
        %v1529 = vld [vmem:[%s5 + $0x2c] sm:$0xf]
        %v1530 = vld [vmem:[%s5 + $0x30] sm:$0xf]
        %v1531 = vld [vmem:[%s5 + $0x34] sm:$0xf]
        %v1532 = vld [vmem:[%s5 + $0x38] sm:$0xf]
        %v1533 = vld [vmem:[%s5 + $0x3c] sm:$0xf]
        %v1534 = vlaneseq
        %v1535 = vshrl.u32 %v1534, 7
        %v1536 = vsub.s32 0, %v1535
        %v1537 = vrot.slane %v336, %v1536
        %v1554 = vunpack.c.l.b16 %v1518
        %v1555 = vunpack.c.l.b16 %v1519
        %v1556 = vunpack.c.l.b16 %v1520
        %v1557 = vunpack.c.l.b16 %v1521
        %v1558 = vunpack.c.l.b16 %v1522
        %v1559 = vunpack.c.l.b16 %v1523
        %v1560 = vunpack.c.l.b16 %v1524
        %v1561 = vunpack.c.l.b16 %v1525
        %v1562 = vunpack.c.l.b16 %v1526
        %v1563 = vunpack.c.l.b16 %v1527
        %v1564 = vunpack.c.l.b16 %v1528
        %v1565 = vunpack.c.l.b16 %v1529
        %v1566 = vunpack.c.l.b16 %v1530
        %v1567 = vunpack.c.l.b16 %v1531
        %v1568 = vunpack.c.l.b16 %v1532
        %v1569 = vunpack.c.l.b16 %v1533
        %v1570 = vpack.c.b16 %v1555, %v1554
        %v1571 = vpack.c.b16 %v1557, %v1556
        %v1572 = vpack.c.b16 %v1559, %v1558
        %v1573 = vpack.c.b16 %v1561, %v1560
        %v1574 = vpack.c.b16 %v1563, %v1562
        %v1575 = vpack.c.b16 %v1565, %v1564
        %v1576 = vpack.c.b16 %v1567, %v1566
        %v1577 = vpack.c.b16 %v1569, %v1568
        %1586 = vmatprep.subr.bf16.mxu0 0
        %1587 = vmatpush1.bf16.msra.mxu0 %v1577
        %1588 = vmatprep.subr.bf16.mxu0 0
        %1589 = vmatpush1.bf16.msra.mxu0 %v1576
        %1590 = vmatprep.subr.bf16.mxu0 0
        %1591 = vmatpush1.bf16.msra.mxu0 %v1575
        %1592 = vmatprep.subr.bf16.mxu0 0
        %1593 = vmatpush1.bf16.msra.mxu0 %v1574
        %1594 = vmatprep.subr.bf16.mxu0 0
        %1595 = vmatpush1.bf16.msra.mxu0 %v1573
        %1596 = vmatprep.subr.bf16.mxu0 0
        %1597 = vmatpush1.bf16.msra.mxu0 %v1572
        %1598 = vmatprep.subr.bf16.mxu0 0
        %1599 = vmatpush1.bf16.msra.mxu0 %v1571
        %1600 = vmatprep.subr.bf16.mxu0 0
        %1601 = vmatpush1.bf16.msra.mxu0 %v1570
        %1602 = vmatprep.subr.bf16.mxu0 0
        %1603 = vmatpush2.bf16.msra.mxu0 0
        %1604 = vmatprep.subr.bf16.mxu0 0
        %1605 = vmatpush2.bf16.msra.mxu0 0
        %1606 = vmatprep.subr.bf16.mxu0 0
        %1607 = vmatpush2.bf16.msra.mxu0 0
        %1608 = vmatprep.subr.bf16.mxu0 0
        %1609 = vmatpush2.bf16.msra.mxu0 0
        %1610 = vmatprep.subr.bf16.mxu0 0
        %1611 = vmatpush2.bf16.msra.mxu0 0
        %1612 = vmatprep.subr.bf16.mxu0 0
        %1613 = vmatpush2.bf16.msra.mxu0 0
        %1614 = vmatprep.subr.bf16.mxu0 0
        %1615 = vmatpush2.bf16.msra.mxu0 0
        %1616 = vmatprep.subr.bf16.mxu0 0
        %1617 = vmatpush2.bf16.msra.mxu0 0
        %1618 = vmatprep.mubr.bf16.mxu0 0
        %1619 = vmatmul.mubr.bf16.gmra.mxu0 %v1517
        %v1620 = vpop.f32.mrf.mxu0
        %v1621 = vadd.f32 %v1537, %v1620
        %v1622 = vpop.f32.mrf.mxu0
        %v1623 = vpop.f32.mrf.mxu0
        %v1624 = vpop.f32.mrf.mxu0
        %1625 = vdwg.mxu0
        %v1626 = vadd.f32 %v1444, %v1621
        %v1627 = vsel %vm359, %v1626, 0.0
        %1628 = vadd.xlane.f32.xlu0 %v1627
        %v1629 = vpop.xlane.xlu0 %1628
        %v1630 = vmul.f32 %v1629, %v1424
        %v1631 = vsub.f32 %v1626, %v1630
        %v1632 = vmul.f32 %v1631, %v1631
        %v1633 = vsel %vm359, %v1632, 0.0
        %1634 = vadd.xlane.f32.xlu0 %v1633
        %v1635 = vpop.xlane.xlu0 %1634
        %v1636 = vmul.f32 %v1635, %v1424
        %v1637 = vadd.f32 %v1636, 1e-05
        %v1638 = vrsqrt.pop %v1637
        %v1639 = vmul.f32 %v1631, %v1638
        %v1640 = vlaneseq
        %v1641 = vshrl.u32 %v1640, 7
        %v1642 = vsub.s32 0, %v1641
        %v1643 = vrot.slane %v337, %v1642
        %v1644 = vmul.f32 %v1639, %v1643
        %v1645 = vlaneseq
        %v1646 = vshrl.u32 %v1645, 7
        %v1647 = vsub.s32 0, %v1646
        %v1648 = vrot.slane %v338, %v1647
        %v1649 = vadd.f32 %v1644, %v1648
        %1650 = vst.msk [vmem:[%s323] sm:$0xff] %vm359, %v1649
        %s1651 = sand.u32 %s225, 1
        %s1652 = scalar_lea.sflag [#allocation3], %s1651
        %s1653 = sand.u32 %s225, 1
        %s1654 = smul.addr %s1653, 8
        %s1655 = scalar_lea.vmem [#allocation2], %s1654
        // Predicated region
        $region57: #{tpu_custom_call.1} parent=55 // pred_check
          %p1656 = pneg %p235
        $region58: #{tpu_custom_call.1} parent=55 // pred_check_branch
          %1658 = sbr.rel (%p1656) target = $region60
        $region59: #{tpu_custom_call.1} parent=55 // pred_region
          %s1660 = ssub.s32 128, 128
          %1661 = vsyncadd %s1652, %s1660
          %s1662 = smul.addr %s23, 128
          %s1663 = scalar_lea.hbm %s9, %s1662
          %s1665 = sshll.u32 %s1655, 4
          %s1666 = int_to_ptr.vmem [resolvable:$true] %s1665
          %1668 = dma.vmem_to_hbm [thread:$0]  %s1666, 128, %s1663, %s1652
        $region60: #{tpu_custom_call.1} parent=55 // pred_fallthru
          _
      $region56: #{tpu_custom_call.1} parent=5 // pred_fallthru
        _
      %p1669 = scmp.le.s32.totalorder 2, %s18
      // Predicated region
      $region61: #{tpu_custom_call.1} parent=5 // pred_check
        %p1670 = pneg %p1669
      $region62: #{tpu_custom_call.1} parent=5 // pred_check_branch
        %1672 = sbr.rel (%p1670) target = $region64
      $region63: #{tpu_custom_call.1} parent=5 // pred_region
        %s1673 = ssub.s32 %s18, 2
        // Predicated region
        $region65: #{tpu_custom_call.1} parent=63 // pred_check
          %p1674 = pneg %p241
        $region66: #{tpu_custom_call.1} parent=63 // pred_check_branch
          %1676 = sbr.rel (%p1674) target = $region68
        $region67: #{tpu_custom_call.1} parent=63 // pred_region
          %s1677 = sand.u32 %s226, 1
          %s1678 = scalar_lea.sflag [#allocation3], %s1677
          %s1679 = sand.u32 %s226, 1
          %s1680 = smul.addr %s1679, 8
          %s1681 = scalar_lea.vmem [#allocation2], %s1680
          %1682 = dma.done %s1678, 128
        $region68: #{tpu_custom_call.1} parent=63 // pred_fallthru
          _
      $region64: #{tpu_custom_call.1} parent=5 // pred_fallthru
        _
    $region6: #{tpu_custom_call.1} parent=1 // loop_footer
      %s22 = sadd.s32 1, %s18
    $region7: #{tpu_custom_call.1} parent=1 // loop_footer_branch
      %17 = sbr.rel target = $region3
    $region8: #{tpu_custom_call.1} parent=1 // loop_exit
      _
    %1683 = vsyncpa [#allocation3], 1
    %s1684 = scalar_lea.sflag [#allocation3], 1
    %1685 = vsyncpa %s1684, 1

</llo_original>
